<compile_context>
chip_gen: v5e
topology: v5e:2x2
jax: 0.10.0
libtpu: 0.0.40
codegen_flags: <defaults>
</compile_context>

<pallas_src>
import jax
import jax.numpy as jnp
from jax.experimental import pallas as pl
from jax.experimental.pallas import tpu as pltpu

# ---------------- small GPT-Neo-like config (synthetic) ----------------
B = 2            # batch
S = 8            # sequence length
H = 32           # hidden size
NH = 4           # num heads
DH = H // NH     # head dim
FF = 4 * H       # intermediate size
L = 2            # num layers
VOCAB = 50
MAX_POS = 64
NUM_LABELS = 6
PAD_ID = VOCAB - 1     # pad_token_id = eos_token_id
EPS = 1e-5
NEG_INF = -1e30
LANE = 128             # lane-dense output width (score weight zero-padded to this)
X = NH * B             # attention batch axis (head-major, batch-minor)


# ---------------- in-kernel math helpers ----------------
def _layernorm(x, g, b):
    mu = jnp.mean(x, axis=-1, keepdims=True)
    var = jnp.mean((x - mu) * (x - mu), axis=-1, keepdims=True)
    return (x - mu) * jax.lax.rsqrt(var + EPS) * g + b


def _gelu_new(y):
    # GPT-Neo activation ("gelu_new", tanh approximation)
    return 0.5 * y * (1.0 + jnp.tanh(0.7978845608028654 * (y + 0.044715 * y * y * y)))


# ---------------- fused whole-forward kernel (single grid step) ----------------
def _fused_kernel(idx_ref,                                  # scalar prefetch (SMEM): pooled row indices [B]
                  h0_ref, bias_ref,
                  ln1_g_ref, ln1_b_ref,
                  wq_ref, wk_ref, wv_ref, wo_ref, bo_ref,
                  ln2_g_ref, ln2_b_ref,
                  w_fc_ref, b_fc_ref, w_proj_ref, b_proj_ref,
                  lnf_g_ref, lnf_b_ref, score_ref,
                  out_ref,
                  h_sc):
    h = h0_ref[...]                                         # [B*S, H] f32
    bias_x = bias_ref[...]                                  # [X, S, S] additive causal+pad bias

    for l in range(L):                                      # static unroll over layers
        # ---- self-attention (pre-LN, GPT-Neo: no 1/sqrt(d) scaling) ----
        x = _layernorm(h, ln1_g_ref[l], ln1_b_ref[l])       # [B*S, H]
        x_n = jnp.broadcast_to(x[None], (NH, B * S, H))     # head batch axis

        q = jnp.einsum('nrh,nhd->nrd', x_n, wq_ref[l], preferred_element_type=jnp.float32)
        k = jnp.einsum('nrh,nhd->nrd', x_n, wk_ref[l], preferred_element_type=jnp.float32)
        v = jnp.einsum('nrh,nhd->nrd', x_n, wv_ref[l], preferred_element_type=jnp.float32)

        qx = q.reshape(X, S, DH)                            # (n, b) -> n*B + b, tile-aligned split
        kx = k.reshape(X, S, DH)
        vx = v.reshape(X, S, DH)

        s = jnp.einsum('xqd,xkd->xqk', qx, kx, preferred_element_type=jnp.float32) + bias_x
        s = s - jnp.max(s, axis=-1, keepdims=True)
        p = jnp.exp(s)
        p = p * pl.reciprocal(jnp.sum(p, axis=-1, keepdims=True), approx=True)
        ctx = jnp.einsum('xqk,xkd->xqd', p, vx, preferred_element_type=jnp.float32)   # [X, S, DH]

        ctx_n = ctx.reshape(NH, B * S, DH)
        oh = jnp.einsum('nrd,ndh->nrh', ctx_n, wo_ref[l], preferred_element_type=jnp.float32)
        h = h + jnp.sum(oh, axis=0) + bo_ref[l]             # sum per-head output projections

        # ---- MLP ----
        x2 = _layernorm(h, ln2_g_ref[l], ln2_b_ref[l])
        ff = jnp.dot(x2, w_fc_ref[l], preferred_element_type=jnp.float32) + b_fc_ref[l]
        ff = _gelu_new(ff)
        ff = jnp.dot(ff, w_proj_ref[l], preferred_element_type=jnp.float32) + b_proj_ref[l]
        h = h + ff

    # ---- gather B pooled rows, final LN, score projection (lane-dense out) ----
    h_sc[...] = h
    rows = [h_sc[pl.ds(idx_ref[b], 1), :] for b in range(B)]     # dynamic row reads
    pooled = jnp.concatenate(rows, axis=0)                       # [B, H]
    xf = _layernorm(pooled, lnf_g_ref[...], lnf_b_ref[...])
    out_ref[...] = jnp.dot(xf, score_ref[...], preferred_element_type=jnp.float32)


def _const_spec(shape):
    nd = len(shape)
    return pl.BlockSpec(shape, lambda *_, _nd=nd: (0,) * _nd)


_fused_forward = pl.pallas_call(
    _fused_kernel,
    out_shape=jax.ShapeDtypeStruct((B, LANE), jnp.float32),
    grid_spec=pltpu.PrefetchScalarGridSpec(
        num_scalar_prefetch=1,                 # pooled row indices -> SMEM
        grid=(1,),                             # single step: weights VMEM-resident
        in_specs=[
            _const_spec((B * S, H)),           # h0 (embeddings)
            _const_spec((X, S, S)),            # additive attention bias, (head, batch) order
            _const_spec((L, 1, H)),            # ln1_g
            _const_spec((L, 1, H)),            # ln1_b
            _const_spec((L, NH, H, DH)),       # wq  (head-major)
            _const_spec((L, NH, H, DH)),       # wk
            _const_spec((L, NH, H, DH)),       # wv
            _const_spec((L, NH, DH, H)),       # wo  (per-head output rows)
            _const_spec((L, 1, H)),            # bo
            _const_spec((L, 1, H)),            # ln2_g
            _const_spec((L, 1, H)),            # ln2_b
            _const_spec((L, H, FF)),           # w_fc
            _const_spec((L, 1, FF)),           # b_fc
            _const_spec((L, FF, H)),           # w_proj
            _const_spec((L, 1, H)),            # b_proj
            _const_spec((1, H)),               # lnf_g
            _const_spec((1, H)),               # lnf_b
            _const_spec((H, LANE)),            # score weight, zero-padded to 128 lanes
        ],
        out_specs=pl.BlockSpec((B, LANE), lambda *_: (0, 0)),
        scratch_shapes=[pltpu.VMEM((B * S, H), jnp.float32)],   # final hidden for row gather
    ),
    compiler_params=pltpu.CompilerParams(dimension_semantics=("arbitrary",)),
)


# ---------------- parameter init (deterministic, synthetic) ----------------
def init_params(key):
    def normal(k, shape, std=0.02):
        return std * jax.random.normal(k, shape, dtype=jnp.float32)

    keys = jax.random.split(key, 8)
    return {
        "wte": normal(keys[0], (VOCAB, H)),
        "wpe": normal(keys[1], (MAX_POS, H)),
        "lnf_g": jnp.ones((1, H), jnp.float32),
        "lnf_b": jnp.zeros((1, H), jnp.float32),
        "score": normal(keys[2], (H, NUM_LABELS)),          # Linear(H, num_labels, bias=False)
        # stacked per-layer parameters [L, ...]
        "ln1_g": jnp.ones((L, 1, H), jnp.float32),
        "ln1_b": jnp.zeros((L, 1, H), jnp.float32),
        "w_qkv": normal(keys[3], (L, H, 3 * H)),            # q/k/v proj: no bias in GPT-Neo
        "wo": normal(keys[4], (L, H, H)),
        "bo": jnp.zeros((L, 1, H), jnp.float32),
        "ln2_g": jnp.ones((L, 1, H), jnp.float32),
        "ln2_b": jnp.zeros((L, 1, H), jnp.float32),
        "w_fc": normal(keys[5], (L, H, FF)),
        "b_fc": jnp.zeros((L, 1, FF), jnp.float32),
        "w_proj": normal(keys[6], (L, FF, H)),
        "b_proj": jnp.zeros((L, 1, H), jnp.float32),
    }


# ---------------- model forward ----------------
def bert_forward(params, input_ids, attention_mask):
    # Embedding lookup (plain-JAX gather glue; not a Pallas-friendly access pattern)
    pos_ids = jnp.arange(S)
    h0 = (jnp.take(params["wte"], input_ids, axis=0)
          + params["wpe"][pos_ids][None, :, :]).astype(jnp.float32)      # [B, S, H]
    h0 = h0.reshape(B * S, H)

    # Combined causal + padding additive bias, tiled head-major to [NH*B, S, S]
    # (GPT-Neo local-window attention equals causal for S << window=256)
    causal = jnp.tril(jnp.ones((S, S), dtype=bool))
    key_ok = attention_mask.astype(bool)                                 # [B, S]
    allowed = causal[None, :, :] & key_ok[:, None, :]
    bias = jnp.where(allowed, 0.0, NEG_INF).astype(jnp.float32)          # [B, S, S]
    bias_x = jnp.tile(bias, (NH, 1, 1))                                  # [NH*B, S, S]

    # Sequence-classification pooling indices (flat into [B*S]) for scalar prefetch
    seq_len = jnp.sum((input_ids != PAD_ID).astype(jnp.int32), axis=-1) - 1
    pool_idx = (jnp.arange(B, dtype=jnp.int32) * S + seq_len).astype(jnp.int32)

    # Head-major weight layout (host-side rearrangement only)
    w_qkv = params["w_qkv"]                                              # [L, H, 3H]

    def _heads(w):                                                       # [L, H, H] -> [L, NH, H, DH]
        return w.reshape(L, H, NH, DH).transpose(0, 2, 1, 3)

    wq = _heads(w_qkv[:, :, 0 * H:1 * H])
    wk = _heads(w_qkv[:, :, 1 * H:2 * H])
    wv = _heads(w_qkv[:, :, 2 * H:3 * H])
    wo_h = params["wo"].reshape(L, NH, DH, H)                            # per-head output rows

    # Zero-pad the score weight to 128 lanes for a lane-dense output store
    score_padded = jnp.zeros((H, LANE), jnp.float32).at[:, :NUM_LABELS].set(params["score"])

    pooled_padded = _fused_forward(
        pool_idx, h0, bias_x,
        params["ln1_g"], params["ln1_b"],
        wq, wk, wv, wo_h, params["bo"],
        params["ln2_g"], params["ln2_b"],
        params["w_fc"], params["b_fc"], params["w_proj"], params["b_proj"],
        params["lnf_g"], params["lnf_b"], score_padded)

    pooled = pooled_padded[:, :NUM_LABELS]                               # [B, NUM_LABELS]

    # In GPTNeoForSequenceClassification (no labels), output.logits == output[0].
    logits = pooled
    feature = pooled
    return logits, feature


if __name__ == "__main__":
    key = jax.random.PRNGKey(0)
    pkey, dkey = jax.random.split(key)
    params = init_params(pkey)

    # Deterministic inputs: token ids in [0, VOCAB-2], with trailing padding in batch 1
    input_ids = jax.random.randint(dkey, (B, S), 0, VOCAB - 1, dtype=jnp.int32)
    attention_mask = jnp.ones((B, S), dtype=jnp.int32)
    attention_mask = attention_mask.at[1, S - 2:].set(0)                 # 2 pad positions
    input_ids = jnp.where(attention_mask == 1, input_ids, PAD_ID)

    fwd = jax.jit(bert_forward)
    logits, feature = fwd(params, input_ids, attention_mask)
    jax.block_until_ready((logits, feature))
    assert logits.shape == (B, NUM_LABELS) and feature.shape == (B, NUM_LABELS)
    print("KERNEL_OK")
</pallas_src>

<mosaic_0001>
module attributes {stable_mosaic.version = 11 : i64} {
  func.func @_fused_kernel(%arg0: i32, %arg1: memref<2xi32, #tpu.memory_space<smem>>, %arg2: memref<16x32xf32, #tpu.memory_space<vmem>>, %arg3: memref<8x8x8xf32, #tpu.memory_space<vmem>>, %arg4: memref<2x1x32xf32, #tpu.memory_space<vmem>>, %arg5: memref<2x1x32xf32, #tpu.memory_space<vmem>>, %arg6: memref<2x4x32x8xf32, #tpu.memory_space<vmem>>, %arg7: memref<2x4x32x8xf32, #tpu.memory_space<vmem>>, %arg8: memref<2x4x32x8xf32, #tpu.memory_space<vmem>>, %arg9: memref<2x4x8x32xf32, #tpu.memory_space<vmem>>, %arg10: memref<2x1x32xf32, #tpu.memory_space<vmem>>, %arg11: memref<2x1x32xf32, #tpu.memory_space<vmem>>, %arg12: memref<2x1x32xf32, #tpu.memory_space<vmem>>, %arg13: memref<2x32x128xf32, #tpu.memory_space<vmem>>, %arg14: memref<2x1x128xf32, #tpu.memory_space<vmem>>, %arg15: memref<2x128x32xf32, #tpu.memory_space<vmem>>, %arg16: memref<2x1x32xf32, #tpu.memory_space<vmem>>, %arg17: memref<1x32xf32, #tpu.memory_space<vmem>>, %arg18: memref<1x32xf32, #tpu.memory_space<vmem>>, %arg19: memref<32x128xf32, #tpu.memory_space<vmem>>, %arg20: memref<2x128xf32, #tpu.memory_space<vmem>>, %arg21: memref<16x32xf32, #tpu.memory_space<vmem>>) attributes {dimension_semantics = [#tpu.dimension_semantics<arbitrary>], iteration_bounds = array<i64: 1>, scalar_prefetch = 1 : i64, scratch_operands = 1 : i64, tpu.core_type = #tpu.core_type<tc>, window_params = [{pipeline_mode = #tpu.pipeline_mode<synchronous>, transform_indices = @transform_0, window_bounds = array<i64: 16, 32>}, {pipeline_mode = #tpu.pipeline_mode<synchronous>, transform_indices = @transform_1, window_bounds = array<i64: 8, 8, 8>}, {pipeline_mode = #tpu.pipeline_mode<synchronous>, transform_indices = @transform_2, window_bounds = array<i64: 2, 1, 32>}, {pipeline_mode = #tpu.pipeline_mode<synchronous>, transform_indices = @transform_3, window_bounds = array<i64: 2, 1, 32>}, {pipeline_mode = #tpu.pipeline_mode<synchronous>, transform_indices = @transform_4, window_bounds = array<i64: 2, 4, 32, 8>}, {pipeline_mode = #tpu.pipeline_mode<synchronous>, transform_indices = @transform_5, window_bounds = array<i64: 2, 4, 32, 8>}, {pipeline_mode = #tpu.pipeline_mode<synchronous>, transform_indices = @transform_6, window_bounds = array<i64: 2, 4, 32, 8>}, {pipeline_mode = #tpu.pipeline_mode<synchronous>, transform_indices = @transform_7, window_bounds = array<i64: 2, 4, 8, 32>}, {pipeline_mode = #tpu.pipeline_mode<synchronous>, transform_indices = @transform_8, window_bounds = array<i64: 2, 1, 32>}, {pipeline_mode = #tpu.pipeline_mode<synchronous>, transform_indices = @transform_9, window_bounds = array<i64: 2, 1, 32>}, {pipeline_mode = #tpu.pipeline_mode<synchronous>, transform_indices = @transform_10, window_bounds = array<i64: 2, 1, 32>}, {pipeline_mode = #tpu.pipeline_mode<synchronous>, transform_indices = @transform_11, window_bounds = array<i64: 2, 32, 128>}, {pipeline_mode = #tpu.pipeline_mode<synchronous>, transform_indices = @transform_12, window_bounds = array<i64: 2, 1, 128>}, {pipeline_mode = #tpu.pipeline_mode<synchronous>, transform_indices = @transform_13, window_bounds = array<i64: 2, 128, 32>}, {pipeline_mode = #tpu.pipeline_mode<synchronous>, transform_indices = @transform_14, window_bounds = array<i64: 2, 1, 32>}, {pipeline_mode = #tpu.pipeline_mode<synchronous>, transform_indices = @transform_15, window_bounds = array<i64: 1, 32>}, {pipeline_mode = #tpu.pipeline_mode<synchronous>, transform_indices = @transform_16, window_bounds = array<i64: 1, 32>}, {pipeline_mode = #tpu.pipeline_mode<synchronous>, transform_indices = @transform_17, window_bounds = array<i64: 32, 128>}, {pipeline_mode = #tpu.pipeline_mode<synchronous>, transform_indices = @transform_18, window_bounds = array<i64: 2, 128>}]} {
    %c0 = arith.constant 0 : index
    %c0_0 = arith.constant 0 : index
    %0 = vector.load %arg2[%c0, %c0_0] : memref<16x32xf32, #tpu.memory_space<vmem>>, vector<16x32xf32>
    %c0_1 = arith.constant 0 : index
    %c0_2 = arith.constant 0 : index
    %c0_3 = arith.constant 0 : index
    %1 = vector.load %arg3[%c0_1, %c0_2, %c0_3] : memref<8x8x8xf32, #tpu.memory_space<vmem>>, vector<8x8x8xf32>
    %c0_4 = arith.constant 0 : index
    %c0_5 = arith.constant 0 : index
    %c0_6 = arith.constant 0 : index
    %2 = vector.load %arg4[%c0_4, %c0_5, %c0_6] : memref<2x1x32xf32, #tpu.memory_space<vmem>>, vector<1x1x32xf32>
    %3 = vector.shape_cast %2 : vector<1x1x32xf32> to vector<1x32xf32>
    %c0_7 = arith.constant 0 : index
    %c0_8 = arith.constant 0 : index
    %c0_9 = arith.constant 0 : index
    %4 = vector.load %arg5[%c0_7, %c0_8, %c0_9] : memref<2x1x32xf32, #tpu.memory_space<vmem>>, vector<1x1x32xf32>
    %5 = vector.shape_cast %4 : vector<1x1x32xf32> to vector<1x32xf32>
    %cst = arith.constant dense<0.000000e+00> : vector<16xf32>
    %6 = vector.multi_reduction <add>, %0, %cst [1] : vector<16x32xf32> to vector<16xf32>
    %7 = vector.shape_cast %6 : vector<16xf32> to vector<16x1xf32>
    %cst_10 = arith.constant 3.200000e+01 : f32
    %8 = vector.broadcast %cst_10 : f32 to vector<16x1xf32>
    %9 = arith.divf %7, %8 : vector<16x1xf32>
    %10 = vector.broadcast %9 : vector<16x1xf32> to vector<16x32xf32>
    %11 = arith.subf %0, %10 : vector<16x32xf32>
    %12 = vector.broadcast %9 : vector<16x1xf32> to vector<16x32xf32>
    %13 = arith.subf %0, %12 : vector<16x32xf32>
    %14 = arith.mulf %11, %13 : vector<16x32xf32>
    %cst_11 = arith.constant dense<0.000000e+00> : vector<16xf32>
    %15 = vector.multi_reduction <add>, %14, %cst_11 [1] : vector<16x32xf32> to vector<16xf32>
    %16 = vector.shape_cast %15 : vector<16xf32> to vector<16x1xf32>
    %cst_12 = arith.constant 3.200000e+01 : f32
    %17 = vector.broadcast %cst_12 : f32 to vector<16x1xf32>
    %18 = arith.divf %16, %17 : vector<16x1xf32>
    %19 = vector.broadcast %9 : vector<16x1xf32> to vector<16x32xf32>
    %20 = arith.subf %0, %19 : vector<16x32xf32>
    %cst_13 = arith.constant 9.99999974E-6 : f32
    %21 = vector.broadcast %cst_13 : f32 to vector<16x1xf32>
    %22 = arith.addf %18, %21 : vector<16x1xf32>
    %23 = math.rsqrt %22 : vector<16x1xf32>
    %24 = vector.broadcast %23 : vector<16x1xf32> to vector<16x32xf32>
    %25 = arith.mulf %20, %24 : vector<16x32xf32>
    %26 = vector.broadcast %3 : vector<1x32xf32> to vector<16x32xf32>
    %27 = arith.mulf %25, %26 : vector<16x32xf32>
    %28 = vector.broadcast %5 : vector<1x32xf32> to vector<16x32xf32>
    %29 = arith.addf %27, %28 : vector<16x32xf32>
    %30 = vector.shape_cast %29 : vector<16x32xf32> to vector<1x16x32xf32>
    %31 = vector.shape_cast %30 : vector<1x16x32xf32> to vector<1x16x32xf32>
    %32 = vector.broadcast %31 : vector<1x16x32xf32> to vector<4x16x32xf32>
    %c0_14 = arith.constant 0 : index
    %c0_15 = arith.constant 0 : index
    %c0_16 = arith.constant 0 : index
    %c0_17 = arith.constant 0 : index
    %33 = vector.load %arg6[%c0_14, %c0_15, %c0_16, %c0_17] : memref<2x4x32x8xf32, #tpu.memory_space<vmem>>, vector<1x4x32x8xf32>
    %34 = vector.shape_cast %33 : vector<1x4x32x8xf32> to vector<4x32x8xf32>
    "tpu.trace_start"() <{level = 10 : i32, message = "nrh,nhd->nrd"}> : () -> ()
    %cst_18 = arith.constant dense<0.000000e+00> : vector<4x16x8xf32>
    %35 = tpu.matmul %32, %34, %cst_18 {dimension_numbers = #tpu.dot_dimension_numbers<[2], [1], [1], [2], [0, 0, 0, 1, 1, 2], [0], [0]>} : vector<4x16x32xf32>, vector<4x32x8xf32>, vector<4x16x8xf32> -> vector<4x16x8xf32>
    "tpu.trace_stop"() : () -> ()
    %c0_19 = arith.constant 0 : index
    %c0_20 = arith.constant 0 : index
    %c0_21 = arith.constant 0 : index
    %c0_22 = arith.constant 0 : index
    %36 = vector.load %arg7[%c0_19, %c0_20, %c0_21, %c0_22] : memref<2x4x32x8xf32, #tpu.memory_space<vmem>>, vector<1x4x32x8xf32>
    %37 = vector.shape_cast %36 : vector<1x4x32x8xf32> to vector<4x32x8xf32>
    "tpu.trace_start"() <{level = 10 : i32, message = "nrh,nhd->nrd"}> : () -> ()
    %cst_23 = arith.constant dense<0.000000e+00> : vector<4x16x8xf32>
    %38 = tpu.matmul %32, %37, %cst_23 {dimension_numbers = #tpu.dot_dimension_numbers<[2], [1], [1], [2], [0, 0, 0, 1, 1, 2], [0], [0]>} : vector<4x16x32xf32>, vector<4x32x8xf32>, vector<4x16x8xf32> -> vector<4x16x8xf32>
    "tpu.trace_stop"() : () -> ()
    %c0_24 = arith.constant 0 : index
    %c0_25 = arith.constant 0 : index
    %c0_26 = arith.constant 0 : index
    %c0_27 = arith.constant 0 : index
    %39 = vector.load %arg8[%c0_24, %c0_25, %c0_26, %c0_27] : memref<2x4x32x8xf32, #tpu.memory_space<vmem>>, vector<1x4x32x8xf32>
    %40 = vector.shape_cast %39 : vector<1x4x32x8xf32> to vector<4x32x8xf32>
    "tpu.trace_start"() <{level = 10 : i32, message = "nrh,nhd->nrd"}> : () -> ()
    %cst_28 = arith.constant dense<0.000000e+00> : vector<4x16x8xf32>
    %41 = tpu.matmul %32, %40, %cst_28 {dimension_numbers = #tpu.dot_dimension_numbers<[2], [1], [1], [2], [0, 0, 0, 1, 1, 2], [0], [0]>} : vector<4x16x32xf32>, vector<4x32x8xf32>, vector<4x16x8xf32> -> vector<4x16x8xf32>
    "tpu.trace_stop"() : () -> ()
    %42 = vector.shape_cast %35 : vector<4x16x8xf32> to vector<8x8x8xf32>
    %43 = vector.shape_cast %38 : vector<4x16x8xf32> to vector<8x8x8xf32>
    %44 = vector.shape_cast %41 : vector<4x16x8xf32> to vector<8x8x8xf32>
    "tpu.trace_start"() <{level = 10 : i32, message = "xqd,xkd->xqk"}> : () -> ()
    %cst_29 = arith.constant dense<0.000000e+00> : vector<8x8x8xf32>
    %45 = tpu.matmul %42, %43, %cst_29 {dimension_numbers = #tpu.dot_dimension_numbers<[2], [2], [1], [1], [0, 0, 0, 1, 1, 1], [0], [0]>} : vector<8x8x8xf32>, vector<8x8x8xf32>, vector<8x8x8xf32> -> vector<8x8x8xf32>
    "tpu.trace_stop"() : () -> ()
    %46 = arith.addf %45, %1 : vector<8x8x8xf32>
    %cst_30 = arith.constant dense<0xFF800000> : vector<8x8xf32>
    %47 = vector.multi_reduction <maximumf>, %46, %cst_30 [2] : vector<8x8x8xf32> to vector<8x8xf32>
    %48 = vector.shape_cast %47 : vector<8x8xf32> to vector<8x8x1xf32>
    %49 = vector.broadcast %48 : vector<8x8x1xf32> to vector<8x8x8xf32>
    %50 = arith.subf %46, %49 : vector<8x8x8xf32>
    %51 = math.exp %50 : vector<8x8x8xf32>
    %cst_31 = arith.constant dense<0.000000e+00> : vector<8x8xf32>
    %52 = vector.multi_reduction <add>, %51, %cst_31 [2] : vector<8x8x8xf32> to vector<8x8xf32>
    %53 = vector.shape_cast %52 : vector<8x8xf32> to vector<8x8x1xf32>
    %54 = tpu.reciprocal %53 {approx = true} : vector<8x8x1xf32> -> vector<8x8x1xf32>
    %55 = vector.broadcast %54 : vector<8x8x1xf32> to vector<8x8x8xf32>
    %56 = arith.mulf %51, %55 : vector<8x8x8xf32>
    "tpu.trace_start"() <{level = 10 : i32, message = "xqk,xkd->xqd"}> : () -> ()
    %cst_32 = arith.constant dense<0.000000e+00> : vector<8x8x8xf32>
    %57 = tpu.matmul %56, %44, %cst_32 {dimension_numbers = #tpu.dot_dimension_numbers<[2], [1], [1], [2], [0, 0, 0, 1, 1, 2], [0], [0]>} : vector<8x8x8xf32>, vector<8x8x8xf32>, vector<8x8x8xf32> -> vector<8x8x8xf32>
    "tpu.trace_stop"() : () -> ()
    %58 = vector.shape_cast %57 : vector<8x8x8xf32> to vector<4x16x8xf32>
    %c0_33 = arith.constant 0 : index
    %c0_34 = arith.constant 0 : index
    %c0_35 = arith.constant 0 : index
    %c0_36 = arith.constant 0 : index
    %59 = vector.load %arg9[%c0_33, %c0_34, %c0_35, %c0_36] : memref<2x4x8x32xf32, #tpu.memory_space<vmem>>, vector<1x4x8x32xf32>
    %60 = vector.shape_cast %59 : vector<1x4x8x32xf32> to vector<4x8x32xf32>
    "tpu.trace_start"() <{level = 10 : i32, message = "nrd,ndh->nrh"}> : () -> ()
    %cst_37 = arith.constant dense<0.000000e+00> : vector<4x16x32xf32>
    %61 = tpu.matmul %58, %60, %cst_37 {dimension_numbers = #tpu.dot_dimension_numbers<[2], [1], [1], [2], [0, 0, 0, 1, 1, 2], [0], [0]>} : vector<4x16x8xf32>, vector<4x8x32xf32>, vector<4x16x32xf32> -> vector<4x16x32xf32>
    "tpu.trace_stop"() : () -> ()
    %cst_38 = arith.constant dense<0.000000e+00> : vector<16x32xf32>
    %62 = vector.multi_reduction <add>, %61, %cst_38 [0] : vector<4x16x32xf32> to vector<16x32xf32>
    %63 = arith.addf %0, %62 : vector<16x32xf32>
    %c0_39 = arith.constant 0 : index
    %c0_40 = arith.constant 0 : index
    %c0_41 = arith.constant 0 : index
    %64 = vector.load %arg10[%c0_39, %c0_40, %c0_41] : memref<2x1x32xf32, #tpu.memory_space<vmem>>, vector<1x1x32xf32>
    %65 = vector.shape_cast %64 : vector<1x1x32xf32> to vector<1x32xf32>
    %66 = vector.broadcast %65 : vector<1x32xf32> to vector<16x32xf32>
    %67 = arith.addf %63, %66 : vector<16x32xf32>
    %c0_42 = arith.constant 0 : index
    %c0_43 = arith.constant 0 : index
    %c0_44 = arith.constant 0 : index
    %68 = vector.load %arg11[%c0_42, %c0_43, %c0_44] : memref<2x1x32xf32, #tpu.memory_space<vmem>>, vector<1x1x32xf32>
    %69 = vector.shape_cast %68 : vector<1x1x32xf32> to vector<1x32xf32>
    %c0_45 = arith.constant 0 : index
    %c0_46 = arith.constant 0 : index
    %c0_47 = arith.constant 0 : index
    %70 = vector.load %arg12[%c0_45, %c0_46, %c0_47] : memref<2x1x32xf32, #tpu.memory_space<vmem>>, vector<1x1x32xf32>
    %71 = vector.shape_cast %70 : vector<1x1x32xf32> to vector<1x32xf32>
    %cst_48 = arith.constant dense<0.000000e+00> : vector<16xf32>
    %72 = vector.multi_reduction <add>, %67, %cst_48 [1] : vector<16x32xf32> to vector<16xf32>
    %73 = vector.shape_cast %72 : vector<16xf32> to vector<16x1xf32>
    %cst_49 = arith.constant 3.200000e+01 : f32
    %74 = vector.broadcast %cst_49 : f32 to vector<16x1xf32>
    %75 = arith.divf %73, %74 : vector<16x1xf32>
    %76 = vector.broadcast %75 : vector<16x1xf32> to vector<16x32xf32>
    %77 = arith.subf %67, %76 : vector<16x32xf32>
    %78 = vector.broadcast %75 : vector<16x1xf32> to vector<16x32xf32>
    %79 = arith.subf %67, %78 : vector<16x32xf32>
    %80 = arith.mulf %77, %79 : vector<16x32xf32>
    %cst_50 = arith.constant dense<0.000000e+00> : vector<16xf32>
    %81 = vector.multi_reduction <add>, %80, %cst_50 [1] : vector<16x32xf32> to vector<16xf32>
    %82 = vector.shape_cast %81 : vector<16xf32> to vector<16x1xf32>
    %cst_51 = arith.constant 3.200000e+01 : f32
    %83 = vector.broadcast %cst_51 : f32 to vector<16x1xf32>
    %84 = arith.divf %82, %83 : vector<16x1xf32>
    %85 = vector.broadcast %75 : vector<16x1xf32> to vector<16x32xf32>
    %86 = arith.subf %67, %85 : vector<16x32xf32>
    %cst_52 = arith.constant 9.99999974E-6 : f32
    %87 = vector.broadcast %cst_52 : f32 to vector<16x1xf32>
    %88 = arith.addf %84, %87 : vector<16x1xf32>
    %89 = math.rsqrt %88 : vector<16x1xf32>
    %90 = vector.broadcast %89 : vector<16x1xf32> to vector<16x32xf32>
    %91 = arith.mulf %86, %90 : vector<16x32xf32>
    %92 = vector.broadcast %69 : vector<1x32xf32> to vector<16x32xf32>
    %93 = arith.mulf %91, %92 : vector<16x32xf32>
    %94 = vector.broadcast %71 : vector<1x32xf32> to vector<16x32xf32>
    %95 = arith.addf %93, %94 : vector<16x32xf32>
    %c0_53 = arith.constant 0 : index
    %c0_54 = arith.constant 0 : index
    %c0_55 = arith.constant 0 : index
    %96 = vector.load %arg13[%c0_53, %c0_54, %c0_55] : memref<2x32x128xf32, #tpu.memory_space<vmem>>, vector<1x32x128xf32>
    %97 = vector.shape_cast %96 : vector<1x32x128xf32> to vector<32x128xf32>
    %cst_56 = arith.constant dense<0.000000e+00> : vector<16x128xf32>
    %98 = tpu.matmul %95, %97, %cst_56 {dimension_numbers = #tpu.dot_dimension_numbers<[1], [0], [0], [1], [0, 0, 1, 1], [], []>} : vector<16x32xf32>, vector<32x128xf32>, vector<16x128xf32> -> vector<16x128xf32>
    %c0_57 = arith.constant 0 : index
    %c0_58 = arith.constant 0 : index
    %c0_59 = arith.constant 0 : index
    %99 = vector.load %arg14[%c0_57, %c0_58, %c0_59] : memref<2x1x128xf32, #tpu.memory_space<vmem>>, vector<1x1x128xf32>
    %100 = vector.shape_cast %99 : vector<1x1x128xf32> to vector<1x128xf32>
    %101 = vector.broadcast %100 : vector<1x128xf32> to vector<16x128xf32>
    %102 = arith.addf %98, %101 : vector<16x128xf32>
    %cst_60 = arith.constant 5.000000e-01 : f32
    %103 = vector.broadcast %cst_60 : f32 to vector<16x128xf32>
    %104 = arith.mulf %103, %102 : vector<16x128xf32>
    %cst_61 = arith.constant 4.471500e-02 : f32
    %105 = vector.broadcast %cst_61 : f32 to vector<16x128xf32>
    %106 = arith.mulf %105, %102 : vector<16x128xf32>
    %107 = arith.mulf %106, %102 : vector<16x128xf32>
    %108 = arith.mulf %107, %102 : vector<16x128xf32>
    %109 = arith.addf %102, %108 : vector<16x128xf32>
    %cst_62 = arith.constant 0.797884583 : f32
    %110 = vector.broadcast %cst_62 : f32 to vector<16x128xf32>
    %111 = arith.mulf %110, %109 : vector<16x128xf32>
    %112 = math.tanh %111 : vector<16x128xf32>
    %cst_63 = arith.constant 1.000000e+00 : f32
    %113 = vector.broadcast %cst_63 : f32 to vector<16x128xf32>
    %114 = arith.addf %113, %112 : vector<16x128xf32>
    %115 = arith.mulf %104, %114 : vector<16x128xf32>
    %c0_64 = arith.constant 0 : index
    %c0_65 = arith.constant 0 : index
    %c0_66 = arith.constant 0 : index
    %116 = vector.load %arg15[%c0_64, %c0_65, %c0_66] : memref<2x128x32xf32, #tpu.memory_space<vmem>>, vector<1x128x32xf32>
    %117 = vector.shape_cast %116 : vector<1x128x32xf32> to vector<128x32xf32>
    %cst_67 = arith.constant dense<0.000000e+00> : vector<16x32xf32>
    %118 = tpu.matmul %115, %117, %cst_67 {dimension_numbers = #tpu.dot_dimension_numbers<[1], [0], [0], [1], [0, 0, 1, 1], [], []>} : vector<16x128xf32>, vector<128x32xf32>, vector<16x32xf32> -> vector<16x32xf32>
    %c0_68 = arith.constant 0 : index
    %c0_69 = arith.constant 0 : index
    %c0_70 = arith.constant 0 : index
    %119 = vector.load %arg16[%c0_68, %c0_69, %c0_70] : memref<2x1x32xf32, #tpu.memory_space<vmem>>, vector<1x1x32xf32>
    %120 = vector.shape_cast %119 : vector<1x1x32xf32> to vector<1x32xf32>
    %121 = vector.broadcast %120 : vector<1x32xf32> to vector<16x32xf32>
    %122 = arith.addf %118, %121 : vector<16x32xf32>
    %123 = arith.addf %67, %122 : vector<16x32xf32>
    %c1 = arith.constant 1 : index
    %c0_71 = arith.constant 0 : index
    %c0_72 = arith.constant 0 : index
    %124 = vector.load %arg4[%c1, %c0_71, %c0_72] : memref<2x1x32xf32, #tpu.memory_space<vmem>>, vector<1x1x32xf32>
    %125 = vector.shape_cast %124 : vector<1x1x32xf32> to vector<1x32xf32>
    %c1_73 = arith.constant 1 : index
    %c0_74 = arith.constant 0 : index
    %c0_75 = arith.constant 0 : index
    %126 = vector.load %arg5[%c1_73, %c0_74, %c0_75] : memref<2x1x32xf32, #tpu.memory_space<vmem>>, vector<1x1x32xf32>
    %127 = vector.shape_cast %126 : vector<1x1x32xf32> to vector<1x32xf32>
    %cst_76 = arith.constant dense<0.000000e+00> : vector<16xf32>
    %128 = vector.multi_reduction <add>, %123, %cst_76 [1] : vector<16x32xf32> to vector<16xf32>
    %129 = vector.shape_cast %128 : vector<16xf32> to vector<16x1xf32>
    %cst_77 = arith.constant 3.200000e+01 : f32
    %130 = vector.broadcast %cst_77 : f32 to vector<16x1xf32>
    %131 = arith.divf %129, %130 : vector<16x1xf32>
    %132 = vector.broadcast %131 : vector<16x1xf32> to vector<16x32xf32>
    %133 = arith.subf %123, %132 : vector<16x32xf32>
    %134 = vector.broadcast %131 : vector<16x1xf32> to vector<16x32xf32>
    %135 = arith.subf %123, %134 : vector<16x32xf32>
    %136 = arith.mulf %133, %135 : vector<16x32xf32>
    %cst_78 = arith.constant dense<0.000000e+00> : vector<16xf32>
    %137 = vector.multi_reduction <add>, %136, %cst_78 [1] : vector<16x32xf32> to vector<16xf32>
    %138 = vector.shape_cast %137 : vector<16xf32> to vector<16x1xf32>
    %cst_79 = arith.constant 3.200000e+01 : f32
    %139 = vector.broadcast %cst_79 : f32 to vector<16x1xf32>
    %140 = arith.divf %138, %139 : vector<16x1xf32>
    %141 = vector.broadcast %131 : vector<16x1xf32> to vector<16x32xf32>
    %142 = arith.subf %123, %141 : vector<16x32xf32>
    %cst_80 = arith.constant 9.99999974E-6 : f32
    %143 = vector.broadcast %cst_80 : f32 to vector<16x1xf32>
    %144 = arith.addf %140, %143 : vector<16x1xf32>
    %145 = math.rsqrt %144 : vector<16x1xf32>
    %146 = vector.broadcast %145 : vector<16x1xf32> to vector<16x32xf32>
    %147 = arith.mulf %142, %146 : vector<16x32xf32>
    %148 = vector.broadcast %125 : vector<1x32xf32> to vector<16x32xf32>
    %149 = arith.mulf %147, %148 : vector<16x32xf32>
    %150 = vector.broadcast %127 : vector<1x32xf32> to vector<16x32xf32>
    %151 = arith.addf %149, %150 : vector<16x32xf32>
    %152 = vector.shape_cast %151 : vector<16x32xf32> to vector<1x16x32xf32>
    %153 = vector.shape_cast %152 : vector<1x16x32xf32> to vector<1x16x32xf32>
    %154 = vector.broadcast %153 : vector<1x16x32xf32> to vector<4x16x32xf32>
    %c1_81 = arith.constant 1 : index
    %c0_82 = arith.constant 0 : index
    %c0_83 = arith.constant 0 : index
    %c0_84 = arith.constant 0 : index
    %155 = vector.load %arg6[%c1_81, %c0_82, %c0_83, %c0_84] : memref<2x4x32x8xf32, #tpu.memory_space<vmem>>, vector<1x4x32x8xf32>
    %156 = vector.shape_cast %155 : vector<1x4x32x8xf32> to vector<4x32x8xf32>
    "tpu.trace_start"() <{level = 10 : i32, message = "nrh,nhd->nrd"}> : () -> ()
    %cst_85 = arith.constant dense<0.000000e+00> : vector<4x16x8xf32>
    %157 = tpu.matmul %154, %156, %cst_85 {dimension_numbers = #tpu.dot_dimension_numbers<[2], [1], [1], [2], [0, 0, 0, 1, 1, 2], [0], [0]>} : vector<4x16x32xf32>, vector<4x32x8xf32>, vector<4x16x8xf32> -> vector<4x16x8xf32>
    "tpu.trace_stop"() : () -> ()
    %c1_86 = arith.constant 1 : index
    %c0_87 = arith.constant 0 : index
    %c0_88 = arith.constant 0 : index
    %c0_89 = arith.constant 0 : index
    %158 = vector.load %arg7[%c1_86, %c0_87, %c0_88, %c0_89] : memref<2x4x32x8xf32, #tpu.memory_space<vmem>>, vector<1x4x32x8xf32>
    %159 = vector.shape_cast %158 : vector<1x4x32x8xf32> to vector<4x32x8xf32>
    "tpu.trace_start"() <{level = 10 : i32, message = "nrh,nhd->nrd"}> : () -> ()
    %cst_90 = arith.constant dense<0.000000e+00> : vector<4x16x8xf32>
    %160 = tpu.matmul %154, %159, %cst_90 {dimension_numbers = #tpu.dot_dimension_numbers<[2], [1], [1], [2], [0, 0, 0, 1, 1, 2], [0], [0]>} : vector<4x16x32xf32>, vector<4x32x8xf32>, vector<4x16x8xf32> -> vector<4x16x8xf32>
    "tpu.trace_stop"() : () -> ()
    %c1_91 = arith.constant 1 : index
    %c0_92 = arith.constant 0 : index
    %c0_93 = arith.constant 0 : index
    %c0_94 = arith.constant 0 : index
    %161 = vector.load %arg8[%c1_91, %c0_92, %c0_93, %c0_94] : memref<2x4x32x8xf32, #tpu.memory_space<vmem>>, vector<1x4x32x8xf32>
    %162 = vector.shape_cast %161 : vector<1x4x32x8xf32> to vector<4x32x8xf32>
    "tpu.trace_start"() <{level = 10 : i32, message = "nrh,nhd->nrd"}> : () -> ()
    %cst_95 = arith.constant dense<0.000000e+00> : vector<4x16x8xf32>
    %163 = tpu.matmul %154, %162, %cst_95 {dimension_numbers = #tpu.dot_dimension_numbers<[2], [1], [1], [2], [0, 0, 0, 1, 1, 2], [0], [0]>} : vector<4x16x32xf32>, vector<4x32x8xf32>, vector<4x16x8xf32> -> vector<4x16x8xf32>
    "tpu.trace_stop"() : () -> ()
    %164 = vector.shape_cast %157 : vector<4x16x8xf32> to vector<8x8x8xf32>
    %165 = vector.shape_cast %160 : vector<4x16x8xf32> to vector<8x8x8xf32>
    %166 = vector.shape_cast %163 : vector<4x16x8xf32> to vector<8x8x8xf32>
    "tpu.trace_start"() <{level = 10 : i32, message = "xqd,xkd->xqk"}> : () -> ()
    %cst_96 = arith.constant dense<0.000000e+00> : vector<8x8x8xf32>
    %167 = tpu.matmul %164, %165, %cst_96 {dimension_numbers = #tpu.dot_dimension_numbers<[2], [2], [1], [1], [0, 0, 0, 1, 1, 1], [0], [0]>} : vector<8x8x8xf32>, vector<8x8x8xf32>, vector<8x8x8xf32> -> vector<8x8x8xf32>
    "tpu.trace_stop"() : () -> ()
    %168 = arith.addf %167, %1 : vector<8x8x8xf32>
    %cst_97 = arith.constant dense<0xFF800000> : vector<8x8xf32>
    %169 = vector.multi_reduction <maximumf>, %168, %cst_97 [2] : vector<8x8x8xf32> to vector<8x8xf32>
    %170 = vector.shape_cast %169 : vector<8x8xf32> to vector<8x8x1xf32>
    %171 = vector.broadcast %170 : vector<8x8x1xf32> to vector<8x8x8xf32>
    %172 = arith.subf %168, %171 : vector<8x8x8xf32>
    %173 = math.exp %172 : vector<8x8x8xf32>
    %cst_98 = arith.constant dense<0.000000e+00> : vector<8x8xf32>
    %174 = vector.multi_reduction <add>, %173, %cst_98 [2] : vector<8x8x8xf32> to vector<8x8xf32>
    %175 = vector.shape_cast %174 : vector<8x8xf32> to vector<8x8x1xf32>
    %176 = tpu.reciprocal %175 {approx = true} : vector<8x8x1xf32> -> vector<8x8x1xf32>
    %177 = vector.broadcast %176 : vector<8x8x1xf32> to vector<8x8x8xf32>
    %178 = arith.mulf %173, %177 : vector<8x8x8xf32>
    "tpu.trace_start"() <{level = 10 : i32, message = "xqk,xkd->xqd"}> : () -> ()
    %cst_99 = arith.constant dense<0.000000e+00> : vector<8x8x8xf32>
    %179 = tpu.matmul %178, %166, %cst_99 {dimension_numbers = #tpu.dot_dimension_numbers<[2], [1], [1], [2], [0, 0, 0, 1, 1, 2], [0], [0]>} : vector<8x8x8xf32>, vector<8x8x8xf32>, vector<8x8x8xf32> -> vector<8x8x8xf32>
    "tpu.trace_stop"() : () -> ()
    %180 = vector.shape_cast %179 : vector<8x8x8xf32> to vector<4x16x8xf32>
    %c1_100 = arith.constant 1 : index
    %c0_101 = arith.constant 0 : index
    %c0_102 = arith.constant 0 : index
    %c0_103 = arith.constant 0 : index
    %181 = vector.load %arg9[%c1_100, %c0_101, %c0_102, %c0_103] : memref<2x4x8x32xf32, #tpu.memory_space<vmem>>, vector<1x4x8x32xf32>
    %182 = vector.shape_cast %181 : vector<1x4x8x32xf32> to vector<4x8x32xf32>
    "tpu.trace_start"() <{level = 10 : i32, message = "nrd,ndh->nrh"}> : () -> ()
    %cst_104 = arith.constant dense<0.000000e+00> : vector<4x16x32xf32>
    %183 = tpu.matmul %180, %182, %cst_104 {dimension_numbers = #tpu.dot_dimension_numbers<[2], [1], [1], [2], [0, 0, 0, 1, 1, 2], [0], [0]>} : vector<4x16x8xf32>, vector<4x8x32xf32>, vector<4x16x32xf32> -> vector<4x16x32xf32>
    "tpu.trace_stop"() : () -> ()
    %cst_105 = arith.constant dense<0.000000e+00> : vector<16x32xf32>
    %184 = vector.multi_reduction <add>, %183, %cst_105 [0] : vector<4x16x32xf32> to vector<16x32xf32>
    %185 = arith.addf %123, %184 : vector<16x32xf32>
    %c1_106 = arith.constant 1 : index
    %c0_107 = arith.constant 0 : index
    %c0_108 = arith.constant 0 : index
    %186 = vector.load %arg10[%c1_106, %c0_107, %c0_108] : memref<2x1x32xf32, #tpu.memory_space<vmem>>, vector<1x1x32xf32>
    %187 = vector.shape_cast %186 : vector<1x1x32xf32> to vector<1x32xf32>
    %188 = vector.broadcast %187 : vector<1x32xf32> to vector<16x32xf32>
    %189 = arith.addf %185, %188 : vector<16x32xf32>
    %c1_109 = arith.constant 1 : index
    %c0_110 = arith.constant 0 : index
    %c0_111 = arith.constant 0 : index
    %190 = vector.load %arg11[%c1_109, %c0_110, %c0_111] : memref<2x1x32xf32, #tpu.memory_space<vmem>>, vector<1x1x32xf32>
    %191 = vector.shape_cast %190 : vector<1x1x32xf32> to vector<1x32xf32>
    %c1_112 = arith.constant 1 : index
    %c0_113 = arith.constant 0 : index
    %c0_114 = arith.constant 0 : index
    %192 = vector.load %arg12[%c1_112, %c0_113, %c0_114] : memref<2x1x32xf32, #tpu.memory_space<vmem>>, vector<1x1x32xf32>
    %193 = vector.shape_cast %192 : vector<1x1x32xf32> to vector<1x32xf32>
    %cst_115 = arith.constant dense<0.000000e+00> : vector<16xf32>
    %194 = vector.multi_reduction <add>, %189, %cst_115 [1] : vector<16x32xf32> to vector<16xf32>
    %195 = vector.shape_cast %194 : vector<16xf32> to vector<16x1xf32>
    %cst_116 = arith.constant 3.200000e+01 : f32
    %196 = vector.broadcast %cst_116 : f32 to vector<16x1xf32>
    %197 = arith.divf %195, %196 : vector<16x1xf32>
    %198 = vector.broadcast %197 : vector<16x1xf32> to vector<16x32xf32>
    %199 = arith.subf %189, %198 : vector<16x32xf32>
    %200 = vector.broadcast %197 : vector<16x1xf32> to vector<16x32xf32>
    %201 = arith.subf %189, %200 : vector<16x32xf32>
    %202 = arith.mulf %199, %201 : vector<16x32xf32>
    %cst_117 = arith.constant dense<0.000000e+00> : vector<16xf32>
    %203 = vector.multi_reduction <add>, %202, %cst_117 [1] : vector<16x32xf32> to vector<16xf32>
    %204 = vector.shape_cast %203 : vector<16xf32> to vector<16x1xf32>
    %cst_118 = arith.constant 3.200000e+01 : f32
    %205 = vector.broadcast %cst_118 : f32 to vector<16x1xf32>
    %206 = arith.divf %204, %205 : vector<16x1xf32>
    %207 = vector.broadcast %197 : vector<16x1xf32> to vector<16x32xf32>
    %208 = arith.subf %189, %207 : vector<16x32xf32>
    %cst_119 = arith.constant 9.99999974E-6 : f32
    %209 = vector.broadcast %cst_119 : f32 to vector<16x1xf32>
    %210 = arith.addf %206, %209 : vector<16x1xf32>
    %211 = math.rsqrt %210 : vector<16x1xf32>
    %212 = vector.broadcast %211 : vector<16x1xf32> to vector<16x32xf32>
    %213 = arith.mulf %208, %212 : vector<16x32xf32>
    %214 = vector.broadcast %191 : vector<1x32xf32> to vector<16x32xf32>
    %215 = arith.mulf %213, %214 : vector<16x32xf32>
    %216 = vector.broadcast %193 : vector<1x32xf32> to vector<16x32xf32>
    %217 = arith.addf %215, %216 : vector<16x32xf32>
    %c1_120 = arith.constant 1 : index
    %c0_121 = arith.constant 0 : index
    %c0_122 = arith.constant 0 : index
    %218 = vector.load %arg13[%c1_120, %c0_121, %c0_122] : memref<2x32x128xf32, #tpu.memory_space<vmem>>, vector<1x32x128xf32>
    %219 = vector.shape_cast %218 : vector<1x32x128xf32> to vector<32x128xf32>
    %cst_123 = arith.constant dense<0.000000e+00> : vector<16x128xf32>
    %220 = tpu.matmul %217, %219, %cst_123 {dimension_numbers = #tpu.dot_dimension_numbers<[1], [0], [0], [1], [0, 0, 1, 1], [], []>} : vector<16x32xf32>, vector<32x128xf32>, vector<16x128xf32> -> vector<16x128xf32>
    %c1_124 = arith.constant 1 : index
    %c0_125 = arith.constant 0 : index
    %c0_126 = arith.constant 0 : index
    %221 = vector.load %arg14[%c1_124, %c0_125, %c0_126] : memref<2x1x128xf32, #tpu.memory_space<vmem>>, vector<1x1x128xf32>
    %222 = vector.shape_cast %221 : vector<1x1x128xf32> to vector<1x128xf32>
    %223 = vector.broadcast %222 : vector<1x128xf32> to vector<16x128xf32>
    %224 = arith.addf %220, %223 : vector<16x128xf32>
    %cst_127 = arith.constant 5.000000e-01 : f32
    %225 = vector.broadcast %cst_127 : f32 to vector<16x128xf32>
    %226 = arith.mulf %225, %224 : vector<16x128xf32>
    %cst_128 = arith.constant 4.471500e-02 : f32
    %227 = vector.broadcast %cst_128 : f32 to vector<16x128xf32>
    %228 = arith.mulf %227, %224 : vector<16x128xf32>
    %229 = arith.mulf %228, %224 : vector<16x128xf32>
    %230 = arith.mulf %229, %224 : vector<16x128xf32>
    %231 = arith.addf %224, %230 : vector<16x128xf32>
    %cst_129 = arith.constant 0.797884583 : f32
    %232 = vector.broadcast %cst_129 : f32 to vector<16x128xf32>
    %233 = arith.mulf %232, %231 : vector<16x128xf32>
    %234 = math.tanh %233 : vector<16x128xf32>
    %cst_130 = arith.constant 1.000000e+00 : f32
    %235 = vector.broadcast %cst_130 : f32 to vector<16x128xf32>
    %236 = arith.addf %235, %234 : vector<16x128xf32>
    %237 = arith.mulf %226, %236 : vector<16x128xf32>
    %c1_131 = arith.constant 1 : index
    %c0_132 = arith.constant 0 : index
    %c0_133 = arith.constant 0 : index
    %238 = vector.load %arg15[%c1_131, %c0_132, %c0_133] : memref<2x128x32xf32, #tpu.memory_space<vmem>>, vector<1x128x32xf32>
    %239 = vector.shape_cast %238 : vector<1x128x32xf32> to vector<128x32xf32>
    %cst_134 = arith.constant dense<0.000000e+00> : vector<16x32xf32>
    %240 = tpu.matmul %237, %239, %cst_134 {dimension_numbers = #tpu.dot_dimension_numbers<[1], [0], [0], [1], [0, 0, 1, 1], [], []>} : vector<16x128xf32>, vector<128x32xf32>, vector<16x32xf32> -> vector<16x32xf32>
    %c1_135 = arith.constant 1 : index
    %c0_136 = arith.constant 0 : index
    %c0_137 = arith.constant 0 : index
    %241 = vector.load %arg16[%c1_135, %c0_136, %c0_137] : memref<2x1x32xf32, #tpu.memory_space<vmem>>, vector<1x1x32xf32>
    %242 = vector.shape_cast %241 : vector<1x1x32xf32> to vector<1x32xf32>
    %243 = vector.broadcast %242 : vector<1x32xf32> to vector<16x32xf32>
    %244 = arith.addf %240, %243 : vector<16x32xf32>
    %245 = arith.addf %189, %244 : vector<16x32xf32>
    %c0_138 = arith.constant 0 : index
    %c0_139 = arith.constant 0 : index
    %246 = vector.load %arg21[%c0_138, %c0_139] : memref<16x32xf32, #tpu.memory_space<vmem>>, vector<16x32xf32>
    tpu.vector_store %arg21[%c0_138, %c0_139], %245 {strides = array<i32>} : memref<16x32xf32, #tpu.memory_space<vmem>>, vector<16x32xf32>,
    %c0_140 = arith.constant 0 : index
    %247 = memref.load %arg1[%c0_140] : memref<2xi32, #tpu.memory_space<smem>>
    %248 = arith.index_cast %247 : i32 to index
    %c0_141 = arith.constant 0 : index
    %249 = vector.load %arg21[%248, %c0_141] : memref<16x32xf32, #tpu.memory_space<vmem>>, vector<1x32xf32>
    %c1_142 = arith.constant 1 : index
    %250 = memref.load %arg1[%c1_142] : memref<2xi32, #tpu.memory_space<smem>>
    %251 = arith.index_cast %250 : i32 to index
    %c0_143 = arith.constant 0 : index
    %252 = vector.load %arg21[%251, %c0_143] : memref<16x32xf32, #tpu.memory_space<vmem>>, vector<1x32xf32>
    %253 = tpu.concatenate %249, %252 in 0 : vector<1x32xf32>, vector<1x32xf32> -> vector<2x32xf32>
    %c0_144 = arith.constant 0 : index
    %c0_145 = arith.constant 0 : index
    %254 = vector.load %arg17[%c0_144, %c0_145] : memref<1x32xf32, #tpu.memory_space<vmem>>, vector<1x32xf32>
    %c0_146 = arith.constant 0 : index
    %c0_147 = arith.constant 0 : index
    %255 = vector.load %arg18[%c0_146, %c0_147] : memref<1x32xf32, #tpu.memory_space<vmem>>, vector<1x32xf32>
    %cst_148 = arith.constant dense<0.000000e+00> : vector<2xf32>
    %256 = vector.multi_reduction <add>, %253, %cst_148 [1] : vector<2x32xf32> to vector<2xf32>
    %257 = vector.shape_cast %256 : vector<2xf32> to vector<2x1xf32>
    %cst_149 = arith.constant 3.200000e+01 : f32
    %258 = vector.broadcast %cst_149 : f32 to vector<2x1xf32>
    %259 = arith.divf %257, %258 : vector<2x1xf32>
    %260 = vector.broadcast %259 : vector<2x1xf32> to vector<2x32xf32>
    %261 = arith.subf %253, %260 : vector<2x32xf32>
    %262 = vector.broadcast %259 : vector<2x1xf32> to vector<2x32xf32>
    %263 = arith.subf %253, %262 : vector<2x32xf32>
    %264 = arith.mulf %261, %263 : vector<2x32xf32>
    %cst_150 = arith.constant dense<0.000000e+00> : vector<2xf32>
    %265 = vector.multi_reduction <add>, %264, %cst_150 [1] : vector<2x32xf32> to vector<2xf32>
    %266 = vector.shape_cast %265 : vector<2xf32> to vector<2x1xf32>
    %cst_151 = arith.constant 3.200000e+01 : f32
    %267 = vector.broadcast %cst_151 : f32 to vector<2x1xf32>
    %268 = arith.divf %266, %267 : vector<2x1xf32>
    %269 = vector.broadcast %259 : vector<2x1xf32> to vector<2x32xf32>
    %270 = arith.subf %253, %269 : vector<2x32xf32>
    %cst_152 = arith.constant 9.99999974E-6 : f32
    %271 = vector.broadcast %cst_152 : f32 to vector<2x1xf32>
    %272 = arith.addf %268, %271 : vector<2x1xf32>
    %273 = math.rsqrt %272 : vector<2x1xf32>
    %274 = vector.broadcast %273 : vector<2x1xf32> to vector<2x32xf32>
    %275 = arith.mulf %270, %274 : vector<2x32xf32>
    %276 = vector.broadcast %254 : vector<1x32xf32> to vector<2x32xf32>
    %277 = arith.mulf %275, %276 : vector<2x32xf32>
    %278 = vector.broadcast %255 : vector<1x32xf32> to vector<2x32xf32>
    %279 = arith.addf %277, %278 : vector<2x32xf32>
    %c0_153 = arith.constant 0 : index
    %c0_154 = arith.constant 0 : index
    %280 = vector.load %arg19[%c0_153, %c0_154] : memref<32x128xf32, #tpu.memory_space<vmem>>, vector<32x128xf32>
    %cst_155 = arith.constant dense<0.000000e+00> : vector<2x128xf32>
    %281 = tpu.matmul %279, %280, %cst_155 {dimension_numbers = #tpu.dot_dimension_numbers<[1], [0], [0], [1], [0, 0, 1, 1], [], []>} : vector<2x32xf32>, vector<32x128xf32>, vector<2x128xf32> -> vector<2x128xf32>
    %c0_156 = arith.constant 0 : index
    %c0_157 = arith.constant 0 : index
    %282 = vector.load %arg20[%c0_156, %c0_157] : memref<2x128xf32, #tpu.memory_space<vmem>>, vector<2x128xf32>
    tpu.vector_store %arg20[%c0_156, %c0_157], %281 {strides = array<i32>} : memref<2x128xf32, #tpu.memory_space<vmem>>, vector<2x128xf32>,
    return
  }
  func.func @transform_0(%arg0: i32, %arg1: memref<2xi32, #tpu.memory_space<smem>>) -> (i32, i32) {
    %c0_i32 = arith.constant 0 : i32
    %c0_i32_0 = arith.constant 0 : i32
    %c0_i32_1 = arith.constant 0 : i32
    return %c0_i32, %c0_i32_0 : i32, i32
  }
  func.func @transform_1(%arg0: i32, %arg1: memref<2xi32, #tpu.memory_space<smem>>) -> (i32, i32, i32) {
    %c0_i32 = arith.constant 0 : i32
    %c0_i32_0 = arith.constant 0 : i32
    %c0_i32_1 = arith.constant 0 : i32
    %c0_i32_2 = arith.constant 0 : i32
    return %c0_i32, %c0_i32_0, %c0_i32_1 : i32, i32, i32
  }
  func.func @transform_2(%arg0: i32, %arg1: memref<2xi32, #tpu.memory_space<smem>>) -> (i32, i32, i32) {
    %c0_i32 = arith.constant 0 : i32
    %c0_i32_0 = arith.constant 0 : i32
    %c0_i32_1 = arith.constant 0 : i32
    %c0_i32_2 = arith.constant 0 : i32
    return %c0_i32, %c0_i32_0, %c0_i32_1 : i32, i32, i32
  }
  func.func @transform_3(%arg0: i32, %arg1: memref<2xi32, #tpu.memory_space<smem>>) -> (i32, i32, i32) {
    %c0_i32 = arith.constant 0 : i32
    %c0_i32_0 = arith.constant 0 : i32
    %c0_i32_1 = arith.constant 0 : i32
    %c0_i32_2 = arith.constant 0 : i32
    return %c0_i32, %c0_i32_0, %c0_i32_1 : i32, i32, i32
  }
  func.func @transform_4(%arg0: i32, %arg1: memref<2xi32, #tpu.memory_space<smem>>) -> (i32, i32, i32, i32) {
    %c0_i32 = arith.constant 0 : i32
    %c0_i32_0 = arith.constant 0 : i32
    %c0_i32_1 = arith.constant 0 : i32
    %c0_i32_2 = arith.constant 0 : i32
    %c0_i32_3 = arith.constant 0 : i32
    return %c0_i32, %c0_i32_0, %c0_i32_1, %c0_i32_2 : i32, i32, i32, i32
  }
  func.func @transform_5(%arg0: i32, %arg1: memref<2xi32, #tpu.memory_space<smem>>) -> (i32, i32, i32, i32) {
    %c0_i32 = arith.constant 0 : i32
    %c0_i32_0 = arith.constant 0 : i32
    %c0_i32_1 = arith.constant 0 : i32
    %c0_i32_2 = arith.constant 0 : i32
    %c0_i32_3 = arith.constant 0 : i32
    return %c0_i32, %c0_i32_0, %c0_i32_1, %c0_i32_2 : i32, i32, i32, i32
  }
  func.func @transform_6(%arg0: i32, %arg1: memref<2xi32, #tpu.memory_space<smem>>) -> (i32, i32, i32, i32) {
    %c0_i32 = arith.constant 0 : i32
    %c0_i32_0 = arith.constant 0 : i32
    %c0_i32_1 = arith.constant 0 : i32
    %c0_i32_2 = arith.constant 0 : i32
    %c0_i32_3 = arith.constant 0 : i32
    return %c0_i32, %c0_i32_0, %c0_i32_1, %c0_i32_2 : i32, i32, i32, i32
  }
  func.func @transform_7(%arg0: i32, %arg1: memref<2xi32, #tpu.memory_space<smem>>) -> (i32, i32, i32, i32) {
    %c0_i32 = arith.constant 0 : i32
    %c0_i32_0 = arith.constant 0 : i32
    %c0_i32_1 = arith.constant 0 : i32
    %c0_i32_2 = arith.constant 0 : i32
    %c0_i32_3 = arith.constant 0 : i32
    return %c0_i32, %c0_i32_0, %c0_i32_1, %c0_i32_2 : i32, i32, i32, i32
  }
  func.func @transform_8(%arg0: i32, %arg1: memref<2xi32, #tpu.memory_space<smem>>) -> (i32, i32, i32) {
    %c0_i32 = arith.constant 0 : i32
    %c0_i32_0 = arith.constant 0 : i32
    %c0_i32_1 = arith.constant 0 : i32
    %c0_i32_2 = arith.constant 0 : i32
    return %c0_i32, %c0_i32_0, %c0_i32_1 : i32, i32, i32
  }
  func.func @transform_9(%arg0: i32, %arg1: memref<2xi32, #tpu.memory_space<smem>>) -> (i32, i32, i32) {
    %c0_i32 = arith.constant 0 : i32
    %c0_i32_0 = arith.constant 0 : i32
    %c0_i32_1 = arith.constant 0 : i32
    %c0_i32_2 = arith.constant 0 : i32
    return %c0_i32, %c0_i32_0, %c0_i32_1 : i32, i32, i32
  }
  func.func @transform_10(%arg0: i32, %arg1: memref<2xi32, #tpu.memory_space<smem>>) -> (i32, i32, i32) {
    %c0_i32 = arith.constant 0 : i32
    %c0_i32_0 = arith.constant 0 : i32
    %c0_i32_1 = arith.constant 0 : i32
    %c0_i32_2 = arith.constant 0 : i32
    return %c0_i32, %c0_i32_0, %c0_i32_1 : i32, i32, i32
  }
  func.func @transform_11(%arg0: i32, %arg1: memref<2xi32, #tpu.memory_space<smem>>) -> (i32, i32, i32) {
    %c0_i32 = arith.constant 0 : i32
    %c0_i32_0 = arith.constant 0 : i32
    %c0_i32_1 = arith.constant 0 : i32
    %c0_i32_2 = arith.constant 0 : i32
    return %c0_i32, %c0_i32_0, %c0_i32_1 : i32, i32, i32
  }
  func.func @transform_12(%arg0: i32, %arg1: memref<2xi32, #tpu.memory_space<smem>>) -> (i32, i32, i32) {
    %c0_i32 = arith.constant 0 : i32
    %c0_i32_0 = arith.constant 0 : i32
    %c0_i32_1 = arith.constant 0 : i32
    %c0_i32_2 = arith.constant 0 : i32
    return %c0_i32, %c0_i32_0, %c0_i32_1 : i32, i32, i32
  }
  func.func @transform_13(%arg0: i32, %arg1: memref<2xi32, #tpu.memory_space<smem>>) -> (i32, i32, i32) {
    %c0_i32 = arith.constant 0 : i32
    %c0_i32_0 = arith.constant 0 : i32
    %c0_i32_1 = arith.constant 0 : i32
    %c0_i32_2 = arith.constant 0 : i32
    return %c0_i32, %c0_i32_0, %c0_i32_1 : i32, i32, i32
  }
  func.func @transform_14(%arg0: i32, %arg1: memref<2xi32, #tpu.memory_space<smem>>) -> (i32, i32, i32) {
    %c0_i32 = arith.constant 0 : i32
    %c0_i32_0 = arith.constant 0 : i32
    %c0_i32_1 = arith.constant 0 : i32
    %c0_i32_2 = arith.constant 0 : i32
    return %c0_i32, %c0_i32_0, %c0_i32_1 : i32, i32, i32
  }
  func.func @transform_15(%arg0: i32, %arg1: memref<2xi32, #tpu.memory_space<smem>>) -> (i32, i32) {
    %c0_i32 = arith.constant 0 : i32
    %c0_i32_0 = arith.constant 0 : i32
    %c0_i32_1 = arith.constant 0 : i32
    return %c0_i32, %c0_i32_0 : i32, i32
  }
  func.func @transform_16(%arg0: i32, %arg1: memref<2xi32, #tpu.memory_space<smem>>) -> (i32, i32) {
    %c0_i32 = arith.constant 0 : i32
    %c0_i32_0 = arith.constant 0 : i32
    %c0_i32_1 = arith.constant 0 : i32
    return %c0_i32, %c0_i32_0 : i32, i32
  }
  func.func @transform_17(%arg0: i32, %arg1: memref<2xi32, #tpu.memory_space<smem>>) -> (i32, i32) {
    %c0_i32 = arith.constant 0 : i32
    %c0_i32_0 = arith.constant 0 : i32
    %c0_i32_1 = arith.constant 0 : i32
    return %c0_i32, %c0_i32_0 : i32, i32
  }
  func.func @transform_18(%arg0: i32, %arg1: memref<2xi32, #tpu.memory_space<smem>>) -> (i32, i32) {
    %c0_i32 = arith.constant 0 : i32
    %c0_i32_0 = arith.constant 0 : i32
    %c0_i32_1 = arith.constant 0 : i32
    return %c0_i32, %c0_i32_0 : i32, i32
  }
}

</mosaic_0001>

<llo_original>
// kernel: bert_forward.1
$region0: #{bert_forward.1}
  #allocation0 [shape = 'u32[]', space=smem, size = 0x4, offset = 0x4, fixed_abs, tag = 'smem constant byte address 0x4 - core index']
  #allocation1 [shape = 'u32[72,128]{1,0:T(1,128)}', space=vmem, size = 0x9000, scoped, tag = 'internal scratch']
  #allocation2 [shape = 'f32[16,32]{1,0:T(8,128)}', space=vmem, size = 0x2000, scoped, tag = 'scratch operand']
  #allocation3 [shape = 's32[1]{0}', space=sflag, size = 0x4, scoped, tag = 'scoped memory for bert_forward.1']
  #allocation4 [shape = 'u8[512]{0}', space=smem, size = 0x200, scoped, tag = 'prefetched SMEM operand 0']
  %s0 = inlined_call_operand.vmem [shape: s32[2], index: 0, kind: input, shape index: {}]
  %s1 = inlined_call_operand.vmem [shape: f32[16,32], index: 1, kind: input, shape index: {}]
  %s2 = inlined_call_operand.vmem [shape: f32[8,8,8], index: 2, kind: input, shape index: {}]
  %s3 = inlined_call_operand.vmem [shape: f32[2,1,32], index: 3, kind: input, shape index: {}]
  %s4 = inlined_call_operand.vmem [shape: f32[2,1,32], index: 4, kind: input, shape index: {}]
  %s5 = inlined_call_operand.vmem [shape: f32[2,4,32,8], index: 5, kind: input, shape index: {}]
  %s6 = inlined_call_operand.vmem [shape: f32[2,4,32,8], index: 6, kind: input, shape index: {}]
  %s7 = inlined_call_operand.vmem [shape: f32[2,4,32,8], index: 7, kind: input, shape index: {}]
  %s8 = inlined_call_operand.vmem [shape: f32[2,4,8,32], index: 8, kind: input, shape index: {}]
  %s9 = inlined_call_operand.vmem [shape: f32[2,1,32], index: 9, kind: input, shape index: {}]
  %s10 = inlined_call_operand.vmem [shape: f32[2,1,32], index: 10, kind: input, shape index: {}]
  %s11 = inlined_call_operand.vmem [shape: f32[2,1,32], index: 11, kind: input, shape index: {}]
  %s12 = inlined_call_operand.vmem [shape: f32[2,32,128], index: 12, kind: input, shape index: {}]
  %s13 = inlined_call_operand.vmem [shape: f32[2,1,128], index: 13, kind: input, shape index: {}]
  %s14 = inlined_call_operand.vmem [shape: f32[2,128,32], index: 14, kind: input, shape index: {}]
  %s15 = inlined_call_operand.vmem [shape: f32[2,1,32], index: 15, kind: input, shape index: {}]
  %s16 = inlined_call_operand.vmem [shape: f32[1,32], index: 16, kind: input, shape index: {}]
  %s17 = inlined_call_operand.vmem [shape: f32[1,32], index: 17, kind: input, shape index: {}]
  %s18 = inlined_call_operand.vmem [shape: f32[32,128], index: 18, kind: input, shape index: {}]
  %s19 = inlined_call_operand.vmem [shape: f32[2,128], index: 19, kind: output, shape index: {}]
  %s20 = sld [smem:[#allocation0]]
  $region82: #{bert_forward.1} parent=0
    _
  %s22 = ssub.s32 1, %s20
  %s23 = scalar_select 0, %s22, %s20
  %s25 = sshll.u32 %s0, 4
  %s26 = int_to_ptr.vmem [resolvable:$true] %s25
  %28 = dma.vmem_to_smem %s26, 16, [#allocation4], [#allocation3]
  %30 = dma.done [#allocation3], 16
  %31 = sfence
  // Predicated region
  $region2: #{bert_forward.1} parent=0 // pred_check
    _
  $region3: #{bert_forward.1} parent=0 // pred_check_branch
    %33 = sbr.rel (0) target = $region5
  $region4: #{bert_forward.1} parent=0 // pred_region
    _
  $region5: #{bert_forward.1} parent=0 // pred_fallthru
    _
  // Predicated region
  $region6: #{bert_forward.1} parent=0 // pred_check
    _
  $region7: #{bert_forward.1} parent=0 // pred_check_branch
    %35 = sbr.rel (0) target = $region9
  $region8: #{bert_forward.1} parent=0 // pred_region
    _
  $region9: #{bert_forward.1} parent=0 // pred_fallthru
    _
  // Predicated region
  $region10: #{bert_forward.1} parent=0 // pred_check
    _
  $region11: #{bert_forward.1} parent=0 // pred_check_branch
    %37 = sbr.rel (0) target = $region13
  $region12: #{bert_forward.1} parent=0 // pred_region
    _
  $region13: #{bert_forward.1} parent=0 // pred_fallthru
    _
  // Predicated region
  $region14: #{bert_forward.1} parent=0 // pred_check
    _
  $region15: #{bert_forward.1} parent=0 // pred_check_branch
    %39 = sbr.rel (0) target = $region17
  $region16: #{bert_forward.1} parent=0 // pred_region
    _
  $region17: #{bert_forward.1} parent=0 // pred_fallthru
    _
  // Predicated region
  $region18: #{bert_forward.1} parent=0 // pred_check
    _
  $region19: #{bert_forward.1} parent=0 // pred_check_branch
    %41 = sbr.rel (0) target = $region21
  $region20: #{bert_forward.1} parent=0 // pred_region
    _
  $region21: #{bert_forward.1} parent=0 // pred_fallthru
    _
  // Predicated region
  $region22: #{bert_forward.1} parent=0 // pred_check
    _
  $region23: #{bert_forward.1} parent=0 // pred_check_branch
    %43 = sbr.rel (0) target = $region25
  $region24: #{bert_forward.1} parent=0 // pred_region
    _
  $region25: #{bert_forward.1} parent=0 // pred_fallthru
    _
  // Predicated region
  $region26: #{bert_forward.1} parent=0 // pred_check
    _
  $region27: #{bert_forward.1} parent=0 // pred_check_branch
    %45 = sbr.rel (0) target = $region29
  $region28: #{bert_forward.1} parent=0 // pred_region
    _
  $region29: #{bert_forward.1} parent=0 // pred_fallthru
    _
  // Predicated region
  $region30: #{bert_forward.1} parent=0 // pred_check
    _
  $region31: #{bert_forward.1} parent=0 // pred_check_branch
    %47 = sbr.rel (0) target = $region33
  $region32: #{bert_forward.1} parent=0 // pred_region
    _
  $region33: #{bert_forward.1} parent=0 // pred_fallthru
    _
  // Predicated region
  $region34: #{bert_forward.1} parent=0 // pred_check
    _
  $region35: #{bert_forward.1} parent=0 // pred_check_branch
    %49 = sbr.rel (0) target = $region37
  $region36: #{bert_forward.1} parent=0 // pred_region
    _
  $region37: #{bert_forward.1} parent=0 // pred_fallthru
    _
  // Predicated region
  $region38: #{bert_forward.1} parent=0 // pred_check
    _
  $region39: #{bert_forward.1} parent=0 // pred_check_branch
    %51 = sbr.rel (0) target = $region41
  $region40: #{bert_forward.1} parent=0 // pred_region
    _
  $region41: #{bert_forward.1} parent=0 // pred_fallthru
    _
  // Predicated region
  $region42: #{bert_forward.1} parent=0 // pred_check
    _
  $region43: #{bert_forward.1} parent=0 // pred_check_branch
    %53 = sbr.rel (0) target = $region45
  $region44: #{bert_forward.1} parent=0 // pred_region
    _
  $region45: #{bert_forward.1} parent=0 // pred_fallthru
    _
  // Predicated region
  $region46: #{bert_forward.1} parent=0 // pred_check
    _
  $region47: #{bert_forward.1} parent=0 // pred_check_branch
    %55 = sbr.rel (0) target = $region49
  $region48: #{bert_forward.1} parent=0 // pred_region
    _
  $region49: #{bert_forward.1} parent=0 // pred_fallthru
    _
  // Predicated region
  $region50: #{bert_forward.1} parent=0 // pred_check
    _
  $region51: #{bert_forward.1} parent=0 // pred_check_branch
    %57 = sbr.rel (0) target = $region53
  $region52: #{bert_forward.1} parent=0 // pred_region
    _
  $region53: #{bert_forward.1} parent=0 // pred_fallthru
    _
  // Predicated region
  $region54: #{bert_forward.1} parent=0 // pred_check
    _
  $region55: #{bert_forward.1} parent=0 // pred_check_branch
    %59 = sbr.rel (0) target = $region57
  $region56: #{bert_forward.1} parent=0 // pred_region
    _
  $region57: #{bert_forward.1} parent=0 // pred_fallthru
    _
  // Predicated region
  $region58: #{bert_forward.1} parent=0 // pred_check
    _
  $region59: #{bert_forward.1} parent=0 // pred_check_branch
    %61 = sbr.rel (0) target = $region61
  $region60: #{bert_forward.1} parent=0 // pred_region
    _
  $region61: #{bert_forward.1} parent=0 // pred_fallthru
    _
  // Predicated region
  $region62: #{bert_forward.1} parent=0 // pred_check
    _
  $region63: #{bert_forward.1} parent=0 // pred_check_branch
    %63 = sbr.rel (0) target = $region65
  $region64: #{bert_forward.1} parent=0 // pred_region
    _
  $region65: #{bert_forward.1} parent=0 // pred_fallthru
    _
  // Predicated region
  $region66: #{bert_forward.1} parent=0 // pred_check
    _
  $region67: #{bert_forward.1} parent=0 // pred_check_branch
    %65 = sbr.rel (0) target = $region69
  $region68: #{bert_forward.1} parent=0 // pred_region
    _
  $region69: #{bert_forward.1} parent=0 // pred_fallthru
    _
  // Predicated region
  $region70: #{bert_forward.1} parent=0 // pred_check
    _
  $region71: #{bert_forward.1} parent=0 // pred_check_branch
    %67 = sbr.rel (0) target = $region73
  $region72: #{bert_forward.1} parent=0 // pred_region
    _
  $region73: #{bert_forward.1} parent=0 // pred_fallthru
    _
  %v68 = vld [vmem:[%s1] sm:$0xff]
  %v69 = vld [vmem:[%s1 + $0x8] sm:$0xff]
  %v70 = vld [vmem:[%s2] sm:$0xff]
  %v71 = vld [vmem:[%s2 + $0x8] sm:$0xff]
  %v72 = vld [vmem:[%s2 + $0x10] sm:$0xff]
  %v73 = vld [vmem:[%s2 + $0x18] sm:$0xff]
  %v74 = vld [vmem:[%s2 + $0x20] sm:$0xff]
  %v75 = vld [vmem:[%s2 + $0x28] sm:$0xff]
  %v76 = vld [vmem:[%s2 + $0x30] sm:$0xff]
  %v77 = vld [vmem:[%s2 + $0x38] sm:$0xff]
  %v78 = vld [vmem:[%s3] sm:$0x1]
  %v79 = vld [vmem:[%s4] sm:$0x1]
  %vm80 = vcmask 261120
  %v81 = vsel %vm80, %v68, 0.0
  %82 = vadd.xlane.f32.xlu0 %v81
  %v83 = vpop.xlane.xlu0 %82
  %v84 = vsel %vm80, %v69, 0.0
  %85 = vadd.xlane.f32.xlu0 %v84
  %v86 = vpop.xlane.xlu0 %85
  %v87 = vrcp.pop 32.0
  %v88 = vmul.f32 32.0, %v87
  %v89 = vsub.f32 1.0, %v88
  %v90 = vmul.f32 %v87, %v89
  %v91 = vadd.f32 %v87, %v90
  %vm92 = vweird.f32 %v87
  %v93 = vsel %vm92, %v87, %v91
  %v94 = vmul.f32 %v83, %v93
  %v95 = vmul.f32 %v86, %v93
  %v96 = vsub.f32 %v68, %v94
  %v97 = vsub.f32 %v69, %v95
  %v98 = vmul.f32 %v96, %v96
  %v99 = vmul.f32 %v97, %v97
  %v100 = vsel %vm80, %v98, 0.0
  %101 = vadd.xlane.f32.xlu0 %v100
  %v102 = vpop.xlane.xlu0 %101
  %v103 = vsel %vm80, %v99, 0.0
  %104 = vadd.xlane.f32.xlu0 %v103
  %v105 = vpop.xlane.xlu0 %104
  %v106 = vmul.f32 %v102, %v93
  %v107 = vmul.f32 %v105, %v93
  %v108 = vadd.f32 %v106, 1e-05
  %v109 = vadd.f32 %v107, 1e-05
  %v110 = vrsqrt.pop %v108
  %v111 = vmul.f32 %v110, %v108
  %v112 = vmul.f32 %v111, %v110
  %v113 = vmul.f32 0.5, %v112
  %v114 = vsub.f32 1.5, %v113
  %v115 = vmul.f32 %v110, %v114
  %vm116 = vweird.f32 %v108
  %vm117 = vweird.f32 %v110
  %vm118 = vmor %vm116, %vm117
  %v119 = vsel %vm118, %v110, %v115
  %v120 = vrsqrt.pop %v109
  %v121 = vmul.f32 %v120, %v109
  %v122 = vmul.f32 %v121, %v120
  %v123 = vmul.f32 0.5, %v122
  %v124 = vsub.f32 1.5, %v123
  %v125 = vmul.f32 %v120, %v124
  %vm126 = vweird.f32 %v109
  %vm127 = vweird.f32 %v120
  %vm128 = vmor %vm126, %vm127
  %v129 = vsel %vm128, %v120, %v125
  %v130 = vmul.f32 %v96, %v119
  %v131 = vmul.f32 %v97, %v129
  %v133 = vperm.slane %v78, 0
  %v135 = vmul.f32 %v130, %v133
  %v136 = vmul.f32 %v131, %v133
  %v138 = vperm.slane %v79, 0
  %v140 = vadd.f32 %v135, %v138
  %v141 = vadd.f32 %v136, %v138
  %v142 = vld [vmem:[%s5] sm:$0xff]
  %v143 = vld [vmem:[%s5 + $0x8] sm:$0xff]
  %v144 = vld [vmem:[%s5 + $0x10] sm:$0xff]
  %v145 = vld [vmem:[%s5 + $0x18] sm:$0xff]
  %v146 = vld [vmem:[%s5 + $0x20] sm:$0xff]
  %v147 = vld [vmem:[%s5 + $0x28] sm:$0xff]
  %v148 = vld [vmem:[%s5 + $0x30] sm:$0xff]
  %v149 = vld [vmem:[%s5 + $0x38] sm:$0xff]
  %v150 = vld [vmem:[%s5 + $0x40] sm:$0xff]
  %v151 = vld [vmem:[%s5 + $0x48] sm:$0xff]
  %v152 = vld [vmem:[%s5 + $0x50] sm:$0xff]
  %v153 = vld [vmem:[%s5 + $0x58] sm:$0xff]
  %v154 = vld [vmem:[%s5 + $0x60] sm:$0xff]
  %v155 = vld [vmem:[%s5 + $0x68] sm:$0xff]
  %v156 = vld [vmem:[%s5 + $0x70] sm:$0xff]
  %v157 = vld [vmem:[%s5 + $0x78] sm:$0xff]
  %v159 = vsel %vm80, %v140, 0
  %v162 = vsel %vm80, %v141, 0
  %164 = vmatpush.msra.mxu0 0.0
  %165 = vmatpush.msra.mxu0 0.0
  %166 = vmatpush.msra.mxu0 0.0
  %167 = vmatpush.msra.mxu0 0.0
  %168 = vmatpush.msra.mxu0 0.0
  %169 = vmatpush.msra.mxu0 0.0
  %170 = vmatpush.msra.mxu0 0.0
  %171 = vmatpush.msra.mxu0 0.0
  %172 = vmatpush.msra.mxu0 0.0
  %173 = vmatpush.msra.mxu0 0.0
  %174 = vmatpush.msra.mxu0 0.0
  %175 = vmatpush.msra.mxu0 0.0
  %176 = vmatpush.msra.mxu0 %v145
  %177 = vmatpush.msra.mxu0 %v144
  %178 = vmatpush.msra.mxu0 %v143
  %179 = vmatpush.msra.mxu0 %v142
  %180 = vmatmul.f32.gmra.mxu0 %v159
  %v181 = vpop.f32.mrf.mxu0
  %v182 = vadd.f32 0.0, %v181
  %183 = vmatmul.f32.gmra.mxu0 %v162
  %v184 = vpop.f32.mrf.mxu0
  %v185 = vadd.f32 0.0, %v184
  %186 = vdwg.mxu0
  %187 = vmatpush.msra.mxu0 0.0
  %188 = vmatpush.msra.mxu0 0.0
  %189 = vmatpush.msra.mxu0 0.0
  %190 = vmatpush.msra.mxu0 0.0
  %191 = vmatpush.msra.mxu0 0.0
  %192 = vmatpush.msra.mxu0 0.0
  %193 = vmatpush.msra.mxu0 0.0
  %194 = vmatpush.msra.mxu0 0.0
  %195 = vmatpush.msra.mxu0 0.0
  %196 = vmatpush.msra.mxu0 0.0
  %197 = vmatpush.msra.mxu0 0.0
  %198 = vmatpush.msra.mxu0 0.0
  %199 = vmatpush.msra.mxu0 %v149
  %200 = vmatpush.msra.mxu0 %v148
  %201 = vmatpush.msra.mxu0 %v147
  %202 = vmatpush.msra.mxu0 %v146
  %203 = vmatmul.f32.gmra.mxu0 %v159
  %v204 = vpop.f32.mrf.mxu0
  %v205 = vadd.f32 0.0, %v204
  %206 = vmatmul.f32.gmra.mxu0 %v162
  %v207 = vpop.f32.mrf.mxu0
  %v208 = vadd.f32 0.0, %v207
  %209 = vdwg.mxu0
  %210 = vmatpush.msra.mxu0 0.0
  %211 = vmatpush.msra.mxu0 0.0
  %212 = vmatpush.msra.mxu0 0.0
  %213 = vmatpush.msra.mxu0 0.0
  %214 = vmatpush.msra.mxu0 0.0
  %215 = vmatpush.msra.mxu0 0.0
  %216 = vmatpush.msra.mxu0 0.0
  %217 = vmatpush.msra.mxu0 0.0
  %218 = vmatpush.msra.mxu0 0.0
  %219 = vmatpush.msra.mxu0 0.0
  %220 = vmatpush.msra.mxu0 0.0
  %221 = vmatpush.msra.mxu0 0.0
  %222 = vmatpush.msra.mxu0 %v153
  %223 = vmatpush.msra.mxu0 %v152
  %224 = vmatpush.msra.mxu0 %v151
  %225 = vmatpush.msra.mxu0 %v150
  %226 = vmatmul.f32.gmra.mxu0 %v159
  %v227 = vpop.f32.mrf.mxu0
  %v228 = vadd.f32 0.0, %v227
  %229 = vmatmul.f32.gmra.mxu0 %v162
  %v230 = vpop.f32.mrf.mxu0
  %v231 = vadd.f32 0.0, %v230
  %232 = vdwg.mxu0
  %233 = vmatpush.msra.mxu0 0.0
  %234 = vmatpush.msra.mxu0 0.0
  %235 = vmatpush.msra.mxu0 0.0
  %236 = vmatpush.msra.mxu0 0.0
  %237 = vmatpush.msra.mxu0 0.0
  %238 = vmatpush.msra.mxu0 0.0
  %239 = vmatpush.msra.mxu0 0.0
  %240 = vmatpush.msra.mxu0 0.0
  %241 = vmatpush.msra.mxu0 0.0
  %242 = vmatpush.msra.mxu0 0.0
  %243 = vmatpush.msra.mxu0 0.0
  %244 = vmatpush.msra.mxu0 0.0
  %245 = vmatpush.msra.mxu0 %v157
  %246 = vmatpush.msra.mxu0 %v156
  %247 = vmatpush.msra.mxu0 %v155
  %248 = vmatpush.msra.mxu0 %v154
  %249 = vmatmul.f32.gmra.mxu0 %v159
  %v250 = vpop.f32.mrf.mxu0
  %v251 = vadd.f32 0.0, %v250
  %252 = vmatmul.f32.gmra.mxu0 %v162
  %v253 = vpop.f32.mrf.mxu0
  %v254 = vadd.f32 0.0, %v253
  %255 = vdwg.mxu0
  %v256 = vld [vmem:[%s6] sm:$0xff]
  %v257 = vld [vmem:[%s6 + $0x8] sm:$0xff]
  %v258 = vld [vmem:[%s6 + $0x10] sm:$0xff]
  %v259 = vld [vmem:[%s6 + $0x18] sm:$0xff]
  %v260 = vld [vmem:[%s6 + $0x20] sm:$0xff]
  %v261 = vld [vmem:[%s6 + $0x28] sm:$0xff]
  %v262 = vld [vmem:[%s6 + $0x30] sm:$0xff]
  %v263 = vld [vmem:[%s6 + $0x38] sm:$0xff]
  %v264 = vld [vmem:[%s6 + $0x40] sm:$0xff]
  %v265 = vld [vmem:[%s6 + $0x48] sm:$0xff]
  %v266 = vld [vmem:[%s6 + $0x50] sm:$0xff]
  %v267 = vld [vmem:[%s6 + $0x58] sm:$0xff]
  %v268 = vld [vmem:[%s6 + $0x60] sm:$0xff]
  %v269 = vld [vmem:[%s6 + $0x68] sm:$0xff]
  %v270 = vld [vmem:[%s6 + $0x70] sm:$0xff]
  %v271 = vld [vmem:[%s6 + $0x78] sm:$0xff]
  %272 = vmatpush.msra.mxu0 0.0
  %273 = vmatpush.msra.mxu0 0.0
  %274 = vmatpush.msra.mxu0 0.0
  %275 = vmatpush.msra.mxu0 0.0
  %276 = vmatpush.msra.mxu0 0.0
  %277 = vmatpush.msra.mxu0 0.0
  %278 = vmatpush.msra.mxu0 0.0
  %279 = vmatpush.msra.mxu0 0.0
  %280 = vmatpush.msra.mxu0 0.0
  %281 = vmatpush.msra.mxu0 0.0
  %282 = vmatpush.msra.mxu0 0.0
  %283 = vmatpush.msra.mxu0 0.0
  %284 = vmatpush.msra.mxu0 %v259
  %285 = vmatpush.msra.mxu0 %v258
  %286 = vmatpush.msra.mxu0 %v257
  %287 = vmatpush.msra.mxu0 %v256
  %288 = vmatmul.f32.gmra.mxu0 %v159
  %v289 = vpop.f32.mrf.mxu0
  %v290 = vadd.f32 0.0, %v289
  %291 = vmatmul.f32.gmra.mxu0 %v162
  %v292 = vpop.f32.mrf.mxu0
  %v293 = vadd.f32 0.0, %v292
  %294 = vdwg.mxu0
  %295 = vmatpush.msra.mxu0 0.0
  %296 = vmatpush.msra.mxu0 0.0
  %297 = vmatpush.msra.mxu0 0.0
  %298 = vmatpush.msra.mxu0 0.0
  %299 = vmatpush.msra.mxu0 0.0
  %300 = vmatpush.msra.mxu0 0.0
  %301 = vmatpush.msra.mxu0 0.0
  %302 = vmatpush.msra.mxu0 0.0
  %303 = vmatpush.msra.mxu0 0.0
  %304 = vmatpush.msra.mxu0 0.0
  %305 = vmatpush.msra.mxu0 0.0
  %306 = vmatpush.msra.mxu0 0.0
  %307 = vmatpush.msra.mxu0 %v263
  %308 = vmatpush.msra.mxu0 %v262
  %309 = vmatpush.msra.mxu0 %v261
  %310 = vmatpush.msra.mxu0 %v260
  %311 = vmatmul.f32.gmra.mxu0 %v159
  %v312 = vpop.f32.mrf.mxu0
  %v313 = vadd.f32 0.0, %v312
  %314 = vmatmul.f32.gmra.mxu0 %v162
  %v315 = vpop.f32.mrf.mxu0
  %v316 = vadd.f32 0.0, %v315
  %317 = vdwg.mxu0
  %318 = vmatpush.msra.mxu0 0.0
  %319 = vmatpush.msra.mxu0 0.0
  %320 = vmatpush.msra.mxu0 0.0
  %321 = vmatpush.msra.mxu0 0.0
  %322 = vmatpush.msra.mxu0 0.0
  %323 = vmatpush.msra.mxu0 0.0
  %324 = vmatpush.msra.mxu0 0.0
  %325 = vmatpush.msra.mxu0 0.0
  %326 = vmatpush.msra.mxu0 0.0
  %327 = vmatpush.msra.mxu0 0.0
  %328 = vmatpush.msra.mxu0 0.0
  %329 = vmatpush.msra.mxu0 0.0
  %330 = vmatpush.msra.mxu0 %v267
  %331 = vmatpush.msra.mxu0 %v266
  %332 = vmatpush.msra.mxu0 %v265
  %333 = vmatpush.msra.mxu0 %v264
  %334 = vmatmul.f32.gmra.mxu0 %v159
  %v335 = vpop.f32.mrf.mxu0
  %v336 = vadd.f32 0.0, %v335
  %337 = vmatmul.f32.gmra.mxu0 %v162
  %v338 = vpop.f32.mrf.mxu0
  %v339 = vadd.f32 0.0, %v338
  %340 = vdwg.mxu0
  %341 = vmatpush.msra.mxu0 0.0
  %342 = vmatpush.msra.mxu0 0.0
  %343 = vmatpush.msra.mxu0 0.0
  %344 = vmatpush.msra.mxu0 0.0
  %345 = vmatpush.msra.mxu0 0.0
  %346 = vmatpush.msra.mxu0 0.0
  %347 = vmatpush.msra.mxu0 0.0
  %348 = vmatpush.msra.mxu0 0.0
  %349 = vmatpush.msra.mxu0 0.0
  %350 = vmatpush.msra.mxu0 0.0
  %351 = vmatpush.msra.mxu0 0.0
  %352 = vmatpush.msra.mxu0 0.0
  %353 = vmatpush.msra.mxu0 %v271
  %354 = vmatpush.msra.mxu0 %v270
  %355 = vmatpush.msra.mxu0 %v269
  %356 = vmatpush.msra.mxu0 %v268
  %357 = vmatmul.f32.gmra.mxu0 %v159
  %v358 = vpop.f32.mrf.mxu0
  %v359 = vadd.f32 0.0, %v358
  %360 = vmatmul.f32.gmra.mxu0 %v162
  %v361 = vpop.f32.mrf.mxu0
  %v362 = vadd.f32 0.0, %v361
  %363 = vdwg.mxu0
  %v364 = vld [vmem:[%s7] sm:$0xff]
  %v365 = vld [vmem:[%s7 + $0x8] sm:$0xff]
  %v366 = vld [vmem:[%s7 + $0x10] sm:$0xff]
  %v367 = vld [vmem:[%s7 + $0x18] sm:$0xff]
  %v368 = vld [vmem:[%s7 + $0x20] sm:$0xff]
  %v369 = vld [vmem:[%s7 + $0x28] sm:$0xff]
  %v370 = vld [vmem:[%s7 + $0x30] sm:$0xff]
  %v371 = vld [vmem:[%s7 + $0x38] sm:$0xff]
  %v372 = vld [vmem:[%s7 + $0x40] sm:$0xff]
  %v373 = vld [vmem:[%s7 + $0x48] sm:$0xff]
  %v374 = vld [vmem:[%s7 + $0x50] sm:$0xff]
  %v375 = vld [vmem:[%s7 + $0x58] sm:$0xff]
  %v376 = vld [vmem:[%s7 + $0x60] sm:$0xff]
  %v377 = vld [vmem:[%s7 + $0x68] sm:$0xff]
  %v378 = vld [vmem:[%s7 + $0x70] sm:$0xff]
  %v379 = vld [vmem:[%s7 + $0x78] sm:$0xff]
  %380 = vmatpush.msra.mxu0 0.0
  %381 = vmatpush.msra.mxu0 0.0
  %382 = vmatpush.msra.mxu0 0.0
  %383 = vmatpush.msra.mxu0 0.0
  %384 = vmatpush.msra.mxu0 0.0
  %385 = vmatpush.msra.mxu0 0.0
  %386 = vmatpush.msra.mxu0 0.0
  %387 = vmatpush.msra.mxu0 0.0
  %388 = vmatpush.msra.mxu0 0.0
  %389 = vmatpush.msra.mxu0 0.0
  %390 = vmatpush.msra.mxu0 0.0
  %391 = vmatpush.msra.mxu0 0.0
  %392 = vmatpush.msra.mxu0 %v367
  %393 = vmatpush.msra.mxu0 %v366
  %394 = vmatpush.msra.mxu0 %v365
  %395 = vmatpush.msra.mxu0 %v364
  %396 = vmatmul.f32.gmra.mxu0 %v159
  %v397 = vpop.f32.mrf.mxu0
  %v398 = vadd.f32 0.0, %v397
  %399 = vmatmul.f32.gmra.mxu0 %v162
  %v400 = vpop.f32.mrf.mxu0
  %v401 = vadd.f32 0.0, %v400
  %402 = vdwg.mxu0
  %403 = vmatpush.msra.mxu0 0.0
  %404 = vmatpush.msra.mxu0 0.0
  %405 = vmatpush.msra.mxu0 0.0
  %406 = vmatpush.msra.mxu0 0.0
  %407 = vmatpush.msra.mxu0 0.0
  %408 = vmatpush.msra.mxu0 0.0
  %409 = vmatpush.msra.mxu0 0.0
  %410 = vmatpush.msra.mxu0 0.0
  %411 = vmatpush.msra.mxu0 0.0
  %412 = vmatpush.msra.mxu0 0.0
  %413 = vmatpush.msra.mxu0 0.0
  %414 = vmatpush.msra.mxu0 0.0
  %415 = vmatpush.msra.mxu0 %v371
  %416 = vmatpush.msra.mxu0 %v370
  %417 = vmatpush.msra.mxu0 %v369
  %418 = vmatpush.msra.mxu0 %v368
  %419 = vmatmul.f32.gmra.mxu0 %v159
  %v420 = vpop.f32.mrf.mxu0
  %v421 = vadd.f32 0.0, %v420
  %422 = vmatmul.f32.gmra.mxu0 %v162
  %v423 = vpop.f32.mrf.mxu0
  %v424 = vadd.f32 0.0, %v423
  %425 = vdwg.mxu0
  %426 = vmatpush.msra.mxu0 0.0
  %427 = vmatpush.msra.mxu0 0.0
  %428 = vmatpush.msra.mxu0 0.0
  %429 = vmatpush.msra.mxu0 0.0
  %430 = vmatpush.msra.mxu0 0.0
  %431 = vmatpush.msra.mxu0 0.0
  %432 = vmatpush.msra.mxu0 0.0
  %433 = vmatpush.msra.mxu0 0.0
  %434 = vmatpush.msra.mxu0 0.0
  %435 = vmatpush.msra.mxu0 0.0
  %436 = vmatpush.msra.mxu0 0.0
  %437 = vmatpush.msra.mxu0 0.0
  %438 = vmatpush.msra.mxu0 %v375
  %439 = vmatpush.msra.mxu0 %v374
  %440 = vmatpush.msra.mxu0 %v373
  %441 = vmatpush.msra.mxu0 %v372
  %442 = vmatmul.f32.gmra.mxu0 %v159
  %v443 = vpop.f32.mrf.mxu0
  %v444 = vadd.f32 0.0, %v443
  %445 = vmatmul.f32.gmra.mxu0 %v162
  %v446 = vpop.f32.mrf.mxu0
  %v447 = vadd.f32 0.0, %v446
  %448 = vdwg.mxu0
  %449 = vmatpush.msra.mxu0 0.0
  %450 = vmatpush.msra.mxu0 0.0
  %451 = vmatpush.msra.mxu0 0.0
  %452 = vmatpush.msra.mxu0 0.0
  %453 = vmatpush.msra.mxu0 0.0
  %454 = vmatpush.msra.mxu0 0.0
  %455 = vmatpush.msra.mxu0 0.0
  %456 = vmatpush.msra.mxu0 0.0
  %457 = vmatpush.msra.mxu0 0.0
  %458 = vmatpush.msra.mxu0 0.0
  %459 = vmatpush.msra.mxu0 0.0
  %460 = vmatpush.msra.mxu0 0.0
  %461 = vmatpush.msra.mxu0 %v379
  %462 = vmatpush.msra.mxu0 %v378
  %463 = vmatpush.msra.mxu0 %v377
  %464 = vmatpush.msra.mxu0 %v376
  %465 = vmatmul.f32.gmra.mxu0 %v159
  %v466 = vpop.f32.mrf.mxu0
  %v467 = vadd.f32 0.0, %v466
  %468 = vmatmul.f32.gmra.mxu0 %v162
  %v469 = vpop.f32.mrf.mxu0
  %v470 = vadd.f32 0.0, %v469
  %471 = vdwg.mxu0
  %vm472 = vcmask 64512
  %v474 = vsel %vm472, %v182, 0
  %v477 = vsel %vm472, %v290, 0
  %479 = vmatpush.xpose.msra.mxu0 0.0
  %480 = vmatpush.xpose.msra.mxu0 0.0
  %481 = vmatpush.xpose.msra.mxu0 0.0
  %482 = vmatpush.xpose.msra.mxu0 0.0
  %483 = vmatpush.xpose.msra.mxu0 0.0
  %484 = vmatpush.xpose.msra.mxu0 0.0
  %485 = vmatpush.xpose.msra.mxu0 0.0
  %486 = vmatpush.xpose.msra.mxu0 0.0
  %487 = vmatpush.xpose.msra.mxu0 0.0
  %488 = vmatpush.xpose.msra.mxu0 0.0
  %489 = vmatpush.xpose.msra.mxu0 0.0
  %490 = vmatpush.xpose.msra.mxu0 0.0
  %491 = vmatpush.xpose.msra.mxu0 0.0
  %492 = vmatpush.xpose.msra.mxu0 0.0
  %493 = vmatpush.xpose.msra.mxu0 0.0
  %494 = vmatpush.xpose.msra.mxu0 %v477
  %495 = vmatmul.f32.gmra.mxu0 %v474
  %v496 = vpop.f32.mrf.mxu0
  %v497 = vadd.f32 %v70, %v496
  %498 = vdwg.mxu0
  %v500 = vsel %vm472, %v185, 0
  %v503 = vsel %vm472, %v293, 0
  %505 = vmatpush.xpose.msra.mxu0 0.0
  %506 = vmatpush.xpose.msra.mxu0 0.0
  %507 = vmatpush.xpose.msra.mxu0 0.0
  %508 = vmatpush.xpose.msra.mxu0 0.0
  %509 = vmatpush.xpose.msra.mxu0 0.0
  %510 = vmatpush.xpose.msra.mxu0 0.0
  %511 = vmatpush.xpose.msra.mxu0 0.0
  %512 = vmatpush.xpose.msra.mxu0 0.0
  %513 = vmatpush.xpose.msra.mxu0 0.0
  %514 = vmatpush.xpose.msra.mxu0 0.0
  %515 = vmatpush.xpose.msra.mxu0 0.0
  %516 = vmatpush.xpose.msra.mxu0 0.0
  %517 = vmatpush.xpose.msra.mxu0 0.0
  %518 = vmatpush.xpose.msra.mxu0 0.0
  %519 = vmatpush.xpose.msra.mxu0 0.0
  %520 = vmatpush.xpose.msra.mxu0 %v503
  %521 = vmatmul.f32.gmra.mxu0 %v500
  %v522 = vpop.f32.mrf.mxu0
  %v523 = vadd.f32 %v71, %v522
  %524 = vdwg.mxu0
  %v526 = vsel %vm472, %v205, 0
  %v529 = vsel %vm472, %v313, 0
  %531 = vmatpush.xpose.msra.mxu0 0.0
  %532 = vmatpush.xpose.msra.mxu0 0.0
  %533 = vmatpush.xpose.msra.mxu0 0.0
  %534 = vmatpush.xpose.msra.mxu0 0.0
  %535 = vmatpush.xpose.msra.mxu0 0.0
  %536 = vmatpush.xpose.msra.mxu0 0.0
  %537 = vmatpush.xpose.msra.mxu0 0.0
  %538 = vmatpush.xpose.msra.mxu0 0.0
  %539 = vmatpush.xpose.msra.mxu0 0.0
  %540 = vmatpush.xpose.msra.mxu0 0.0
  %541 = vmatpush.xpose.msra.mxu0 0.0
  %542 = vmatpush.xpose.msra.mxu0 0.0
  %543 = vmatpush.xpose.msra.mxu0 0.0
  %544 = vmatpush.xpose.msra.mxu0 0.0
  %545 = vmatpush.xpose.msra.mxu0 0.0
  %546 = vmatpush.xpose.msra.mxu0 %v529
  %547 = vmatmul.f32.gmra.mxu0 %v526
  %v548 = vpop.f32.mrf.mxu0
  %v549 = vadd.f32 %v72, %v548
  %550 = vdwg.mxu0
  %v552 = vsel %vm472, %v208, 0
  %v555 = vsel %vm472, %v316, 0
  %557 = vmatpush.xpose.msra.mxu0 0.0
  %558 = vmatpush.xpose.msra.mxu0 0.0
  %559 = vmatpush.xpose.msra.mxu0 0.0
  %560 = vmatpush.xpose.msra.mxu0 0.0
  %561 = vmatpush.xpose.msra.mxu0 0.0
  %562 = vmatpush.xpose.msra.mxu0 0.0
  %563 = vmatpush.xpose.msra.mxu0 0.0
  %564 = vmatpush.xpose.msra.mxu0 0.0
  %565 = vmatpush.xpose.msra.mxu0 0.0
  %566 = vmatpush.xpose.msra.mxu0 0.0
  %567 = vmatpush.xpose.msra.mxu0 0.0
  %568 = vmatpush.xpose.msra.mxu0 0.0
  %569 = vmatpush.xpose.msra.mxu0 0.0
  %570 = vmatpush.xpose.msra.mxu0 0.0
  %571 = vmatpush.xpose.msra.mxu0 0.0
  %572 = vmatpush.xpose.msra.mxu0 %v555
  %573 = vmatmul.f32.gmra.mxu0 %v552
  %v574 = vpop.f32.mrf.mxu0
  %v575 = vadd.f32 %v73, %v574
  %576 = vdwg.mxu0
  %v578 = vsel %vm472, %v228, 0
  %v581 = vsel %vm472, %v336, 0
  %583 = vmatpush.xpose.msra.mxu0 0.0
  %584 = vmatpush.xpose.msra.mxu0 0.0
  %585 = vmatpush.xpose.msra.mxu0 0.0
  %586 = vmatpush.xpose.msra.mxu0 0.0
  %587 = vmatpush.xpose.msra.mxu0 0.0
  %588 = vmatpush.xpose.msra.mxu0 0.0
  %589 = vmatpush.xpose.msra.mxu0 0.0
  %590 = vmatpush.xpose.msra.mxu0 0.0
  %591 = vmatpush.xpose.msra.mxu0 0.0
  %592 = vmatpush.xpose.msra.mxu0 0.0
  %593 = vmatpush.xpose.msra.mxu0 0.0
  %594 = vmatpush.xpose.msra.mxu0 0.0
  %595 = vmatpush.xpose.msra.mxu0 0.0
  %596 = vmatpush.xpose.msra.mxu0 0.0
  %597 = vmatpush.xpose.msra.mxu0 0.0
  %598 = vmatpush.xpose.msra.mxu0 %v581
  %599 = vmatmul.f32.gmra.mxu0 %v578
  %v600 = vpop.f32.mrf.mxu0
  %v601 = vadd.f32 %v74, %v600
  %602 = vdwg.mxu0
  %v604 = vsel %vm472, %v231, 0
  %v607 = vsel %vm472, %v339, 0
  %609 = vmatpush.xpose.msra.mxu0 0.0
  %610 = vmatpush.xpose.msra.mxu0 0.0
  %611 = vmatpush.xpose.msra.mxu0 0.0
  %612 = vmatpush.xpose.msra.mxu0 0.0
  %613 = vmatpush.xpose.msra.mxu0 0.0
  %614 = vmatpush.xpose.msra.mxu0 0.0
  %615 = vmatpush.xpose.msra.mxu0 0.0
  %616 = vmatpush.xpose.msra.mxu0 0.0
  %617 = vmatpush.xpose.msra.mxu0 0.0
  %618 = vmatpush.xpose.msra.mxu0 0.0
  %619 = vmatpush.xpose.msra.mxu0 0.0
  %620 = vmatpush.xpose.msra.mxu0 0.0
  %621 = vmatpush.xpose.msra.mxu0 0.0
  %622 = vmatpush.xpose.msra.mxu0 0.0
  %623 = vmatpush.xpose.msra.mxu0 0.0
  %624 = vmatpush.xpose.msra.mxu0 %v607
  %625 = vmatmul.f32.gmra.mxu0 %v604
  %v626 = vpop.f32.mrf.mxu0
  %v627 = vadd.f32 %v75, %v626
  %628 = vdwg.mxu0
  %v630 = vsel %vm472, %v251, 0
  %v633 = vsel %vm472, %v359, 0
  %635 = vmatpush.xpose.msra.mxu0 0.0
  %636 = vmatpush.xpose.msra.mxu0 0.0
  %637 = vmatpush.xpose.msra.mxu0 0.0
  %638 = vmatpush.xpose.msra.mxu0 0.0
  %639 = vmatpush.xpose.msra.mxu0 0.0
  %640 = vmatpush.xpose.msra.mxu0 0.0
  %641 = vmatpush.xpose.msra.mxu0 0.0
  %642 = vmatpush.xpose.msra.mxu0 0.0
  %643 = vmatpush.xpose.msra.mxu0 0.0
  %644 = vmatpush.xpose.msra.mxu0 0.0
  %645 = vmatpush.xpose.msra.mxu0 0.0
  %646 = vmatpush.xpose.msra.mxu0 0.0
  %647 = vmatpush.xpose.msra.mxu0 0.0
  %648 = vmatpush.xpose.msra.mxu0 0.0
  %649 = vmatpush.xpose.msra.mxu0 0.0
  %650 = vmatpush.xpose.msra.mxu0 %v633
  %651 = vmatmul.f32.gmra.mxu0 %v630
  %v652 = vpop.f32.mrf.mxu0
  %v653 = vadd.f32 %v76, %v652
  %654 = vdwg.mxu0
  %v656 = vsel %vm472, %v254, 0
  %v659 = vsel %vm472, %v362, 0
  %661 = vmatpush.xpose.msra.mxu0 0.0
  %662 = vmatpush.xpose.msra.mxu0 0.0
  %663 = vmatpush.xpose.msra.mxu0 0.0
  %664 = vmatpush.xpose.msra.mxu0 0.0
  %665 = vmatpush.xpose.msra.mxu0 0.0
  %666 = vmatpush.xpose.msra.mxu0 0.0
  %667 = vmatpush.xpose.msra.mxu0 0.0
  %668 = vmatpush.xpose.msra.mxu0 0.0
  %669 = vmatpush.xpose.msra.mxu0 0.0
  %670 = vmatpush.xpose.msra.mxu0 0.0
  %671 = vmatpush.xpose.msra.mxu0 0.0
  %672 = vmatpush.xpose.msra.mxu0 0.0
  %673 = vmatpush.xpose.msra.mxu0 0.0
  %674 = vmatpush.xpose.msra.mxu0 0.0
  %675 = vmatpush.xpose.msra.mxu0 0.0
  %676 = vmatpush.xpose.msra.mxu0 %v659
  %677 = vmatmul.f32.gmra.mxu0 %v656
  %v678 = vpop.f32.mrf.mxu0
  %v679 = vadd.f32 %v77, %v678
  %680 = vdwg.mxu0
  %v681 = vsel %vm472, %v497, -inf
  %682 = vmax.xlane.f32.xlu0 %v681
  %v683 = vpop.xlane.xlu0 %682
  %v684 = vsel %vm472, %v523, -inf
  %685 = vmax.xlane.f32.xlu0 %v684
  %v686 = vpop.xlane.xlu0 %685
  %v687 = vsel %vm472, %v549, -inf
  %688 = vmax.xlane.f32.xlu0 %v687
  %v689 = vpop.xlane.xlu0 %688
  %v690 = vsel %vm472, %v575, -inf
  %691 = vmax.xlane.f32.xlu0 %v690
  %v692 = vpop.xlane.xlu0 %691
  %v693 = vsel %vm472, %v601, -inf
  %694 = vmax.xlane.f32.xlu0 %v693
  %v695 = vpop.xlane.xlu0 %694
  %v696 = vsel %vm472, %v627, -inf
  %697 = vmax.xlane.f32.xlu0 %v696
  %v698 = vpop.xlane.xlu0 %697
  %v699 = vsel %vm472, %v653, -inf
  %700 = vmax.xlane.f32.xlu0 %v699
  %v701 = vpop.xlane.xlu0 %700
  %v702 = vsel %vm472, %v679, -inf
  %703 = vmax.xlane.f32.xlu0 %v702
  %v704 = vpop.xlane.xlu0 %703
  %v705 = vsub.f32 %v497, %v683
  %v706 = vsub.f32 %v523, %v686
  %v707 = vsub.f32 %v549, %v689
  %v708 = vsub.f32 %v575, %v692
  %v709 = vsub.f32 %v601, %v695
  %v710 = vsub.f32 %v627, %v698
  %v711 = vsub.f32 %v653, %v701
  %v712 = vsub.f32 %v679, %v704
  %v713 = vmul.f32 %v705, 1.442695
  %v714 = vpow.pop %v713
  %v715 = vmul.f32 %v706, 1.442695
  %v716 = vpow.pop %v715
  %v717 = vmul.f32 %v707, 1.442695
  %v718 = vpow.pop %v717
  %v719 = vmul.f32 %v708, 1.442695
  %v720 = vpow.pop %v719
  %v721 = vmul.f32 %v709, 1.442695
  %v722 = vpow.pop %v721
  %v723 = vmul.f32 %v710, 1.442695
  %v724 = vpow.pop %v723
  %v725 = vmul.f32 %v711, 1.442695
  %v726 = vpow.pop %v725
  %v727 = vmul.f32 %v712, 1.442695
  %v728 = vpow.pop %v727
  %v729 = vsel %vm472, %v714, 0.0
  %730 = vadd.xlane.f32.xlu0 %v729
  %v731 = vpop.xlane.xlu0 %730
  %v732 = vsel %vm472, %v716, 0.0
  %733 = vadd.xlane.f32.xlu0 %v732
  %v734 = vpop.xlane.xlu0 %733
  %v735 = vsel %vm472, %v718, 0.0
  %736 = vadd.xlane.f32.xlu0 %v735
  %v737 = vpop.xlane.xlu0 %736
  %v738 = vsel %vm472, %v720, 0.0
  %739 = vadd.xlane.f32.xlu0 %v738
  %v740 = vpop.xlane.xlu0 %739
  %v741 = vsel %vm472, %v722, 0.0
  %742 = vadd.xlane.f32.xlu0 %v741
  %v743 = vpop.xlane.xlu0 %742
  %v744 = vsel %vm472, %v724, 0.0
  %745 = vadd.xlane.f32.xlu0 %v744
  %v746 = vpop.xlane.xlu0 %745
  %v747 = vsel %vm472, %v726, 0.0
  %748 = vadd.xlane.f32.xlu0 %v747
  %v749 = vpop.xlane.xlu0 %748
  %v750 = vsel %vm472, %v728, 0.0
  %751 = vadd.xlane.f32.xlu0 %v750
  %v752 = vpop.xlane.xlu0 %751
  %v753 = vrcp.pop %v731
  %v754 = vrcp.pop %v734
  %v755 = vrcp.pop %v737
  %v756 = vrcp.pop %v740
  %v757 = vrcp.pop %v743
  %v758 = vrcp.pop %v746
  %v759 = vrcp.pop %v749
  %v760 = vrcp.pop %v752
  %v761 = vmul.f32 %v714, %v753
  %v762 = vmul.f32 %v716, %v754
  %v763 = vmul.f32 %v718, %v755
  %v764 = vmul.f32 %v720, %v756
  %v765 = vmul.f32 %v722, %v757
  %v766 = vmul.f32 %v724, %v758
  %v767 = vmul.f32 %v726, %v759
  %v768 = vmul.f32 %v728, %v760
  %v770 = vsel %vm472, %v761, 0
  %772 = vmatpush.msra.mxu0 0.0
  %773 = vmatpush.msra.mxu0 0.0
  %774 = vmatpush.msra.mxu0 0.0
  %775 = vmatpush.msra.mxu0 0.0
  %776 = vmatpush.msra.mxu0 0.0
  %777 = vmatpush.msra.mxu0 0.0
  %778 = vmatpush.msra.mxu0 0.0
  %779 = vmatpush.msra.mxu0 0.0
  %780 = vmatpush.msra.mxu0 0.0
  %781 = vmatpush.msra.mxu0 0.0
  %782 = vmatpush.msra.mxu0 0.0
  %783 = vmatpush.msra.mxu0 0.0
  %784 = vmatpush.msra.mxu0 0.0
  %785 = vmatpush.msra.mxu0 0.0
  %786 = vmatpush.msra.mxu0 0.0
  %787 = vmatpush.msra.mxu0 %v398
  %788 = vmatmul.f32.gmra.mxu0 %v770
  %v789 = vpop.f32.mrf.mxu0
  %v790 = vadd.f32 0.0, %v789
  %791 = vdwg.mxu0
  %v793 = vsel %vm472, %v762, 0
  %795 = vmatpush.msra.mxu0 0.0
  %796 = vmatpush.msra.mxu0 0.0
  %797 = vmatpush.msra.mxu0 0.0
  %798 = vmatpush.msra.mxu0 0.0
  %799 = vmatpush.msra.mxu0 0.0
  %800 = vmatpush.msra.mxu0 0.0
  %801 = vmatpush.msra.mxu0 0.0
  %802 = vmatpush.msra.mxu0 0.0
  %803 = vmatpush.msra.mxu0 0.0
  %804 = vmatpush.msra.mxu0 0.0
  %805 = vmatpush.msra.mxu0 0.0
  %806 = vmatpush.msra.mxu0 0.0
  %807 = vmatpush.msra.mxu0 0.0
  %808 = vmatpush.msra.mxu0 0.0
  %809 = vmatpush.msra.mxu0 0.0
  %810 = vmatpush.msra.mxu0 %v401
  %811 = vmatmul.f32.gmra.mxu0 %v793
  %v812 = vpop.f32.mrf.mxu0
  %v813 = vadd.f32 0.0, %v812
  %814 = vdwg.mxu0
  %v816 = vsel %vm472, %v763, 0
  %818 = vmatpush.msra.mxu0 0.0
  %819 = vmatpush.msra.mxu0 0.0
  %820 = vmatpush.msra.mxu0 0.0
  %821 = vmatpush.msra.mxu0 0.0
  %822 = vmatpush.msra.mxu0 0.0
  %823 = vmatpush.msra.mxu0 0.0
  %824 = vmatpush.msra.mxu0 0.0
  %825 = vmatpush.msra.mxu0 0.0
  %826 = vmatpush.msra.mxu0 0.0
  %827 = vmatpush.msra.mxu0 0.0
  %828 = vmatpush.msra.mxu0 0.0
  %829 = vmatpush.msra.mxu0 0.0
  %830 = vmatpush.msra.mxu0 0.0
  %831 = vmatpush.msra.mxu0 0.0
  %832 = vmatpush.msra.mxu0 0.0
  %833 = vmatpush.msra.mxu0 %v421
  %834 = vmatmul.f32.gmra.mxu0 %v816
  %v835 = vpop.f32.mrf.mxu0
  %v836 = vadd.f32 0.0, %v835
  %837 = vdwg.mxu0
  %v839 = vsel %vm472, %v764, 0
  %841 = vmatpush.msra.mxu0 0.0
  %842 = vmatpush.msra.mxu0 0.0
  %843 = vmatpush.msra.mxu0 0.0
  %844 = vmatpush.msra.mxu0 0.0
  %845 = vmatpush.msra.mxu0 0.0
  %846 = vmatpush.msra.mxu0 0.0
  %847 = vmatpush.msra.mxu0 0.0
  %848 = vmatpush.msra.mxu0 0.0
  %849 = vmatpush.msra.mxu0 0.0
  %850 = vmatpush.msra.mxu0 0.0
  %851 = vmatpush.msra.mxu0 0.0
  %852 = vmatpush.msra.mxu0 0.0
  %853 = vmatpush.msra.mxu0 0.0
  %854 = vmatpush.msra.mxu0 0.0
  %855 = vmatpush.msra.mxu0 0.0
  %856 = vmatpush.msra.mxu0 %v424
  %857 = vmatmul.f32.gmra.mxu0 %v839
  %v858 = vpop.f32.mrf.mxu0
  %v859 = vadd.f32 0.0, %v858
  %860 = vdwg.mxu0
  %v862 = vsel %vm472, %v765, 0
  %864 = vmatpush.msra.mxu0 0.0
  %865 = vmatpush.msra.mxu0 0.0
  %866 = vmatpush.msra.mxu0 0.0
  %867 = vmatpush.msra.mxu0 0.0
  %868 = vmatpush.msra.mxu0 0.0
  %869 = vmatpush.msra.mxu0 0.0
  %870 = vmatpush.msra.mxu0 0.0
  %871 = vmatpush.msra.mxu0 0.0
  %872 = vmatpush.msra.mxu0 0.0
  %873 = vmatpush.msra.mxu0 0.0
  %874 = vmatpush.msra.mxu0 0.0
  %875 = vmatpush.msra.mxu0 0.0
  %876 = vmatpush.msra.mxu0 0.0
  %877 = vmatpush.msra.mxu0 0.0
  %878 = vmatpush.msra.mxu0 0.0
  %879 = vmatpush.msra.mxu0 %v444
  %880 = vmatmul.f32.gmra.mxu0 %v862
  %v881 = vpop.f32.mrf.mxu0
  %v882 = vadd.f32 0.0, %v881
  %883 = vdwg.mxu0
  %v885 = vsel %vm472, %v766, 0
  %887 = vmatpush.msra.mxu0 0.0
  %888 = vmatpush.msra.mxu0 0.0
  %889 = vmatpush.msra.mxu0 0.0
  %890 = vmatpush.msra.mxu0 0.0
  %891 = vmatpush.msra.mxu0 0.0
  %892 = vmatpush.msra.mxu0 0.0
  %893 = vmatpush.msra.mxu0 0.0
  %894 = vmatpush.msra.mxu0 0.0
  %895 = vmatpush.msra.mxu0 0.0
  %896 = vmatpush.msra.mxu0 0.0
  %897 = vmatpush.msra.mxu0 0.0
  %898 = vmatpush.msra.mxu0 0.0
  %899 = vmatpush.msra.mxu0 0.0
  %900 = vmatpush.msra.mxu0 0.0
  %901 = vmatpush.msra.mxu0 0.0
  %902 = vmatpush.msra.mxu0 %v447
  %903 = vmatmul.f32.gmra.mxu0 %v885
  %v904 = vpop.f32.mrf.mxu0
  %v905 = vadd.f32 0.0, %v904
  %906 = vdwg.mxu0
  %v908 = vsel %vm472, %v767, 0
  %910 = vmatpush.msra.mxu0 0.0
  %911 = vmatpush.msra.mxu0 0.0
  %912 = vmatpush.msra.mxu0 0.0
  %913 = vmatpush.msra.mxu0 0.0
  %914 = vmatpush.msra.mxu0 0.0
  %915 = vmatpush.msra.mxu0 0.0
  %916 = vmatpush.msra.mxu0 0.0
  %917 = vmatpush.msra.mxu0 0.0
  %918 = vmatpush.msra.mxu0 0.0
  %919 = vmatpush.msra.mxu0 0.0
  %920 = vmatpush.msra.mxu0 0.0
  %921 = vmatpush.msra.mxu0 0.0
  %922 = vmatpush.msra.mxu0 0.0
  %923 = vmatpush.msra.mxu0 0.0
  %924 = vmatpush.msra.mxu0 0.0
  %925 = vmatpush.msra.mxu0 %v467
  %926 = vmatmul.f32.gmra.mxu0 %v908
  %v927 = vpop.f32.mrf.mxu0
  %v928 = vadd.f32 0.0, %v927
  %929 = vdwg.mxu0
  %v931 = vsel %vm472, %v768, 0
  %933 = vmatpush.msra.mxu0 0.0
  %934 = vmatpush.msra.mxu0 0.0
  %935 = vmatpush.msra.mxu0 0.0
  %936 = vmatpush.msra.mxu0 0.0
  %937 = vmatpush.msra.mxu0 0.0
  %938 = vmatpush.msra.mxu0 0.0
  %939 = vmatpush.msra.mxu0 0.0
  %940 = vmatpush.msra.mxu0 0.0
  %941 = vmatpush.msra.mxu0 0.0
  %942 = vmatpush.msra.mxu0 0.0
  %943 = vmatpush.msra.mxu0 0.0
  %944 = vmatpush.msra.mxu0 0.0
  %945 = vmatpush.msra.mxu0 0.0
  %946 = vmatpush.msra.mxu0 0.0
  %947 = vmatpush.msra.mxu0 0.0
  %948 = vmatpush.msra.mxu0 %v470
  %949 = vmatmul.f32.gmra.mxu0 %v931
  %v950 = vpop.f32.mrf.mxu0
  %v951 = vadd.f32 0.0, %v950
  %952 = vdwg.mxu0
  %v953 = vld [vmem:[%s8] sm:$0xff]
  %v954 = vld [vmem:[%s8 + $0x8] sm:$0xff]
  %v955 = vld [vmem:[%s8 + $0x10] sm:$0xff]
  %v956 = vld [vmem:[%s8 + $0x18] sm:$0xff]
  %v958 = vsel %vm472, %v790, 0
  %v961 = vsel %vm472, %v813, 0
  %963 = vmatpush.msra.mxu0 0.0
  %964 = vmatpush.msra.mxu0 0.0
  %965 = vmatpush.msra.mxu0 0.0
  %966 = vmatpush.msra.mxu0 0.0
  %967 = vmatpush.msra.mxu0 0.0
  %968 = vmatpush.msra.mxu0 0.0
  %969 = vmatpush.msra.mxu0 0.0
  %970 = vmatpush.msra.mxu0 0.0
  %971 = vmatpush.msra.mxu0 0.0
  %972 = vmatpush.msra.mxu0 0.0
  %973 = vmatpush.msra.mxu0 0.0
  %974 = vmatpush.msra.mxu0 0.0
  %975 = vmatpush.msra.mxu0 0.0
  %976 = vmatpush.msra.mxu0 0.0
  %977 = vmatpush.msra.mxu0 0.0
  %978 = vmatpush.msra.mxu0 %v953
  %979 = vmatmul.f32.gmra.mxu0 %v958
  %v980 = vpop.f32.mrf.mxu0
  %v981 = vadd.f32 0.0, %v980
  %982 = vmatmul.f32.gmra.mxu0 %v961
  %v983 = vpop.f32.mrf.mxu0
  %v984 = vadd.f32 0.0, %v983
  %985 = vdwg.mxu0
  %v987 = vsel %vm472, %v836, 0
  %v990 = vsel %vm472, %v859, 0
  %992 = vmatpush.msra.mxu0 0.0
  %993 = vmatpush.msra.mxu0 0.0
  %994 = vmatpush.msra.mxu0 0.0
  %995 = vmatpush.msra.mxu0 0.0
  %996 = vmatpush.msra.mxu0 0.0
  %997 = vmatpush.msra.mxu0 0.0
  %998 = vmatpush.msra.mxu0 0.0
  %999 = vmatpush.msra.mxu0 0.0
  %1000 = vmatpush.msra.mxu0 0.0
  %1001 = vmatpush.msra.mxu0 0.0
  %1002 = vmatpush.msra.mxu0 0.0
  %1003 = vmatpush.msra.mxu0 0.0
  %1004 = vmatpush.msra.mxu0 0.0
  %1005 = vmatpush.msra.mxu0 0.0
  %1006 = vmatpush.msra.mxu0 0.0
  %1007 = vmatpush.msra.mxu0 %v954
  %1008 = vmatmul.f32.gmra.mxu0 %v987
  %v1009 = vpop.f32.mrf.mxu0
  %v1010 = vadd.f32 0.0, %v1009
  %1011 = vmatmul.f32.gmra.mxu0 %v990
  %v1012 = vpop.f32.mrf.mxu0
  %v1013 = vadd.f32 0.0, %v1012
  %1014 = vdwg.mxu0
  %v1016 = vsel %vm472, %v882, 0
  %v1019 = vsel %vm472, %v905, 0
  %1021 = vmatpush.msra.mxu0 0.0
  %1022 = vmatpush.msra.mxu0 0.0
  %1023 = vmatpush.msra.mxu0 0.0
  %1024 = vmatpush.msra.mxu0 0.0
  %1025 = vmatpush.msra.mxu0 0.0
  %1026 = vmatpush.msra.mxu0 0.0
  %1027 = vmatpush.msra.mxu0 0.0
  %1028 = vmatpush.msra.mxu0 0.0
  %1029 = vmatpush.msra.mxu0 0.0
  %1030 = vmatpush.msra.mxu0 0.0
  %1031 = vmatpush.msra.mxu0 0.0
  %1032 = vmatpush.msra.mxu0 0.0
  %1033 = vmatpush.msra.mxu0 0.0
  %1034 = vmatpush.msra.mxu0 0.0
  %1035 = vmatpush.msra.mxu0 0.0
  %1036 = vmatpush.msra.mxu0 %v955
  %1037 = vmatmul.f32.gmra.mxu0 %v1016
  %v1038 = vpop.f32.mrf.mxu0
  %v1039 = vadd.f32 0.0, %v1038
  %1040 = vmatmul.f32.gmra.mxu0 %v1019
  %v1041 = vpop.f32.mrf.mxu0
  %v1042 = vadd.f32 0.0, %v1041
  %1043 = vdwg.mxu0
  %v1045 = vsel %vm472, %v928, 0
  %v1048 = vsel %vm472, %v951, 0
  %1050 = vmatpush.msra.mxu0 0.0
  %1051 = vmatpush.msra.mxu0 0.0
  %1052 = vmatpush.msra.mxu0 0.0
  %1053 = vmatpush.msra.mxu0 0.0
  %1054 = vmatpush.msra.mxu0 0.0
  %1055 = vmatpush.msra.mxu0 0.0
  %1056 = vmatpush.msra.mxu0 0.0
  %1057 = vmatpush.msra.mxu0 0.0
  %1058 = vmatpush.msra.mxu0 0.0
  %1059 = vmatpush.msra.mxu0 0.0
  %1060 = vmatpush.msra.mxu0 0.0
  %1061 = vmatpush.msra.mxu0 0.0
  %1062 = vmatpush.msra.mxu0 0.0
  %1063 = vmatpush.msra.mxu0 0.0
  %1064 = vmatpush.msra.mxu0 0.0
  %1065 = vmatpush.msra.mxu0 %v956
  %1066 = vmatmul.f32.gmra.mxu0 %v1045
  %v1067 = vpop.f32.mrf.mxu0
  %v1068 = vadd.f32 0.0, %v1067
  %1069 = vmatmul.f32.gmra.mxu0 %v1048
  %v1070 = vpop.f32.mrf.mxu0
  %v1071 = vadd.f32 0.0, %v1070
  %1072 = vdwg.mxu0
  %v1073 = vsel %vm80, %v981, 0.0
  %v1074 = vsel %vm80, %v1010, 0.0
  %v1075 = vadd.f32 %v1073, %v1074
  %v1076 = vsel %vm80, %v1039, 0.0
  %v1077 = vadd.f32 %v1075, %v1076
  %v1078 = vsel %vm80, %v1068, 0.0
  %v1079 = vadd.f32 %v1077, %v1078
  %v1080 = vsel %vm80, %v984, 0.0
  %v1081 = vsel %vm80, %v1013, 0.0
  %v1082 = vadd.f32 %v1080, %v1081
  %v1083 = vsel %vm80, %v1042, 0.0
  %v1084 = vadd.f32 %v1082, %v1083
  %v1085 = vsel %vm80, %v1071, 0.0
  %v1086 = vadd.f32 %v1084, %v1085
  %v1087 = vadd.f32 %v68, %v1079
  %v1088 = vadd.f32 %v69, %v1086
  %v1089 = vld [vmem:[%s9] sm:$0x1]
  %v1091 = vperm.slane %v1089, 0
  %v1093 = vadd.f32 %v1087, %v1091
  %v1094 = vadd.f32 %v1088, %v1091
  %v1095 = vld [vmem:[%s10] sm:$0x1]
  %v1096 = vld [vmem:[%s11] sm:$0x1]
  %v1097 = vsel %vm80, %v1093, 0.0
  %1098 = vadd.xlane.f32.xlu0 %v1097
  %v1099 = vpop.xlane.xlu0 %1098
  %v1100 = vsel %vm80, %v1094, 0.0
  %1101 = vadd.xlane.f32.xlu0 %v1100
  %v1102 = vpop.xlane.xlu0 %1101
  %v1103 = vmul.f32 %v1099, %v93
  %v1104 = vmul.f32 %v1102, %v93
  %v1105 = vsub.f32 %v1093, %v1103
  %v1106 = vsub.f32 %v1094, %v1104
  %v1107 = vmul.f32 %v1105, %v1105
  %v1108 = vmul.f32 %v1106, %v1106
  %v1109 = vsel %vm80, %v1107, 0.0
  %1110 = vadd.xlane.f32.xlu0 %v1109
  %v1111 = vpop.xlane.xlu0 %1110
  %v1112 = vsel %vm80, %v1108, 0.0
  %1113 = vadd.xlane.f32.xlu0 %v1112
  %v1114 = vpop.xlane.xlu0 %1113
  %v1115 = vmul.f32 %v1111, %v93
  %v1116 = vmul.f32 %v1114, %v93
  %v1117 = vadd.f32 %v1115, 1e-05
  %v1118 = vadd.f32 %v1116, 1e-05
  %v1119 = vrsqrt.pop %v1117
  %v1120 = vmul.f32 %v1119, %v1117
  %v1121 = vmul.f32 %v1120, %v1119
  %v1122 = vmul.f32 0.5, %v1121
  %v1123 = vsub.f32 1.5, %v1122
  %v1124 = vmul.f32 %v1119, %v1123
  %vm1125 = vweird.f32 %v1117
  %vm1126 = vweird.f32 %v1119
  %vm1127 = vmor %vm1125, %vm1126
  %v1128 = vsel %vm1127, %v1119, %v1124
  %v1129 = vrsqrt.pop %v1118
  %v1130 = vmul.f32 %v1129, %v1118
  %v1131 = vmul.f32 %v1130, %v1129
  %v1132 = vmul.f32 0.5, %v1131
  %v1133 = vsub.f32 1.5, %v1132
  %v1134 = vmul.f32 %v1129, %v1133
  %vm1135 = vweird.f32 %v1118
  %vm1136 = vweird.f32 %v1129
  %vm1137 = vmor %vm1135, %vm1136
  %v1138 = vsel %vm1137, %v1129, %v1134
  %v1139 = vmul.f32 %v1105, %v1128
  %v1140 = vmul.f32 %v1106, %v1138
  %v1142 = vperm.slane %v1095, 0
  %v1144 = vmul.f32 %v1139, %v1142
  %v1145 = vmul.f32 %v1140, %v1142
  %v1147 = vperm.slane %v1096, 0
  %v1149 = vadd.f32 %v1144, %v1147
  %v1150 = vadd.f32 %v1145, %v1147
  %v1151 = vld [vmem:[%s12] sm:$0xff]
  %v1152 = vld [vmem:[%s12 + $0x8] sm:$0xff]
  %v1153 = vld [vmem:[%s12 + $0x10] sm:$0xff]
  %v1154 = vld [vmem:[%s12 + $0x18] sm:$0xff]
  %v1155 = vld [vmem:[%s13] sm:$0x1]
  %v1157 = vperm.slane %v1155, 0
  %v1160 = vsel %vm80, %v1149, 0
  %v1163 = vsel %vm80, %v1150, 0
  %1165 = vmatpush.msra.mxu0 0.0
  %1166 = vmatpush.msra.mxu0 0.0
  %1167 = vmatpush.msra.mxu0 0.0
  %1168 = vmatpush.msra.mxu0 0.0
  %1169 = vmatpush.msra.mxu0 0.0
  %1170 = vmatpush.msra.mxu0 0.0
  %1171 = vmatpush.msra.mxu0 0.0
  %1172 = vmatpush.msra.mxu0 0.0
  %1173 = vmatpush.msra.mxu0 0.0
  %1174 = vmatpush.msra.mxu0 0.0
  %1175 = vmatpush.msra.mxu0 0.0
  %1176 = vmatpush.msra.mxu0 0.0
  %1177 = vmatpush.msra.mxu0 %v1154
  %1178 = vmatpush.msra.mxu0 %v1153
  %1179 = vmatpush.msra.mxu0 %v1152
  %1180 = vmatpush.msra.mxu0 %v1151
  %1181 = vmatmul.f32.gmra.mxu0 %v1160
  %v1182 = vpop.f32.mrf.mxu0
  %v1183 = vadd.f32 %v1157, %v1182
  %1184 = vmatmul.f32.gmra.mxu0 %v1163
  %v1185 = vpop.f32.mrf.mxu0
  %v1186 = vadd.f32 %v1157, %v1185
  %1187 = vdwg.mxu0
  %v1188 = vmul.f32 %v1183, 0.5
  %v1189 = vmul.f32 %v1186, 0.5
  %v1190 = vmul.f32 %v1183, 0.044715
  %v1191 = vmul.f32 %v1186, 0.044715
  %v1192 = vmul.f32 %v1190, %v1183
  %v1193 = vmul.f32 %v1191, %v1186
  %v1194 = vmul.f32 %v1192, %v1183
  %v1195 = vmul.f32 %v1193, %v1186
  %v1196 = vadd.f32 %v1183, %v1194
  %v1197 = vadd.f32 %v1186, %v1195
  %v1198 = vmul.f32 %v1196, 0.7978846
  %v1199 = vmul.f32 %v1197, 0.7978846
  %v1200 = vtanh.pop %v1198
  %v1201 = vtanh.pop %v1199
  %v1202 = vadd.f32 %v1200, 1.0
  %v1203 = vadd.f32 %v1201, 1.0
  %v1204 = vmul.f32 %v1188, %v1202
  %v1205 = vmul.f32 %v1189, %v1203
  %v1206 = vld [vmem:[%s14] sm:$0xff]
  %v1207 = vld [vmem:[%s14 + $0x8] sm:$0xff]
  %v1208 = vld [vmem:[%s14 + $0x10] sm:$0xff]
  %v1209 = vld [vmem:[%s14 + $0x18] sm:$0xff]
  %v1210 = vld [vmem:[%s14 + $0x20] sm:$0xff]
  %v1211 = vld [vmem:[%s14 + $0x28] sm:$0xff]
  %v1212 = vld [vmem:[%s14 + $0x30] sm:$0xff]
  %v1213 = vld [vmem:[%s14 + $0x38] sm:$0xff]
  %v1214 = vld [vmem:[%s14 + $0x40] sm:$0xff]
  %v1215 = vld [vmem:[%s14 + $0x48] sm:$0xff]
  %v1216 = vld [vmem:[%s14 + $0x50] sm:$0xff]
  %v1217 = vld [vmem:[%s14 + $0x58] sm:$0xff]
  %v1218 = vld [vmem:[%s14 + $0x60] sm:$0xff]
  %v1219 = vld [vmem:[%s14 + $0x68] sm:$0xff]
  %v1220 = vld [vmem:[%s14 + $0x70] sm:$0xff]
  %v1221 = vld [vmem:[%s14 + $0x78] sm:$0xff]
  %v1222 = vld [vmem:[%s15] sm:$0x1]
  %v1224 = vperm.slane %v1222, 0
  %1226 = vmatpush.msra.mxu0 %v1221
  %1227 = vmatpush.msra.mxu0 %v1220
  %1228 = vmatpush.msra.mxu0 %v1219
  %1229 = vmatpush.msra.mxu0 %v1218
  %1230 = vmatpush.msra.mxu0 %v1217
  %1231 = vmatpush.msra.mxu0 %v1216
  %1232 = vmatpush.msra.mxu0 %v1215
  %1233 = vmatpush.msra.mxu0 %v1214
  %1234 = vmatpush.msra.mxu0 %v1213
  %1235 = vmatpush.msra.mxu0 %v1212
  %1236 = vmatpush.msra.mxu0 %v1211
  %1237 = vmatpush.msra.mxu0 %v1210
  %1238 = vmatpush.msra.mxu0 %v1209
  %1239 = vmatpush.msra.mxu0 %v1208
  %1240 = vmatpush.msra.mxu0 %v1207
  %1241 = vmatpush.msra.mxu0 %v1206
  %1242 = vmatmul.f32.gmra.mxu0 %v1204
  %v1243 = vpop.f32.mrf.mxu0
  %v1244 = vadd.f32 %v1224, %v1243
  %1245 = vmatmul.f32.gmra.mxu0 %v1205
  %v1246 = vpop.f32.mrf.mxu0
  %v1247 = vadd.f32 %v1224, %v1246
  %1248 = vdwg.mxu0
  %v1249 = vadd.f32 %v1093, %v1244
  %v1250 = vadd.f32 %v1094, %v1247
  %s1251 = scalar_lea.vmem %s3, 1
  %v1252 = vld [vmem:[%s1251] sm:$0x1]
  %s1253 = scalar_lea.vmem %s4, 1
  %v1254 = vld [vmem:[%s1253] sm:$0x1]
  %v1255 = vsel %vm80, %v1249, 0.0
  %1256 = vadd.xlane.f32.xlu0 %v1255
  %v1257 = vpop.xlane.xlu0 %1256
  %v1258 = vsel %vm80, %v1250, 0.0
  %1259 = vadd.xlane.f32.xlu0 %v1258
  %v1260 = vpop.xlane.xlu0 %1259
  %v1261 = vmul.f32 %v1257, %v93
  %v1262 = vmul.f32 %v1260, %v93
  %v1263 = vsub.f32 %v1249, %v1261
  %v1264 = vsub.f32 %v1250, %v1262
  %v1265 = vmul.f32 %v1263, %v1263
  %v1266 = vmul.f32 %v1264, %v1264
  %v1267 = vsel %vm80, %v1265, 0.0
  %1268 = vadd.xlane.f32.xlu0 %v1267
  %v1269 = vpop.xlane.xlu0 %1268
  %v1270 = vsel %vm80, %v1266, 0.0
  %1271 = vadd.xlane.f32.xlu0 %v1270
  %v1272 = vpop.xlane.xlu0 %1271
  %v1273 = vmul.f32 %v1269, %v93
  %v1274 = vmul.f32 %v1272, %v93
  %v1275 = vadd.f32 %v1273, 1e-05
  %v1276 = vadd.f32 %v1274, 1e-05
  %v1277 = vrsqrt.pop %v1275
  %v1278 = vmul.f32 %v1277, %v1275
  %v1279 = vmul.f32 %v1278, %v1277
  %v1280 = vmul.f32 0.5, %v1279
  %v1281 = vsub.f32 1.5, %v1280
  %v1282 = vmul.f32 %v1277, %v1281
  %vm1283 = vweird.f32 %v1275
  %vm1284 = vweird.f32 %v1277
  %vm1285 = vmor %vm1283, %vm1284
  %v1286 = vsel %vm1285, %v1277, %v1282
  %v1287 = vrsqrt.pop %v1276
  %v1288 = vmul.f32 %v1287, %v1276
  %v1289 = vmul.f32 %v1288, %v1287
  %v1290 = vmul.f32 0.5, %v1289
  %v1291 = vsub.f32 1.5, %v1290
  %v1292 = vmul.f32 %v1287, %v1291
  %vm1293 = vweird.f32 %v1276
  %vm1294 = vweird.f32 %v1287
  %vm1295 = vmor %vm1293, %vm1294
  %v1296 = vsel %vm1295, %v1287, %v1292
  %v1297 = vmul.f32 %v1263, %v1286
  %v1298 = vmul.f32 %v1264, %v1296
  %v1300 = vperm.slane %v1252, 0
  %v1302 = vmul.f32 %v1297, %v1300
  %v1303 = vmul.f32 %v1298, %v1300
  %v1305 = vperm.slane %v1254, 0
  %v1307 = vadd.f32 %v1302, %v1305
  %v1308 = vadd.f32 %v1303, %v1305
  %s1309 = scalar_lea.vmem %s5, 128
  %v1310 = vld [vmem:[%s1309] sm:$0xff]
  %v1311 = vld [vmem:[%s1309 + $0x8] sm:$0xff]
  %v1312 = vld [vmem:[%s1309 + $0x10] sm:$0xff]
  %v1313 = vld [vmem:[%s1309 + $0x18] sm:$0xff]
  %v1314 = vld [vmem:[%s1309 + $0x20] sm:$0xff]
  %v1315 = vld [vmem:[%s1309 + $0x28] sm:$0xff]
  %v1316 = vld [vmem:[%s1309 + $0x30] sm:$0xff]
  %v1317 = vld [vmem:[%s1309 + $0x38] sm:$0xff]
  %v1318 = vld [vmem:[%s1309 + $0x40] sm:$0xff]
  %v1319 = vld [vmem:[%s1309 + $0x48] sm:$0xff]
  %v1320 = vld [vmem:[%s1309 + $0x50] sm:$0xff]
  %v1321 = vld [vmem:[%s1309 + $0x58] sm:$0xff]
  %v1322 = vld [vmem:[%s1309 + $0x60] sm:$0xff]
  %v1323 = vld [vmem:[%s1309 + $0x68] sm:$0xff]
  %v1324 = vld [vmem:[%s1309 + $0x70] sm:$0xff]
  %v1325 = vld [vmem:[%s1309 + $0x78] sm:$0xff]
  %v1327 = vsel %vm80, %v1307, 0
  %v1330 = vsel %vm80, %v1308, 0
  %1332 = vmatpush.msra.mxu0 0.0
  %1333 = vmatpush.msra.mxu0 0.0
  %1334 = vmatpush.msra.mxu0 0.0
  %1335 = vmatpush.msra.mxu0 0.0
  %1336 = vmatpush.msra.mxu0 0.0
  %1337 = vmatpush.msra.mxu0 0.0
  %1338 = vmatpush.msra.mxu0 0.0
  %1339 = vmatpush.msra.mxu0 0.0
  %1340 = vmatpush.msra.mxu0 0.0
  %1341 = vmatpush.msra.mxu0 0.0
  %1342 = vmatpush.msra.mxu0 0.0
  %1343 = vmatpush.msra.mxu0 0.0
  %1344 = vmatpush.msra.mxu0 %v1313
  %1345 = vmatpush.msra.mxu0 %v1312
  %1346 = vmatpush.msra.mxu0 %v1311
  %1347 = vmatpush.msra.mxu0 %v1310
  %1348 = vmatmul.f32.gmra.mxu0 %v1327
  %v1349 = vpop.f32.mrf.mxu0
  %v1350 = vadd.f32 0.0, %v1349
  %1351 = vmatmul.f32.gmra.mxu0 %v1330
  %v1352 = vpop.f32.mrf.mxu0
  %v1353 = vadd.f32 0.0, %v1352
  %1354 = vdwg.mxu0
  %1355 = vmatpush.msra.mxu0 0.0
  %1356 = vmatpush.msra.mxu0 0.0
  %1357 = vmatpush.msra.mxu0 0.0
  %1358 = vmatpush.msra.mxu0 0.0
  %1359 = vmatpush.msra.mxu0 0.0
  %1360 = vmatpush.msra.mxu0 0.0
  %1361 = vmatpush.msra.mxu0 0.0
  %1362 = vmatpush.msra.mxu0 0.0
  %1363 = vmatpush.msra.mxu0 0.0
  %1364 = vmatpush.msra.mxu0 0.0
  %1365 = vmatpush.msra.mxu0 0.0
  %1366 = vmatpush.msra.mxu0 0.0
  %1367 = vmatpush.msra.mxu0 %v1317
  %1368 = vmatpush.msra.mxu0 %v1316
  %1369 = vmatpush.msra.mxu0 %v1315
  %1370 = vmatpush.msra.mxu0 %v1314
  %1371 = vmatmul.f32.gmra.mxu0 %v1327
  %v1372 = vpop.f32.mrf.mxu0
  %v1373 = vadd.f32 0.0, %v1372
  %1374 = vmatmul.f32.gmra.mxu0 %v1330
  %v1375 = vpop.f32.mrf.mxu0
  %v1376 = vadd.f32 0.0, %v1375
  %1377 = vdwg.mxu0
  %1378 = vmatpush.msra.mxu0 0.0
  %1379 = vmatpush.msra.mxu0 0.0
  %1380 = vmatpush.msra.mxu0 0.0
  %1381 = vmatpush.msra.mxu0 0.0
  %1382 = vmatpush.msra.mxu0 0.0
  %1383 = vmatpush.msra.mxu0 0.0
  %1384 = vmatpush.msra.mxu0 0.0
  %1385 = vmatpush.msra.mxu0 0.0
  %1386 = vmatpush.msra.mxu0 0.0
  %1387 = vmatpush.msra.mxu0 0.0
  %1388 = vmatpush.msra.mxu0 0.0
  %1389 = vmatpush.msra.mxu0 0.0
  %1390 = vmatpush.msra.mxu0 %v1321
  %1391 = vmatpush.msra.mxu0 %v1320
  %1392 = vmatpush.msra.mxu0 %v1319
  %1393 = vmatpush.msra.mxu0 %v1318
  %1394 = vmatmul.f32.gmra.mxu0 %v1327
  %v1395 = vpop.f32.mrf.mxu0
  %v1396 = vadd.f32 0.0, %v1395
  %1397 = vmatmul.f32.gmra.mxu0 %v1330
  %v1398 = vpop.f32.mrf.mxu0
  %v1399 = vadd.f32 0.0, %v1398
  %1400 = vdwg.mxu0
  %1401 = vmatpush.msra.mxu0 0.0
  %1402 = vmatpush.msra.mxu0 0.0
  %1403 = vmatpush.msra.mxu0 0.0
  %1404 = vmatpush.msra.mxu0 0.0
  %1405 = vmatpush.msra.mxu0 0.0
  %1406 = vmatpush.msra.mxu0 0.0
  %1407 = vmatpush.msra.mxu0 0.0
  %1408 = vmatpush.msra.mxu0 0.0
  %1409 = vmatpush.msra.mxu0 0.0
  %1410 = vmatpush.msra.mxu0 0.0
  %1411 = vmatpush.msra.mxu0 0.0
  %1412 = vmatpush.msra.mxu0 0.0
  %1413 = vmatpush.msra.mxu0 %v1325
  %1414 = vmatpush.msra.mxu0 %v1324
  %1415 = vmatpush.msra.mxu0 %v1323
  %1416 = vmatpush.msra.mxu0 %v1322
  %1417 = vmatmul.f32.gmra.mxu0 %v1327
  %v1418 = vpop.f32.mrf.mxu0
  %v1419 = vadd.f32 0.0, %v1418
  %1420 = vmatmul.f32.gmra.mxu0 %v1330
  %v1421 = vpop.f32.mrf.mxu0
  %v1422 = vadd.f32 0.0, %v1421
  %1423 = vdwg.mxu0
  %s1424 = scalar_lea.vmem %s6, 128
  %v1425 = vld [vmem:[%s1424] sm:$0xff]
  %v1426 = vld [vmem:[%s1424 + $0x8] sm:$0xff]
  %v1427 = vld [vmem:[%s1424 + $0x10] sm:$0xff]
  %v1428 = vld [vmem:[%s1424 + $0x18] sm:$0xff]
  %v1429 = vld [vmem:[%s1424 + $0x20] sm:$0xff]
  %v1430 = vld [vmem:[%s1424 + $0x28] sm:$0xff]
  %v1431 = vld [vmem:[%s1424 + $0x30] sm:$0xff]
  %v1432 = vld [vmem:[%s1424 + $0x38] sm:$0xff]
  %v1433 = vld [vmem:[%s1424 + $0x40] sm:$0xff]
  %v1434 = vld [vmem:[%s1424 + $0x48] sm:$0xff]
  %v1435 = vld [vmem:[%s1424 + $0x50] sm:$0xff]
  %v1436 = vld [vmem:[%s1424 + $0x58] sm:$0xff]
  %v1437 = vld [vmem:[%s1424 + $0x60] sm:$0xff]
  %v1438 = vld [vmem:[%s1424 + $0x68] sm:$0xff]
  %v1439 = vld [vmem:[%s1424 + $0x70] sm:$0xff]
  %v1440 = vld [vmem:[%s1424 + $0x78] sm:$0xff]
  %1441 = vmatpush.msra.mxu0 0.0
  %1442 = vmatpush.msra.mxu0 0.0
  %1443 = vmatpush.msra.mxu0 0.0
  %1444 = vmatpush.msra.mxu0 0.0
  %1445 = vmatpush.msra.mxu0 0.0
  %1446 = vmatpush.msra.mxu0 0.0
  %1447 = vmatpush.msra.mxu0 0.0
  %1448 = vmatpush.msra.mxu0 0.0
  %1449 = vmatpush.msra.mxu0 0.0
  %1450 = vmatpush.msra.mxu0 0.0
  %1451 = vmatpush.msra.mxu0 0.0
  %1452 = vmatpush.msra.mxu0 0.0
  %1453 = vmatpush.msra.mxu0 %v1428
  %1454 = vmatpush.msra.mxu0 %v1427
  %1455 = vmatpush.msra.mxu0 %v1426
  %1456 = vmatpush.msra.mxu0 %v1425
  %1457 = vmatmul.f32.gmra.mxu0 %v1327
  %v1458 = vpop.f32.mrf.mxu0
  %v1459 = vadd.f32 0.0, %v1458
  %1460 = vmatmul.f32.gmra.mxu0 %v1330
  %v1461 = vpop.f32.mrf.mxu0
  %v1462 = vadd.f32 0.0, %v1461
  %1463 = vdwg.mxu0
  %1464 = vmatpush.msra.mxu0 0.0
  %1465 = vmatpush.msra.mxu0 0.0
  %1466 = vmatpush.msra.mxu0 0.0
  %1467 = vmatpush.msra.mxu0 0.0
  %1468 = vmatpush.msra.mxu0 0.0
  %1469 = vmatpush.msra.mxu0 0.0
  %1470 = vmatpush.msra.mxu0 0.0
  %1471 = vmatpush.msra.mxu0 0.0
  %1472 = vmatpush.msra.mxu0 0.0
  %1473 = vmatpush.msra.mxu0 0.0
  %1474 = vmatpush.msra.mxu0 0.0
  %1475 = vmatpush.msra.mxu0 0.0
  %1476 = vmatpush.msra.mxu0 %v1432
  %1477 = vmatpush.msra.mxu0 %v1431
  %1478 = vmatpush.msra.mxu0 %v1430
  %1479 = vmatpush.msra.mxu0 %v1429
  %1480 = vmatmul.f32.gmra.mxu0 %v1327
  %v1481 = vpop.f32.mrf.mxu0
  %v1482 = vadd.f32 0.0, %v1481
  %1483 = vmatmul.f32.gmra.mxu0 %v1330
  %v1484 = vpop.f32.mrf.mxu0
  %v1485 = vadd.f32 0.0, %v1484
  %1486 = vdwg.mxu0
  %1487 = vmatpush.msra.mxu0 0.0
  %1488 = vmatpush.msra.mxu0 0.0
  %1489 = vmatpush.msra.mxu0 0.0
  %1490 = vmatpush.msra.mxu0 0.0
  %1491 = vmatpush.msra.mxu0 0.0
  %1492 = vmatpush.msra.mxu0 0.0
  %1493 = vmatpush.msra.mxu0 0.0
  %1494 = vmatpush.msra.mxu0 0.0
  %1495 = vmatpush.msra.mxu0 0.0
  %1496 = vmatpush.msra.mxu0 0.0
  %1497 = vmatpush.msra.mxu0 0.0
  %1498 = vmatpush.msra.mxu0 0.0
  %1499 = vmatpush.msra.mxu0 %v1436
  %1500 = vmatpush.msra.mxu0 %v1435
  %1501 = vmatpush.msra.mxu0 %v1434
  %1502 = vmatpush.msra.mxu0 %v1433
  %1503 = vmatmul.f32.gmra.mxu0 %v1327
  %v1504 = vpop.f32.mrf.mxu0
  %v1505 = vadd.f32 0.0, %v1504
  %1506 = vmatmul.f32.gmra.mxu0 %v1330
  %v1507 = vpop.f32.mrf.mxu0
  %v1508 = vadd.f32 0.0, %v1507
  %1509 = vdwg.mxu0
  %1510 = vmatpush.msra.mxu0 0.0
  %1511 = vmatpush.msra.mxu0 0.0
  %1512 = vmatpush.msra.mxu0 0.0
  %1513 = vmatpush.msra.mxu0 0.0
  %1514 = vmatpush.msra.mxu0 0.0
  %1515 = vmatpush.msra.mxu0 0.0
  %1516 = vmatpush.msra.mxu0 0.0
  %1517 = vmatpush.msra.mxu0 0.0
  %1518 = vmatpush.msra.mxu0 0.0
  %1519 = vmatpush.msra.mxu0 0.0
  %1520 = vmatpush.msra.mxu0 0.0
  %1521 = vmatpush.msra.mxu0 0.0
  %1522 = vmatpush.msra.mxu0 %v1440
  %1523 = vmatpush.msra.mxu0 %v1439
  %1524 = vmatpush.msra.mxu0 %v1438
  %1525 = vmatpush.msra.mxu0 %v1437
  %1526 = vmatmul.f32.gmra.mxu0 %v1327
  %v1527 = vpop.f32.mrf.mxu0
  %v1528 = vadd.f32 0.0, %v1527
  %1529 = vmatmul.f32.gmra.mxu0 %v1330
  %v1530 = vpop.f32.mrf.mxu0
  %v1531 = vadd.f32 0.0, %v1530
  %1532 = vdwg.mxu0
  %s1533 = scalar_lea.vmem %s7, 128
  %v1534 = vld [vmem:[%s1533] sm:$0xff]
  %v1535 = vld [vmem:[%s1533 + $0x8] sm:$0xff]
  %v1536 = vld [vmem:[%s1533 + $0x10] sm:$0xff]
  %v1537 = vld [vmem:[%s1533 + $0x18] sm:$0xff]
  %v1538 = vld [vmem:[%s1533 + $0x20] sm:$0xff]
  %v1539 = vld [vmem:[%s1533 + $0x28] sm:$0xff]
  %v1540 = vld [vmem:[%s1533 + $0x30] sm:$0xff]
  %v1541 = vld [vmem:[%s1533 + $0x38] sm:$0xff]
  %v1542 = vld [vmem:[%s1533 + $0x40] sm:$0xff]
  %v1543 = vld [vmem:[%s1533 + $0x48] sm:$0xff]
  %v1544 = vld [vmem:[%s1533 + $0x50] sm:$0xff]
  %v1545 = vld [vmem:[%s1533 + $0x58] sm:$0xff]
  %v1546 = vld [vmem:[%s1533 + $0x60] sm:$0xff]
  %v1547 = vld [vmem:[%s1533 + $0x68] sm:$0xff]
  %v1548 = vld [vmem:[%s1533 + $0x70] sm:$0xff]
  %v1549 = vld [vmem:[%s1533 + $0x78] sm:$0xff]
  %1550 = vmatpush.msra.mxu0 0.0
  %1551 = vmatpush.msra.mxu0 0.0
  %1552 = vmatpush.msra.mxu0 0.0
  %1553 = vmatpush.msra.mxu0 0.0
  %1554 = vmatpush.msra.mxu0 0.0
  %1555 = vmatpush.msra.mxu0 0.0
  %1556 = vmatpush.msra.mxu0 0.0
  %1557 = vmatpush.msra.mxu0 0.0
  %1558 = vmatpush.msra.mxu0 0.0
  %1559 = vmatpush.msra.mxu0 0.0
  %1560 = vmatpush.msra.mxu0 0.0
  %1561 = vmatpush.msra.mxu0 0.0
  %1562 = vmatpush.msra.mxu0 %v1537
  %1563 = vmatpush.msra.mxu0 %v1536
  %1564 = vmatpush.msra.mxu0 %v1535
  %1565 = vmatpush.msra.mxu0 %v1534
  %1566 = vmatmul.f32.gmra.mxu0 %v1327
  %v1567 = vpop.f32.mrf.mxu0
  %v1568 = vadd.f32 0.0, %v1567
  %1569 = vmatmul.f32.gmra.mxu0 %v1330
  %v1570 = vpop.f32.mrf.mxu0
  %v1571 = vadd.f32 0.0, %v1570
  %1572 = vdwg.mxu0
  %1573 = vmatpush.msra.mxu0 0.0
  %1574 = vmatpush.msra.mxu0 0.0
  %1575 = vmatpush.msra.mxu0 0.0
  %1576 = vmatpush.msra.mxu0 0.0
  %1577 = vmatpush.msra.mxu0 0.0
  %1578 = vmatpush.msra.mxu0 0.0
  %1579 = vmatpush.msra.mxu0 0.0
  %1580 = vmatpush.msra.mxu0 0.0
  %1581 = vmatpush.msra.mxu0 0.0
  %1582 = vmatpush.msra.mxu0 0.0
  %1583 = vmatpush.msra.mxu0 0.0
  %1584 = vmatpush.msra.mxu0 0.0
  %1585 = vmatpush.msra.mxu0 %v1541
  %1586 = vmatpush.msra.mxu0 %v1540
  %1587 = vmatpush.msra.mxu0 %v1539
  %1588 = vmatpush.msra.mxu0 %v1538
  %1589 = vmatmul.f32.gmra.mxu0 %v1327
  %v1590 = vpop.f32.mrf.mxu0
  %v1591 = vadd.f32 0.0, %v1590
  %1592 = vmatmul.f32.gmra.mxu0 %v1330
  %v1593 = vpop.f32.mrf.mxu0
  %v1594 = vadd.f32 0.0, %v1593
  %1595 = vdwg.mxu0
  %1596 = vmatpush.msra.mxu0 0.0
  %1597 = vmatpush.msra.mxu0 0.0
  %1598 = vmatpush.msra.mxu0 0.0
  %1599 = vmatpush.msra.mxu0 0.0
  %1600 = vmatpush.msra.mxu0 0.0
  %1601 = vmatpush.msra.mxu0 0.0
  %1602 = vmatpush.msra.mxu0 0.0
  %1603 = vmatpush.msra.mxu0 0.0
  %1604 = vmatpush.msra.mxu0 0.0
  %1605 = vmatpush.msra.mxu0 0.0
  %1606 = vmatpush.msra.mxu0 0.0
  %1607 = vmatpush.msra.mxu0 0.0
  %1608 = vmatpush.msra.mxu0 %v1545
  %1609 = vmatpush.msra.mxu0 %v1544
  %1610 = vmatpush.msra.mxu0 %v1543
  %1611 = vmatpush.msra.mxu0 %v1542
  %1612 = vmatmul.f32.gmra.mxu0 %v1327
  %v1613 = vpop.f32.mrf.mxu0
  %v1614 = vadd.f32 0.0, %v1613
  %1615 = vmatmul.f32.gmra.mxu0 %v1330
  %v1616 = vpop.f32.mrf.mxu0
  %v1617 = vadd.f32 0.0, %v1616
  %1618 = vdwg.mxu0
  %1619 = vmatpush.msra.mxu0 0.0
  %1620 = vmatpush.msra.mxu0 0.0
  %1621 = vmatpush.msra.mxu0 0.0
  %1622 = vmatpush.msra.mxu0 0.0
  %1623 = vmatpush.msra.mxu0 0.0
  %1624 = vmatpush.msra.mxu0 0.0
  %1625 = vmatpush.msra.mxu0 0.0
  %1626 = vmatpush.msra.mxu0 0.0
  %1627 = vmatpush.msra.mxu0 0.0
  %1628 = vmatpush.msra.mxu0 0.0
  %1629 = vmatpush.msra.mxu0 0.0
  %1630 = vmatpush.msra.mxu0 0.0
  %1631 = vmatpush.msra.mxu0 %v1549
  %1632 = vmatpush.msra.mxu0 %v1548
  %1633 = vmatpush.msra.mxu0 %v1547
  %1634 = vmatpush.msra.mxu0 %v1546
  %1635 = vmatmul.f32.gmra.mxu0 %v1327
  %v1636 = vpop.f32.mrf.mxu0
  %v1637 = vadd.f32 0.0, %v1636
  %1638 = vmatmul.f32.gmra.mxu0 %v1330
  %v1639 = vpop.f32.mrf.mxu0
  %v1640 = vadd.f32 0.0, %v1639
  %1641 = vdwg.mxu0
  %v1643 = vsel %vm472, %v1350, 0
  %v1646 = vsel %vm472, %v1459, 0
  %1648 = vmatpush.xpose.msra.mxu0 0.0
  %1649 = vmatpush.xpose.msra.mxu0 0.0
  %1650 = vmatpush.xpose.msra.mxu0 0.0
  %1651 = vmatpush.xpose.msra.mxu0 0.0
  %1652 = vmatpush.xpose.msra.mxu0 0.0
  %1653 = vmatpush.xpose.msra.mxu0 0.0
  %1654 = vmatpush.xpose.msra.mxu0 0.0
  %1655 = vmatpush.xpose.msra.mxu0 0.0
  %1656 = vmatpush.xpose.msra.mxu0 0.0
  %1657 = vmatpush.xpose.msra.mxu0 0.0
  %1658 = vmatpush.xpose.msra.mxu0 0.0
  %1659 = vmatpush.xpose.msra.mxu0 0.0
  %1660 = vmatpush.xpose.msra.mxu0 0.0
  %1661 = vmatpush.xpose.msra.mxu0 0.0
  %1662 = vmatpush.xpose.msra.mxu0 0.0
  %1663 = vmatpush.xpose.msra.mxu0 %v1646
  %1664 = vmatmul.f32.gmra.mxu0 %v1643
  %v1665 = vpop.f32.mrf.mxu0
  %v1666 = vadd.f32 %v70, %v1665
  %1667 = vdwg.mxu0
  %v1669 = vsel %vm472, %v1353, 0
  %v1672 = vsel %vm472, %v1462, 0
  %1674 = vmatpush.xpose.msra.mxu0 0.0
  %1675 = vmatpush.xpose.msra.mxu0 0.0
  %1676 = vmatpush.xpose.msra.mxu0 0.0
  %1677 = vmatpush.xpose.msra.mxu0 0.0
  %1678 = vmatpush.xpose.msra.mxu0 0.0
  %1679 = vmatpush.xpose.msra.mxu0 0.0
  %1680 = vmatpush.xpose.msra.mxu0 0.0
  %1681 = vmatpush.xpose.msra.mxu0 0.0
  %1682 = vmatpush.xpose.msra.mxu0 0.0
  %1683 = vmatpush.xpose.msra.mxu0 0.0
  %1684 = vmatpush.xpose.msra.mxu0 0.0
  %1685 = vmatpush.xpose.msra.mxu0 0.0
  %1686 = vmatpush.xpose.msra.mxu0 0.0
  %1687 = vmatpush.xpose.msra.mxu0 0.0
  %1688 = vmatpush.xpose.msra.mxu0 0.0
  %1689 = vmatpush.xpose.msra.mxu0 %v1672
  %1690 = vmatmul.f32.gmra.mxu0 %v1669
  %v1691 = vpop.f32.mrf.mxu0
  %v1692 = vadd.f32 %v71, %v1691
  %1693 = vdwg.mxu0
  %v1695 = vsel %vm472, %v1373, 0
  %v1698 = vsel %vm472, %v1482, 0
  %1700 = vmatpush.xpose.msra.mxu0 0.0
  %1701 = vmatpush.xpose.msra.mxu0 0.0
  %1702 = vmatpush.xpose.msra.mxu0 0.0
  %1703 = vmatpush.xpose.msra.mxu0 0.0
  %1704 = vmatpush.xpose.msra.mxu0 0.0
  %1705 = vmatpush.xpose.msra.mxu0 0.0
  %1706 = vmatpush.xpose.msra.mxu0 0.0
  %1707 = vmatpush.xpose.msra.mxu0 0.0
  %1708 = vmatpush.xpose.msra.mxu0 0.0
  %1709 = vmatpush.xpose.msra.mxu0 0.0
  %1710 = vmatpush.xpose.msra.mxu0 0.0
  %1711 = vmatpush.xpose.msra.mxu0 0.0
  %1712 = vmatpush.xpose.msra.mxu0 0.0
  %1713 = vmatpush.xpose.msra.mxu0 0.0
  %1714 = vmatpush.xpose.msra.mxu0 0.0
  %1715 = vmatpush.xpose.msra.mxu0 %v1698
  %1716 = vmatmul.f32.gmra.mxu0 %v1695
  %v1717 = vpop.f32.mrf.mxu0
  %v1718 = vadd.f32 %v72, %v1717
  %1719 = vdwg.mxu0
  %v1721 = vsel %vm472, %v1376, 0
  %v1724 = vsel %vm472, %v1485, 0
  %1726 = vmatpush.xpose.msra.mxu0 0.0
  %1727 = vmatpush.xpose.msra.mxu0 0.0
  %1728 = vmatpush.xpose.msra.mxu0 0.0
  %1729 = vmatpush.xpose.msra.mxu0 0.0
  %1730 = vmatpush.xpose.msra.mxu0 0.0
  %1731 = vmatpush.xpose.msra.mxu0 0.0
  %1732 = vmatpush.xpose.msra.mxu0 0.0
  %1733 = vmatpush.xpose.msra.mxu0 0.0
  %1734 = vmatpush.xpose.msra.mxu0 0.0
  %1735 = vmatpush.xpose.msra.mxu0 0.0
  %1736 = vmatpush.xpose.msra.mxu0 0.0
  %1737 = vmatpush.xpose.msra.mxu0 0.0
  %1738 = vmatpush.xpose.msra.mxu0 0.0
  %1739 = vmatpush.xpose.msra.mxu0 0.0
  %1740 = vmatpush.xpose.msra.mxu0 0.0
  %1741 = vmatpush.xpose.msra.mxu0 %v1724
  %1742 = vmatmul.f32.gmra.mxu0 %v1721
  %v1743 = vpop.f32.mrf.mxu0
  %v1744 = vadd.f32 %v73, %v1743
  %1745 = vdwg.mxu0
  %v1747 = vsel %vm472, %v1396, 0
  %v1750 = vsel %vm472, %v1505, 0
  %1752 = vmatpush.xpose.msra.mxu0 0.0
  %1753 = vmatpush.xpose.msra.mxu0 0.0
  %1754 = vmatpush.xpose.msra.mxu0 0.0
  %1755 = vmatpush.xpose.msra.mxu0 0.0
  %1756 = vmatpush.xpose.msra.mxu0 0.0
  %1757 = vmatpush.xpose.msra.mxu0 0.0
  %1758 = vmatpush.xpose.msra.mxu0 0.0
  %1759 = vmatpush.xpose.msra.mxu0 0.0
  %1760 = vmatpush.xpose.msra.mxu0 0.0
  %1761 = vmatpush.xpose.msra.mxu0 0.0
  %1762 = vmatpush.xpose.msra.mxu0 0.0
  %1763 = vmatpush.xpose.msra.mxu0 0.0
  %1764 = vmatpush.xpose.msra.mxu0 0.0
  %1765 = vmatpush.xpose.msra.mxu0 0.0
  %1766 = vmatpush.xpose.msra.mxu0 0.0
  %1767 = vmatpush.xpose.msra.mxu0 %v1750
  %1768 = vmatmul.f32.gmra.mxu0 %v1747
  %v1769 = vpop.f32.mrf.mxu0
  %v1770 = vadd.f32 %v74, %v1769
  %1771 = vdwg.mxu0
  %v1773 = vsel %vm472, %v1399, 0
  %v1776 = vsel %vm472, %v1508, 0
  %1778 = vmatpush.xpose.msra.mxu0 0.0
  %1779 = vmatpush.xpose.msra.mxu0 0.0
  %1780 = vmatpush.xpose.msra.mxu0 0.0
  %1781 = vmatpush.xpose.msra.mxu0 0.0
  %1782 = vmatpush.xpose.msra.mxu0 0.0
  %1783 = vmatpush.xpose.msra.mxu0 0.0
  %1784 = vmatpush.xpose.msra.mxu0 0.0
  %1785 = vmatpush.xpose.msra.mxu0 0.0
  %1786 = vmatpush.xpose.msra.mxu0 0.0
  %1787 = vmatpush.xpose.msra.mxu0 0.0
  %1788 = vmatpush.xpose.msra.mxu0 0.0
  %1789 = vmatpush.xpose.msra.mxu0 0.0
  %1790 = vmatpush.xpose.msra.mxu0 0.0
  %1791 = vmatpush.xpose.msra.mxu0 0.0
  %1792 = vmatpush.xpose.msra.mxu0 0.0
  %1793 = vmatpush.xpose.msra.mxu0 %v1776
  %1794 = vmatmul.f32.gmra.mxu0 %v1773
  %v1795 = vpop.f32.mrf.mxu0
  %v1796 = vadd.f32 %v75, %v1795
  %1797 = vdwg.mxu0
  %v1799 = vsel %vm472, %v1419, 0
  %v1802 = vsel %vm472, %v1528, 0
  %1804 = vmatpush.xpose.msra.mxu0 0.0
  %1805 = vmatpush.xpose.msra.mxu0 0.0
  %1806 = vmatpush.xpose.msra.mxu0 0.0
  %1807 = vmatpush.xpose.msra.mxu0 0.0
  %1808 = vmatpush.xpose.msra.mxu0 0.0
  %1809 = vmatpush.xpose.msra.mxu0 0.0
  %1810 = vmatpush.xpose.msra.mxu0 0.0
  %1811 = vmatpush.xpose.msra.mxu0 0.0
  %1812 = vmatpush.xpose.msra.mxu0 0.0
  %1813 = vmatpush.xpose.msra.mxu0 0.0
  %1814 = vmatpush.xpose.msra.mxu0 0.0
  %1815 = vmatpush.xpose.msra.mxu0 0.0
  %1816 = vmatpush.xpose.msra.mxu0 0.0
  %1817 = vmatpush.xpose.msra.mxu0 0.0
  %1818 = vmatpush.xpose.msra.mxu0 0.0
  %1819 = vmatpush.xpose.msra.mxu0 %v1802
  %1820 = vmatmul.f32.gmra.mxu0 %v1799
  %v1821 = vpop.f32.mrf.mxu0
  %v1822 = vadd.f32 %v76, %v1821
  %1823 = vdwg.mxu0
  %v1825 = vsel %vm472, %v1422, 0
  %v1828 = vsel %vm472, %v1531, 0
  %1830 = vmatpush.xpose.msra.mxu0 0.0
  %1831 = vmatpush.xpose.msra.mxu0 0.0
  %1832 = vmatpush.xpose.msra.mxu0 0.0
  %1833 = vmatpush.xpose.msra.mxu0 0.0
  %1834 = vmatpush.xpose.msra.mxu0 0.0
  %1835 = vmatpush.xpose.msra.mxu0 0.0
  %1836 = vmatpush.xpose.msra.mxu0 0.0
  %1837 = vmatpush.xpose.msra.mxu0 0.0
  %1838 = vmatpush.xpose.msra.mxu0 0.0
  %1839 = vmatpush.xpose.msra.mxu0 0.0
  %1840 = vmatpush.xpose.msra.mxu0 0.0
  %1841 = vmatpush.xpose.msra.mxu0 0.0
  %1842 = vmatpush.xpose.msra.mxu0 0.0
  %1843 = vmatpush.xpose.msra.mxu0 0.0
  %1844 = vmatpush.xpose.msra.mxu0 0.0
  %1845 = vmatpush.xpose.msra.mxu0 %v1828
  %1846 = vmatmul.f32.gmra.mxu0 %v1825
  %v1847 = vpop.f32.mrf.mxu0
  %v1848 = vadd.f32 %v77, %v1847
  %1849 = vdwg.mxu0
  %v1850 = vsel %vm472, %v1666, -inf
  %1851 = vmax.xlane.f32.xlu0 %v1850
  %v1852 = vpop.xlane.xlu0 %1851
  %v1853 = vsel %vm472, %v1692, -inf
  %1854 = vmax.xlane.f32.xlu0 %v1853
  %v1855 = vpop.xlane.xlu0 %1854
  %v1856 = vsel %vm472, %v1718, -inf
  %1857 = vmax.xlane.f32.xlu0 %v1856
  %v1858 = vpop.xlane.xlu0 %1857
  %v1859 = vsel %vm472, %v1744, -inf
  %1860 = vmax.xlane.f32.xlu0 %v1859
  %v1861 = vpop.xlane.xlu0 %1860
  %v1862 = vsel %vm472, %v1770, -inf
  %1863 = vmax.xlane.f32.xlu0 %v1862
  %v1864 = vpop.xlane.xlu0 %1863
  %v1865 = vsel %vm472, %v1796, -inf
  %1866 = vmax.xlane.f32.xlu0 %v1865
  %v1867 = vpop.xlane.xlu0 %1866
  %v1868 = vsel %vm472, %v1822, -inf
  %1869 = vmax.xlane.f32.xlu0 %v1868
  %v1870 = vpop.xlane.xlu0 %1869
  %v1871 = vsel %vm472, %v1848, -inf
  %1872 = vmax.xlane.f32.xlu0 %v1871
  %v1873 = vpop.xlane.xlu0 %1872
  %v1874 = vsub.f32 %v1666, %v1852
  %v1875 = vsub.f32 %v1692, %v1855
  %v1876 = vsub.f32 %v1718, %v1858
  %v1877 = vsub.f32 %v1744, %v1861
  %v1878 = vsub.f32 %v1770, %v1864
  %v1879 = vsub.f32 %v1796, %v1867
  %v1880 = vsub.f32 %v1822, %v1870
  %v1881 = vsub.f32 %v1848, %v1873
  %v1882 = vmul.f32 %v1874, 1.442695
  %v1883 = vpow.pop %v1882
  %v1884 = vmul.f32 %v1875, 1.442695
  %v1885 = vpow.pop %v1884
  %v1886 = vmul.f32 %v1876, 1.442695
  %v1887 = vpow.pop %v1886
  %v1888 = vmul.f32 %v1877, 1.442695
  %v1889 = vpow.pop %v1888
  %v1890 = vmul.f32 %v1878, 1.442695
  %v1891 = vpow.pop %v1890
  %v1892 = vmul.f32 %v1879, 1.442695
  %v1893 = vpow.pop %v1892
  %v1894 = vmul.f32 %v1880, 1.442695
  %v1895 = vpow.pop %v1894
  %v1896 = vmul.f32 %v1881, 1.442695
  %v1897 = vpow.pop %v1896
  %v1898 = vsel %vm472, %v1883, 0.0
  %1899 = vadd.xlane.f32.xlu0 %v1898
  %v1900 = vpop.xlane.xlu0 %1899
  %v1901 = vsel %vm472, %v1885, 0.0
  %1902 = vadd.xlane.f32.xlu0 %v1901
  %v1903 = vpop.xlane.xlu0 %1902
  %v1904 = vsel %vm472, %v1887, 0.0
  %1905 = vadd.xlane.f32.xlu0 %v1904
  %v1906 = vpop.xlane.xlu0 %1905
  %v1907 = vsel %vm472, %v1889, 0.0
  %1908 = vadd.xlane.f32.xlu0 %v1907
  %v1909 = vpop.xlane.xlu0 %1908
  %v1910 = vsel %vm472, %v1891, 0.0
  %1911 = vadd.xlane.f32.xlu0 %v1910
  %v1912 = vpop.xlane.xlu0 %1911
  %v1913 = vsel %vm472, %v1893, 0.0
  %1914 = vadd.xlane.f32.xlu0 %v1913
  %v1915 = vpop.xlane.xlu0 %1914
  %v1916 = vsel %vm472, %v1895, 0.0
  %1917 = vadd.xlane.f32.xlu0 %v1916
  %v1918 = vpop.xlane.xlu0 %1917
  %v1919 = vsel %vm472, %v1897, 0.0
  %1920 = vadd.xlane.f32.xlu0 %v1919
  %v1921 = vpop.xlane.xlu0 %1920
  %v1922 = vrcp.pop %v1900
  %v1923 = vrcp.pop %v1903
  %v1924 = vrcp.pop %v1906
  %v1925 = vrcp.pop %v1909
  %v1926 = vrcp.pop %v1912
  %v1927 = vrcp.pop %v1915
  %v1928 = vrcp.pop %v1918
  %v1929 = vrcp.pop %v1921
  %v1930 = vmul.f32 %v1883, %v1922
  %v1931 = vmul.f32 %v1885, %v1923
  %v1932 = vmul.f32 %v1887, %v1924
  %v1933 = vmul.f32 %v1889, %v1925
  %v1934 = vmul.f32 %v1891, %v1926
  %v1935 = vmul.f32 %v1893, %v1927
  %v1936 = vmul.f32 %v1895, %v1928
  %v1937 = vmul.f32 %v1897, %v1929
  %v1939 = vsel %vm472, %v1930, 0
  %1941 = vmatpush.msra.mxu0 0.0
  %1942 = vmatpush.msra.mxu0 0.0
  %1943 = vmatpush.msra.mxu0 0.0
  %1944 = vmatpush.msra.mxu0 0.0
  %1945 = vmatpush.msra.mxu0 0.0
  %1946 = vmatpush.msra.mxu0 0.0
  %1947 = vmatpush.msra.mxu0 0.0
  %1948 = vmatpush.msra.mxu0 0.0
  %1949 = vmatpush.msra.mxu0 0.0
  %1950 = vmatpush.msra.mxu0 0.0
  %1951 = vmatpush.msra.mxu0 0.0
  %1952 = vmatpush.msra.mxu0 0.0
  %1953 = vmatpush.msra.mxu0 0.0
  %1954 = vmatpush.msra.mxu0 0.0
  %1955 = vmatpush.msra.mxu0 0.0
  %1956 = vmatpush.msra.mxu0 %v1568
  %1957 = vmatmul.f32.gmra.mxu0 %v1939
  %v1958 = vpop.f32.mrf.mxu0
  %v1959 = vadd.f32 0.0, %v1958
  %1960 = vdwg.mxu0
  %v1962 = vsel %vm472, %v1931, 0
  %1964 = vmatpush.msra.mxu0 0.0
  %1965 = vmatpush.msra.mxu0 0.0
  %1966 = vmatpush.msra.mxu0 0.0
  %1967 = vmatpush.msra.mxu0 0.0
  %1968 = vmatpush.msra.mxu0 0.0
  %1969 = vmatpush.msra.mxu0 0.0
  %1970 = vmatpush.msra.mxu0 0.0
  %1971 = vmatpush.msra.mxu0 0.0
  %1972 = vmatpush.msra.mxu0 0.0
  %1973 = vmatpush.msra.mxu0 0.0
  %1974 = vmatpush.msra.mxu0 0.0
  %1975 = vmatpush.msra.mxu0 0.0
  %1976 = vmatpush.msra.mxu0 0.0
  %1977 = vmatpush.msra.mxu0 0.0
  %1978 = vmatpush.msra.mxu0 0.0
  %1979 = vmatpush.msra.mxu0 %v1571
  %1980 = vmatmul.f32.gmra.mxu0 %v1962
  %v1981 = vpop.f32.mrf.mxu0
  %v1982 = vadd.f32 0.0, %v1981
  %1983 = vdwg.mxu0
  %v1985 = vsel %vm472, %v1932, 0
  %1987 = vmatpush.msra.mxu0 0.0
  %1988 = vmatpush.msra.mxu0 0.0
  %1989 = vmatpush.msra.mxu0 0.0
  %1990 = vmatpush.msra.mxu0 0.0
  %1991 = vmatpush.msra.mxu0 0.0
  %1992 = vmatpush.msra.mxu0 0.0
  %1993 = vmatpush.msra.mxu0 0.0
  %1994 = vmatpush.msra.mxu0 0.0
  %1995 = vmatpush.msra.mxu0 0.0
  %1996 = vmatpush.msra.mxu0 0.0
  %1997 = vmatpush.msra.mxu0 0.0
  %1998 = vmatpush.msra.mxu0 0.0
  %1999 = vmatpush.msra.mxu0 0.0
  %2000 = vmatpush.msra.mxu0 0.0
  %2001 = vmatpush.msra.mxu0 0.0
  %2002 = vmatpush.msra.mxu0 %v1591
  %2003 = vmatmul.f32.gmra.mxu0 %v1985
  %v2004 = vpop.f32.mrf.mxu0
  %v2005 = vadd.f32 0.0, %v2004
  %2006 = vdwg.mxu0
  %v2008 = vsel %vm472, %v1933, 0
  %2010 = vmatpush.msra.mxu0 0.0
  %2011 = vmatpush.msra.mxu0 0.0
  %2012 = vmatpush.msra.mxu0 0.0
  %2013 = vmatpush.msra.mxu0 0.0
  %2014 = vmatpush.msra.mxu0 0.0
  %2015 = vmatpush.msra.mxu0 0.0
  %2016 = vmatpush.msra.mxu0 0.0
  %2017 = vmatpush.msra.mxu0 0.0
  %2018 = vmatpush.msra.mxu0 0.0
  %2019 = vmatpush.msra.mxu0 0.0
  %2020 = vmatpush.msra.mxu0 0.0
  %2021 = vmatpush.msra.mxu0 0.0
  %2022 = vmatpush.msra.mxu0 0.0
  %2023 = vmatpush.msra.mxu0 0.0
  %2024 = vmatpush.msra.mxu0 0.0
  %2025 = vmatpush.msra.mxu0 %v1594
  %2026 = vmatmul.f32.gmra.mxu0 %v2008
  %v2027 = vpop.f32.mrf.mxu0
  %v2028 = vadd.f32 0.0, %v2027
  %2029 = vdwg.mxu0
  %v2031 = vsel %vm472, %v1934, 0
  %2033 = vmatpush.msra.mxu0 0.0
  %2034 = vmatpush.msra.mxu0 0.0
  %2035 = vmatpush.msra.mxu0 0.0
  %2036 = vmatpush.msra.mxu0 0.0
  %2037 = vmatpush.msra.mxu0 0.0
  %2038 = vmatpush.msra.mxu0 0.0
  %2039 = vmatpush.msra.mxu0 0.0
  %2040 = vmatpush.msra.mxu0 0.0
  %2041 = vmatpush.msra.mxu0 0.0
  %2042 = vmatpush.msra.mxu0 0.0
  %2043 = vmatpush.msra.mxu0 0.0
  %2044 = vmatpush.msra.mxu0 0.0
  %2045 = vmatpush.msra.mxu0 0.0
  %2046 = vmatpush.msra.mxu0 0.0
  %2047 = vmatpush.msra.mxu0 0.0
  %2048 = vmatpush.msra.mxu0 %v1614
  %2049 = vmatmul.f32.gmra.mxu0 %v2031
  %v2050 = vpop.f32.mrf.mxu0
  %v2051 = vadd.f32 0.0, %v2050
  %2052 = vdwg.mxu0
  %v2054 = vsel %vm472, %v1935, 0
  %2056 = vmatpush.msra.mxu0 0.0
  %2057 = vmatpush.msra.mxu0 0.0
  %2058 = vmatpush.msra.mxu0 0.0
  %2059 = vmatpush.msra.mxu0 0.0
  %2060 = vmatpush.msra.mxu0 0.0
  %2061 = vmatpush.msra.mxu0 0.0
  %2062 = vmatpush.msra.mxu0 0.0
  %2063 = vmatpush.msra.mxu0 0.0
  %2064 = vmatpush.msra.mxu0 0.0
  %2065 = vmatpush.msra.mxu0 0.0
  %2066 = vmatpush.msra.mxu0 0.0
  %2067 = vmatpush.msra.mxu0 0.0
  %2068 = vmatpush.msra.mxu0 0.0
  %2069 = vmatpush.msra.mxu0 0.0
  %2070 = vmatpush.msra.mxu0 0.0
  %2071 = vmatpush.msra.mxu0 %v1617
  %2072 = vmatmul.f32.gmra.mxu0 %v2054
  %v2073 = vpop.f32.mrf.mxu0
  %v2074 = vadd.f32 0.0, %v2073
  %2075 = vdwg.mxu0
  %v2077 = vsel %vm472, %v1936, 0
  %2079 = vmatpush.msra.mxu0 0.0
  %2080 = vmatpush.msra.mxu0 0.0
  %2081 = vmatpush.msra.mxu0 0.0
  %2082 = vmatpush.msra.mxu0 0.0
  %2083 = vmatpush.msra.mxu0 0.0
  %2084 = vmatpush.msra.mxu0 0.0
  %2085 = vmatpush.msra.mxu0 0.0
  %2086 = vmatpush.msra.mxu0 0.0
  %2087 = vmatpush.msra.mxu0 0.0
  %2088 = vmatpush.msra.mxu0 0.0
  %2089 = vmatpush.msra.mxu0 0.0
  %2090 = vmatpush.msra.mxu0 0.0
  %2091 = vmatpush.msra.mxu0 0.0
  %2092 = vmatpush.msra.mxu0 0.0
  %2093 = vmatpush.msra.mxu0 0.0
  %2094 = vmatpush.msra.mxu0 %v1637
  %2095 = vmatmul.f32.gmra.mxu0 %v2077
  %v2096 = vpop.f32.mrf.mxu0
  %v2097 = vadd.f32 0.0, %v2096
  %2098 = vdwg.mxu0
  %v2100 = vsel %vm472, %v1937, 0
  %2102 = vmatpush.msra.mxu0 0.0
  %2103 = vmatpush.msra.mxu0 0.0
  %2104 = vmatpush.msra.mxu0 0.0
  %2105 = vmatpush.msra.mxu0 0.0
  %2106 = vmatpush.msra.mxu0 0.0
  %2107 = vmatpush.msra.mxu0 0.0
  %2108 = vmatpush.msra.mxu0 0.0
  %2109 = vmatpush.msra.mxu0 0.0
  %2110 = vmatpush.msra.mxu0 0.0
  %2111 = vmatpush.msra.mxu0 0.0
  %2112 = vmatpush.msra.mxu0 0.0
  %2113 = vmatpush.msra.mxu0 0.0
  %2114 = vmatpush.msra.mxu0 0.0
  %2115 = vmatpush.msra.mxu0 0.0
  %2116 = vmatpush.msra.mxu0 0.0
  %2117 = vmatpush.msra.mxu0 %v1640
  %2118 = vmatmul.f32.gmra.mxu0 %v2100
  %v2119 = vpop.f32.mrf.mxu0
  %v2120 = vadd.f32 0.0, %v2119
  %2121 = vdwg.mxu0
  %s2122 = scalar_lea.vmem %s8, 32
  %v2123 = vld [vmem:[%s2122] sm:$0xff]
  %v2124 = vld [vmem:[%s2122 + $0x8] sm:$0xff]
  %v2125 = vld [vmem:[%s2122 + $0x10] sm:$0xff]
  %v2126 = vld [vmem:[%s2122 + $0x18] sm:$0xff]
  %v2128 = vsel %vm472, %v1959, 0
  %v2131 = vsel %vm472, %v1982, 0
  %2133 = vmatpush.msra.mxu0 0.0
  %2134 = vmatpush.msra.mxu0 0.0
  %2135 = vmatpush.msra.mxu0 0.0
  %2136 = vmatpush.msra.mxu0 0.0
  %2137 = vmatpush.msra.mxu0 0.0
  %2138 = vmatpush.msra.mxu0 0.0
  %2139 = vmatpush.msra.mxu0 0.0
  %2140 = vmatpush.msra.mxu0 0.0
  %2141 = vmatpush.msra.mxu0 0.0
  %2142 = vmatpush.msra.mxu0 0.0
  %2143 = vmatpush.msra.mxu0 0.0
  %2144 = vmatpush.msra.mxu0 0.0
  %2145 = vmatpush.msra.mxu0 0.0
  %2146 = vmatpush.msra.mxu0 0.0
  %2147 = vmatpush.msra.mxu0 0.0
  %2148 = vmatpush.msra.mxu0 %v2123
  %2149 = vmatmul.f32.gmra.mxu0 %v2128
  %v2150 = vpop.f32.mrf.mxu0
  %v2151 = vadd.f32 0.0, %v2150
  %2152 = vmatmul.f32.gmra.mxu0 %v2131
  %v2153 = vpop.f32.mrf.mxu0
  %v2154 = vadd.f32 0.0, %v2153
  %2155 = vdwg.mxu0
  %v2157 = vsel %vm472, %v2005, 0
  %v2160 = vsel %vm472, %v2028, 0
  %2162 = vmatpush.msra.mxu0 0.0
  %2163 = vmatpush.msra.mxu0 0.0
  %2164 = vmatpush.msra.mxu0 0.0
  %2165 = vmatpush.msra.mxu0 0.0
  %2166 = vmatpush.msra.mxu0 0.0
  %2167 = vmatpush.msra.mxu0 0.0
  %2168 = vmatpush.msra.mxu0 0.0
  %2169 = vmatpush.msra.mxu0 0.0
  %2170 = vmatpush.msra.mxu0 0.0
  %2171 = vmatpush.msra.mxu0 0.0
  %2172 = vmatpush.msra.mxu0 0.0
  %2173 = vmatpush.msra.mxu0 0.0
  %2174 = vmatpush.msra.mxu0 0.0
  %2175 = vmatpush.msra.mxu0 0.0
  %2176 = vmatpush.msra.mxu0 0.0
  %2177 = vmatpush.msra.mxu0 %v2124
  %2178 = vmatmul.f32.gmra.mxu0 %v2157
  %v2179 = vpop.f32.mrf.mxu0
  %v2180 = vadd.f32 0.0, %v2179
  %2181 = vmatmul.f32.gmra.mxu0 %v2160
  %v2182 = vpop.f32.mrf.mxu0
  %v2183 = vadd.f32 0.0, %v2182
  %2184 = vdwg.mxu0
  %v2186 = vsel %vm472, %v2051, 0
  %v2189 = vsel %vm472, %v2074, 0
  %2191 = vmatpush.msra.mxu0 0.0
  %2192 = vmatpush.msra.mxu0 0.0
  %2193 = vmatpush.msra.mxu0 0.0
  %2194 = vmatpush.msra.mxu0 0.0
  %2195 = vmatpush.msra.mxu0 0.0
  %2196 = vmatpush.msra.mxu0 0.0
  %2197 = vmatpush.msra.mxu0 0.0
  %2198 = vmatpush.msra.mxu0 0.0
  %2199 = vmatpush.msra.mxu0 0.0
  %2200 = vmatpush.msra.mxu0 0.0
  %2201 = vmatpush.msra.mxu0 0.0
  %2202 = vmatpush.msra.mxu0 0.0
  %2203 = vmatpush.msra.mxu0 0.0
  %2204 = vmatpush.msra.mxu0 0.0
  %2205 = vmatpush.msra.mxu0 0.0
  %2206 = vmatpush.msra.mxu0 %v2125
  %2207 = vmatmul.f32.gmra.mxu0 %v2186
  %v2208 = vpop.f32.mrf.mxu0
  %v2209 = vadd.f32 0.0, %v2208
  %2210 = vmatmul.f32.gmra.mxu0 %v2189
  %v2211 = vpop.f32.mrf.mxu0
  %v2212 = vadd.f32 0.0, %v2211
  %2213 = vdwg.mxu0
  %v2215 = vsel %vm472, %v2097, 0
  %v2218 = vsel %vm472, %v2120, 0
  %2220 = vmatpush.msra.mxu0 0.0
  %2221 = vmatpush.msra.mxu0 0.0
  %2222 = vmatpush.msra.mxu0 0.0
  %2223 = vmatpush.msra.mxu0 0.0
  %2224 = vmatpush.msra.mxu0 0.0
  %2225 = vmatpush.msra.mxu0 0.0
  %2226 = vmatpush.msra.mxu0 0.0
  %2227 = vmatpush.msra.mxu0 0.0
  %2228 = vmatpush.msra.mxu0 0.0
  %2229 = vmatpush.msra.mxu0 0.0
  %2230 = vmatpush.msra.mxu0 0.0
  %2231 = vmatpush.msra.mxu0 0.0
  %2232 = vmatpush.msra.mxu0 0.0
  %2233 = vmatpush.msra.mxu0 0.0
  %2234 = vmatpush.msra.mxu0 0.0
  %2235 = vmatpush.msra.mxu0 %v2126
  %2236 = vmatmul.f32.gmra.mxu0 %v2215
  %v2237 = vpop.f32.mrf.mxu0
  %v2238 = vadd.f32 0.0, %v2237
  %2239 = vmatmul.f32.gmra.mxu0 %v2218
  %v2240 = vpop.f32.mrf.mxu0
  %v2241 = vadd.f32 0.0, %v2240
  %2242 = vdwg.mxu0
  %v2243 = vsel %vm80, %v2151, 0.0
  %v2244 = vsel %vm80, %v2180, 0.0
  %v2245 = vadd.f32 %v2243, %v2244
  %v2246 = vsel %vm80, %v2209, 0.0
  %v2247 = vadd.f32 %v2245, %v2246
  %v2248 = vsel %vm80, %v2238, 0.0
  %v2249 = vadd.f32 %v2247, %v2248
  %v2250 = vsel %vm80, %v2154, 0.0
  %v2251 = vsel %vm80, %v2183, 0.0
  %v2252 = vadd.f32 %v2250, %v2251
  %v2253 = vsel %vm80, %v2212, 0.0
  %v2254 = vadd.f32 %v2252, %v2253
  %v2255 = vsel %vm80, %v2241, 0.0
  %v2256 = vadd.f32 %v2254, %v2255
  %v2257 = vadd.f32 %v1249, %v2249
  %v2258 = vadd.f32 %v1250, %v2256
  %s2259 = scalar_lea.vmem %s9, 1
  %v2260 = vld [vmem:[%s2259] sm:$0x1]
  %v2262 = vperm.slane %v2260, 0
  %v2264 = vadd.f32 %v2257, %v2262
  %v2265 = vadd.f32 %v2258, %v2262
  %s2266 = scalar_lea.vmem %s10, 1
  %v2267 = vld [vmem:[%s2266] sm:$0x1]
  %s2268 = scalar_lea.vmem %s11, 1
  %v2269 = vld [vmem:[%s2268] sm:$0x1]
  %v2270 = vsel %vm80, %v2264, 0.0
  %2271 = vadd.xlane.f32.xlu0 %v2270
  %v2272 = vpop.xlane.xlu0 %2271
  %v2273 = vsel %vm80, %v2265, 0.0
  %2274 = vadd.xlane.f32.xlu0 %v2273
  %v2275 = vpop.xlane.xlu0 %2274
  %v2276 = vmul.f32 %v2272, %v93
  %v2277 = vmul.f32 %v2275, %v93
  %v2278 = vsub.f32 %v2264, %v2276
  %v2279 = vsub.f32 %v2265, %v2277
  %v2280 = vmul.f32 %v2278, %v2278
  %v2281 = vmul.f32 %v2279, %v2279
  %v2282 = vsel %vm80, %v2280, 0.0
  %2283 = vadd.xlane.f32.xlu0 %v2282
  %v2284 = vpop.xlane.xlu0 %2283
  %v2285 = vsel %vm80, %v2281, 0.0
  %2286 = vadd.xlane.f32.xlu0 %v2285
  %v2287 = vpop.xlane.xlu0 %2286
  %v2288 = vmul.f32 %v2284, %v93
  %v2289 = vmul.f32 %v2287, %v93
  %v2290 = vadd.f32 %v2288, 1e-05
  %v2291 = vadd.f32 %v2289, 1e-05
  %v2292 = vrsqrt.pop %v2290
  %v2293 = vmul.f32 %v2292, %v2290
  %v2294 = vmul.f32 %v2293, %v2292
  %v2295 = vmul.f32 0.5, %v2294
  %v2296 = vsub.f32 1.5, %v2295
  %v2297 = vmul.f32 %v2292, %v2296
  %vm2298 = vweird.f32 %v2290
  %vm2299 = vweird.f32 %v2292
  %vm2300 = vmor %vm2298, %vm2299
  %v2301 = vsel %vm2300, %v2292, %v2297
  %v2302 = vrsqrt.pop %v2291
  %v2303 = vmul.f32 %v2302, %v2291
  %v2304 = vmul.f32 %v2303, %v2302
  %v2305 = vmul.f32 0.5, %v2304
  %v2306 = vsub.f32 1.5, %v2305
  %v2307 = vmul.f32 %v2302, %v2306
  %vm2308 = vweird.f32 %v2291
  %vm2309 = vweird.f32 %v2302
  %vm2310 = vmor %vm2308, %vm2309
  %v2311 = vsel %vm2310, %v2302, %v2307
  %v2312 = vmul.f32 %v2278, %v2301
  %v2313 = vmul.f32 %v2279, %v2311
  %v2315 = vperm.slane %v2267, 0
  %v2317 = vmul.f32 %v2312, %v2315
  %v2318 = vmul.f32 %v2313, %v2315
  %v2320 = vperm.slane %v2269, 0
  %v2322 = vadd.f32 %v2317, %v2320
  %v2323 = vadd.f32 %v2318, %v2320
  %s2324 = scalar_lea.vmem %s12, 32
  %v2325 = vld [vmem:[%s2324] sm:$0xff]
  %v2326 = vld [vmem:[%s2324 + $0x8] sm:$0xff]
  %v2327 = vld [vmem:[%s2324 + $0x10] sm:$0xff]
  %v2328 = vld [vmem:[%s2324 + $0x18] sm:$0xff]
  %s2329 = scalar_lea.vmem %s13, 1
  %v2330 = vld [vmem:[%s2329] sm:$0x1]
  %v2332 = vperm.slane %v2330, 0
  %v2335 = vsel %vm80, %v2322, 0
  %v2338 = vsel %vm80, %v2323, 0
  %2340 = vmatpush.msra.mxu0 0.0
  %2341 = vmatpush.msra.mxu0 0.0
  %2342 = vmatpush.msra.mxu0 0.0
  %2343 = vmatpush.msra.mxu0 0.0
  %2344 = vmatpush.msra.mxu0 0.0
  %2345 = vmatpush.msra.mxu0 0.0
  %2346 = vmatpush.msra.mxu0 0.0
  %2347 = vmatpush.msra.mxu0 0.0
  %2348 = vmatpush.msra.mxu0 0.0
  %2349 = vmatpush.msra.mxu0 0.0
  %2350 = vmatpush.msra.mxu0 0.0
  %2351 = vmatpush.msra.mxu0 0.0
  %2352 = vmatpush.msra.mxu0 %v2328
  %2353 = vmatpush.msra.mxu0 %v2327
  %2354 = vmatpush.msra.mxu0 %v2326
  %2355 = vmatpush.msra.mxu0 %v2325
  %2356 = vmatmul.f32.gmra.mxu0 %v2335
  %v2357 = vpop.f32.mrf.mxu0
  %v2358 = vadd.f32 %v2332, %v2357
  %2359 = vmatmul.f32.gmra.mxu0 %v2338
  %v2360 = vpop.f32.mrf.mxu0
  %v2361 = vadd.f32 %v2332, %v2360
  %2362 = vdwg.mxu0
  %v2363 = vmul.f32 %v2358, 0.5
  %v2364 = vmul.f32 %v2361, 0.5
  %v2365 = vmul.f32 %v2358, 0.044715
  %v2366 = vmul.f32 %v2361, 0.044715
  %v2367 = vmul.f32 %v2365, %v2358
  %v2368 = vmul.f32 %v2366, %v2361
  %v2369 = vmul.f32 %v2367, %v2358
  %v2370 = vmul.f32 %v2368, %v2361
  %v2371 = vadd.f32 %v2358, %v2369
  %v2372 = vadd.f32 %v2361, %v2370
  %v2373 = vmul.f32 %v2371, 0.7978846
  %v2374 = vmul.f32 %v2372, 0.7978846
  %v2375 = vtanh.pop %v2373
  %v2376 = vtanh.pop %v2374
  %v2377 = vadd.f32 %v2375, 1.0
  %v2378 = vadd.f32 %v2376, 1.0
  %v2379 = vmul.f32 %v2363, %v2377
  %v2380 = vmul.f32 %v2364, %v2378
  %s2381 = scalar_lea.vmem %s14, 128
  %v2382 = vld [vmem:[%s2381] sm:$0xff]
  %v2383 = vld [vmem:[%s2381 + $0x8] sm:$0xff]
  %v2384 = vld [vmem:[%s2381 + $0x10] sm:$0xff]
  %v2385 = vld [vmem:[%s2381 + $0x18] sm:$0xff]
  %v2386 = vld [vmem:[%s2381 + $0x20] sm:$0xff]
  %v2387 = vld [vmem:[%s2381 + $0x28] sm:$0xff]
  %v2388 = vld [vmem:[%s2381 + $0x30] sm:$0xff]
  %v2389 = vld [vmem:[%s2381 + $0x38] sm:$0xff]
  %v2390 = vld [vmem:[%s2381 + $0x40] sm:$0xff]
  %v2391 = vld [vmem:[%s2381 + $0x48] sm:$0xff]
  %v2392 = vld [vmem:[%s2381 + $0x50] sm:$0xff]
  %v2393 = vld [vmem:[%s2381 + $0x58] sm:$0xff]
  %v2394 = vld [vmem:[%s2381 + $0x60] sm:$0xff]
  %v2395 = vld [vmem:[%s2381 + $0x68] sm:$0xff]
  %v2396 = vld [vmem:[%s2381 + $0x70] sm:$0xff]
  %v2397 = vld [vmem:[%s2381 + $0x78] sm:$0xff]
  %s2398 = scalar_lea.vmem %s15, 1
  %v2399 = vld [vmem:[%s2398] sm:$0x1]
  %v2401 = vperm.slane %v2399, 0
  %2403 = vmatpush.msra.mxu0 %v2397
  %2404 = vmatpush.msra.mxu0 %v2396
  %2405 = vmatpush.msra.mxu0 %v2395
  %2406 = vmatpush.msra.mxu0 %v2394
  %2407 = vmatpush.msra.mxu0 %v2393
  %2408 = vmatpush.msra.mxu0 %v2392
  %2409 = vmatpush.msra.mxu0 %v2391
  %2410 = vmatpush.msra.mxu0 %v2390
  %2411 = vmatpush.msra.mxu0 %v2389
  %2412 = vmatpush.msra.mxu0 %v2388
  %2413 = vmatpush.msra.mxu0 %v2387
  %2414 = vmatpush.msra.mxu0 %v2386
  %2415 = vmatpush.msra.mxu0 %v2385
  %2416 = vmatpush.msra.mxu0 %v2384
  %2417 = vmatpush.msra.mxu0 %v2383
  %2418 = vmatpush.msra.mxu0 %v2382
  %2419 = vmatmul.f32.gmra.mxu0 %v2379
  %v2420 = vpop.f32.mrf.mxu0
  %v2421 = vadd.f32 %v2401, %v2420
  %2422 = vmatmul.f32.gmra.mxu0 %v2380
  %v2423 = vpop.f32.mrf.mxu0
  %v2424 = vadd.f32 %v2401, %v2423
  %2425 = vdwg.mxu0
  %v2426 = vadd.f32 %v2264, %v2421
  %v2427 = vadd.f32 %v2265, %v2424
  %2428 = vst.msk [vmem:[#allocation2] sm:$0xff] %vm80, %v2426
  %2429 = vst.msk [vmem:[#allocation2 + $0x8] sm:$0xff] %vm80, %v2427
  %s2430 = sld [smem:[#allocation4]]
  %s2431 = scalar_lea.vmem [#allocation2], %s2430
  %v2432 = vld [vmem:[%s2431] sm:$0x1]
  %s2433 = sld [smem:[#allocation4 + $0x1]]
  %s2434 = scalar_lea.vmem [#allocation2], %s2433
  %v2435 = vld [vmem:[%s2434] sm:$0x1]
  %v2437 = vrot.slane %v2435, 7
  %vm2439 = vcmask 1040384
  %v2440 = vsel %vm2439, %v2432, %v2437
  %v2441 = vld [vmem:[%s16] sm:$0x1]
  %v2442 = vld [vmem:[%s17] sm:$0x1]
  %vm2443 = vcmask 254976
  %v2444 = vsel %vm2443, %v2440, 0.0
  %2445 = vadd.xlane.f32.xlu0 %v2444
  %v2446 = vpop.xlane.xlu0 %2445
  %v2447 = vmul.f32 %v2446, %v93
  %v2448 = vsub.f32 %v2440, %v2447
  %v2449 = vmul.f32 %v2448, %v2448
  %v2450 = vsel %vm2443, %v2449, 0.0
  %2451 = vadd.xlane.f32.xlu0 %v2450
  %v2452 = vpop.xlane.xlu0 %2451
  %v2453 = vmul.f32 %v2452, %v93
  %v2454 = vadd.f32 %v2453, 1e-05
  %v2455 = vrsqrt.pop %v2454
  %v2456 = vmul.f32 %v2455, %v2454
  %v2457 = vmul.f32 %v2456, %v2455
  %v2458 = vmul.f32 0.5, %v2457
  %v2459 = vsub.f32 1.5, %v2458
  %v2460 = vmul.f32 %v2455, %v2459
  %vm2461 = vweird.f32 %v2454
  %vm2462 = vweird.f32 %v2455
  %vm2463 = vmor %vm2461, %vm2462
  %v2464 = vsel %vm2463, %v2455, %v2460
  %v2465 = vmul.f32 %v2448, %v2464
  %v2467 = vperm.slane %v2441, 0
  %v2469 = vmul.f32 %v2465, %v2467
  %v2471 = vperm.slane %v2442, 0
  %v2473 = vadd.f32 %v2469, %v2471
  %v2474 = vld [vmem:[%s18] sm:$0xff]
  %v2475 = vld [vmem:[%s18 + $0x8] sm:$0xff]
  %v2476 = vld [vmem:[%s18 + $0x10] sm:$0xff]
  %v2477 = vld [vmem:[%s18 + $0x18] sm:$0xff]
  %v2479 = vsel %vm80, %v2473, 0
  %2481 = vmatpush.msra.mxu0 0.0
  %2482 = vmatpush.msra.mxu0 0.0
  %2483 = vmatpush.msra.mxu0 0.0
  %2484 = vmatpush.msra.mxu0 0.0
  %2485 = vmatpush.msra.mxu0 0.0
  %2486 = vmatpush.msra.mxu0 0.0
  %2487 = vmatpush.msra.mxu0 0.0
  %2488 = vmatpush.msra.mxu0 0.0
  %2489 = vmatpush.msra.mxu0 0.0
  %2490 = vmatpush.msra.mxu0 0.0
  %2491 = vmatpush.msra.mxu0 0.0
  %2492 = vmatpush.msra.mxu0 0.0
  %2493 = vmatpush.msra.mxu0 %v2477
  %2494 = vmatpush.msra.mxu0 %v2476
  %2495 = vmatpush.msra.mxu0 %v2475
  %2496 = vmatpush.msra.mxu0 %v2474
  %2497 = vmatmul.f32.gmra.mxu0 %v2479
  %v2498 = vpop.f32.mrf.mxu0
  %v2499 = vadd.f32 0.0, %v2498
  %2500 = vdwg.mxu0
  %2501 = vst [vmem:[%s19] sm:$0x3] %v2499
  // Predicated region
  $region74: #{bert_forward.1} parent=0 // pred_check
    _
  $region75: #{bert_forward.1} parent=0 // pred_check_branch
    %2503 = sbr.rel (0) target = $region77
  $region76: #{bert_forward.1} parent=0 // pred_region
    _
  $region77: #{bert_forward.1} parent=0 // pred_fallthru
    _
  // Predicated region
  $region78: #{bert_forward.1} parent=0 // pred_check
    _
  $region79: #{bert_forward.1} parent=0 // pred_check_branch
    %2505 = sbr.rel (0) target = $region81
  $region80: #{bert_forward.1} parent=0 // pred_region
    _
  $region81: #{bert_forward.1} parent=0 // pred_fallthru
    _

</llo_original>
